<compile_context>
chip_gen: v5e
topology: v5e:2x2
jax: 0.10.0
libtpu: 0.0.40
codegen_flags: <defaults>
</compile_context>

<pallas_src>
import functools
import math

import jax
import jax.numpy as jnp
import numpy as np
from jax.experimental import pallas as pl
from jax.experimental.pallas import tpu as pltpu


# -----------------------------------------------------------------------------
# Fused decoder-layer kernel (one grid step per batch element)
# -----------------------------------------------------------------------------
def _decoder_layer_kernel(*refs, spatial_shapes, level_start_index,
                          n_heads, n_points, eps):
    (tgt_ref, qpos_ref, refpt_ref, src_ref, keep_ref,
     w_qk_ref, b_qk_ref, w_v_ref, b_v_ref, w_o_ref, b_o_ref, g2_ref, be2_ref,
     w_val_ref, b_val_ref, w_oa_ref, b_oa_ref, w_out_ref, b_out_ref, g1_ref, be1_ref,
     w1_ref, b1_ref, w2_ref, b2_ref, g3_ref, be3_ref,
     mask_kv_ref, ablk_sa_ref, ablk_ca_ref, qsel_ref, qagg_ref, mask_head_ref,
     *rest) = refs
    lvl_refs = rest[:-1]          # 3 constant selection matrices per level
    o_ref = rest[-1]

    H, P = n_heads, n_points
    L = len(spatial_shapes)
    tgt = tgt_ref[0]              # (Lq, D)
    qpos = qpos_ref[0]
    Lq, D = tgt.shape
    dh = D // H
    HLP = H * L * P
    R = Lq * H * P                # rows indexed as r = q*(H*P) + h*P + p

    def layer_norm(t, g_ref, b_ref):
        mu = jnp.mean(t, axis=-1, keepdims=True)
        var = jnp.mean((t - mu) ** 2, axis=-1, keepdims=True)
        return (t - mu) * jax.lax.rsqrt(var + eps) * g_ref[...] + b_ref[...]

    def block_softmax(logits, blk):
        # Per-head softmax where heads are contiguous column blocks.  Subtracting
        # the global row max is softmax-invariant per block; the per-block
        # denominator is one matmul with the constant block-aggregation matrix.
        m = jnp.max(logits, axis=-1, keepdims=True)
        e = jnp.exp(logits - m)
        s = jnp.dot(e, blk, preferred_element_type=jnp.float32)
        return e * pl.reciprocal(s, approx=True)

    # ------------------ self attention (block-diagonal heads) + norm2 -------
    x = tgt + qpos                                            # q == k input
    qk = jnp.dot(x, w_qk_ref[...], preferred_element_type=jnp.float32) + b_qk_ref[...]
    q = qk[:, :D] * (1.0 / math.sqrt(dh))
    k = qk[:, D:]
    v = jnp.dot(tgt, w_v_ref[...], preferred_element_type=jnp.float32) + b_v_ref[...]

    mask_kv = mask_kv_ref[...]                                # (H*Lq, D)
    k_blk = jnp.concatenate([k] * H, axis=0) * mask_kv        # block-diag K
    v_blk = jnp.concatenate([v] * H, axis=0) * mask_kv        # block-diag V
    # scores (Lq, H*Lq): column block h holds head-h scores against all keys
    s = jax.lax.dot_general(q, k_blk, (((1,), (1,)), ((), ())),
                            preferred_element_type=jnp.float32)
    p = block_softmax(s, ablk_sa_ref[...])
    attn = jnp.dot(p, v_blk, preferred_element_type=jnp.float32)     # (Lq, D)
    tgt2 = jnp.dot(attn, w_o_ref[...], preferred_element_type=jnp.float32) + b_o_ref[...]
    tgt = layer_norm(tgt + tgt2, g2_ref, be2_ref)

    # ------------------ deformable cross attention + norm1 ------------------
    query = tgt + qpos
    value = (jnp.dot(src_ref[0], w_val_ref[...], preferred_element_type=jnp.float32)
             + b_val_ref[...])
    value = value * keep_ref[0]                               # zero padded pixels

    oa = jnp.dot(query, w_oa_ref[...], preferred_element_type=jnp.float32) + b_oa_ref[...]
    offsets = oa[:, :2 * HLP]                                 # (Lq, 2*H*L*P)
    logits = oa[:, 2 * HLP:]                                  # (Lq, H*L*P)
    attn_w = block_softmax(logits, ablk_ca_ref[...])          # softmax over (L*P)/head

    # expand per-query data to one row per (query, head, point)
    qsel = qsel_ref[...]                                      # (R, Lq)
    off_exp = jnp.dot(qsel, offsets, preferred_element_type=jnp.float32)     # (R, 2HLP)
    aw_exp = jnp.dot(qsel, attn_w, preferred_element_type=jnp.float32)       # (R, HLP)
    ref_exp = jnp.dot(qsel, refpt_ref[0], preferred_element_type=jnp.float32)  # (R, 2L)
    # TODO(synk): reference_points with last dim == 4 (two-stage boxes) not implemented.

    u = jnp.zeros((R, D), jnp.float32)
    for l, (h_l, w_l) in enumerate(spatial_shapes):
        hw = h_l * w_l
        start = level_start_index[l]
        value_l = value[start:start + hw, :]                  # (hw, D)
        mselx = lvl_refs[3 * l][...]
        msely = lvl_refs[3 * l + 1][...]
        msela = lvl_refs[3 * l + 2][...]
        off_x = jnp.sum(off_exp * mselx, axis=-1, keepdims=True)      # (R,1)
        off_y = jnp.sum(off_exp * msely, axis=-1, keepdims=True)
        aw_l = jnp.sum(aw_exp * msela, axis=-1, keepdims=True)
        loc_x = ref_exp[:, 2 * l:2 * l + 1] + off_x * (1.0 / float(w_l))
        loc_y = ref_exp[:, 2 * l + 1:2 * l + 2] + off_y * (1.0 / float(h_l))
        # F.grid_sample(align_corners=False, padding_mode='zeros') pixel coords
        ix = loc_x * w_l - 0.5
        iy = loc_y * h_l - 0.5
        ix0 = jnp.floor(ix)
        iy0 = jnp.floor(iy)
        fx = ix - ix0
        fy = iy - iy0
        col = jax.lax.broadcasted_iota(jnp.int32, (R, hw), 1).astype(jnp.float32)
        g = jnp.zeros((R, hw), jnp.float32)
        for dx, dy, wgt in ((0.0, 0.0, (1.0 - fx) * (1.0 - fy)),
                            (1.0, 0.0, fx * (1.0 - fy)),
                            (0.0, 1.0, (1.0 - fx) * fy),
                            (1.0, 1.0, fx * fy)):
            cx = ix0 + dx
            cy = iy0 + dy
            valid = ((cx >= 0) & (cx <= w_l - 1) &
                     (cy >= 0) & (cy <= h_l - 1)).astype(jnp.float32)
            cxc = jnp.clip(cx, 0.0, float(w_l - 1))
            cyc = jnp.clip(cy, 0.0, float(h_l - 1))
            idx = cyc * float(w_l) + cxc                      # (R,1) exact small ints
            onehot = (col == idx).astype(jnp.float32)         # (R, hw)
            g = g + onehot * (wgt * valid)
        gw = g * aw_l                                         # fold attention weight
        u = u + jnp.dot(gw, value_l, preferred_element_type=jnp.float32)   # (R, D)

    u = u * mask_head_ref[...]                                # keep matching head only
    ca = jnp.dot(qagg_ref[...], u, preferred_element_type=jnp.float32)     # (Lq, D)
    tgt2 = jnp.dot(ca, w_out_ref[...], preferred_element_type=jnp.float32) + b_out_ref[...]
    tgt = layer_norm(tgt + tgt2, g1_ref, be1_ref)

    # ------------------ FFN + norm3 -----------------------------------------
    h1 = jnp.maximum(
        jnp.dot(tgt, w1_ref[...], preferred_element_type=jnp.float32) + b1_ref[...], 0.0)
    tgt2 = jnp.dot(h1, w2_ref[...], preferred_element_type=jnp.float32) + b2_ref[...]
    tgt = layer_norm(tgt + tgt2, g3_ref, be3_ref)

    o_ref[0] = tgt


# -----------------------------------------------------------------------------
# Compile-time constant selection / block matrices
# -----------------------------------------------------------------------------
def _make_constants(Lq, D, H, L, P):
    dh = D // H
    HLq = H * Lq
    HLP = H * L * P
    R = Lq * H * P
    rows = np.arange(HLq)
    cols = np.arange(D)
    mask_kv = (rows[:, None] // Lq == cols[None, :] // dh).astype(np.float32)     # (H*Lq, D)
    ablk_sa = (rows[:, None] // Lq == rows[None, :] // Lq).astype(np.float32)     # (H*Lq, H*Lq)
    a = np.arange(HLP)
    ablk_ca = (a[:, None] // (L * P) == a[None, :] // (L * P)).astype(np.float32)  # (HLP, HLP)
    r = np.arange(R)                          # r = q*(H*P) + h*P + p
    q_r = r // (H * P)
    h_r = (r // P) % H
    p_r = r % P
    qsel = (q_r[:, None] == np.arange(Lq)[None, :]).astype(np.float32)            # (R, Lq)
    qagg = np.ascontiguousarray(qsel.T)                                           # (Lq, R)
    mask_head = (h_r[:, None] == cols[None, :] // dh).astype(np.float32)          # (R, D)
    consts = [mask_kv, ablk_sa, ablk_ca, qsel, qagg, mask_head]
    for l in range(L):
        cx = ((h_r * L + l) * P + p_r) * 2
        consts.append((np.arange(2 * HLP)[None, :] == cx[:, None]).astype(np.float32))
        consts.append((np.arange(2 * HLP)[None, :] == (cx + 1)[:, None]).astype(np.float32))
        ca_col = h_r * (L * P) + l * P + p_r
        consts.append((np.arange(HLP)[None, :] == ca_col[:, None]).astype(np.float32))
    return [jnp.asarray(c) for c in consts]


# -----------------------------------------------------------------------------
# Wrapper: one pallas_call for the whole layer
# -----------------------------------------------------------------------------
def decoder_layer_forward(params, tgt, query_pos, reference_points, src,
                          spatial_shapes, level_start_index, src_padding_mask,
                          n_heads, n_points):
    B, Lq, D = tgt.shape
    H, P = n_heads, n_points
    L = len(spatial_shapes)
    HLP = H * L * P
    F = params["w1"].shape[1]

    # fewer / fatter matmuls: q&k projections and offsets&attn-logits share inputs
    w_qk = jnp.concatenate([params["wq"], params["wk"]], axis=1)
    b_qk = jnp.concatenate([params["bq"], params["bk"]]).reshape(1, 2 * D)
    w_oa = jnp.concatenate([params["w_off"], params["w_attn"]], axis=1)
    b_oa = jnp.concatenate([params["b_off"], params["b_attn"]]).reshape(1, 3 * HLP)

    ref2d = reference_points.reshape(B, Lq, 2 * L)
    keep = (~src_padding_mask).astype(jnp.float32)[..., None]        # (B, Len_in, 1)

    batch_args = [tgt, query_pos, ref2d, src, keep]
    shared_args = [
        w_qk, b_qk, params["wv"], params["bv"].reshape(1, D),
        params["wo"], params["bo"].reshape(1, D),
        params["norm2_g"].reshape(1, D), params["norm2_b"].reshape(1, D),
        params["w_value"], params["b_value"].reshape(1, D),
        w_oa, b_oa,
        params["w_out"], params["b_out"].reshape(1, D),
        params["norm1_g"].reshape(1, D), params["norm1_b"].reshape(1, D),
        params["w1"], params["b1"].reshape(1, F),
        params["w2"], params["b2"].reshape(1, D),
        params["norm3_g"].reshape(1, D), params["norm3_b"].reshape(1, D),
    ] + _make_constants(Lq, D, H, L, P)

    batch_specs = [
        pl.BlockSpec((1,) + tuple(a.shape[1:]),
                     lambda b, _nd=a.ndim: (b,) + (0,) * (_nd - 1))
        for a in batch_args
    ]
    shared_specs = [
        pl.BlockSpec(tuple(a.shape), lambda b, _nd=a.ndim: (0,) * _nd)
        for a in shared_args
    ]

    kern = functools.partial(
        _decoder_layer_kernel,
        spatial_shapes=tuple(tuple(s) for s in spatial_shapes),
        level_start_index=tuple(int(i) for i in level_start_index),
        n_heads=H, n_points=P, eps=1e-5)

    return pl.pallas_call(
        kern,
        grid=(B,),
        in_specs=batch_specs + shared_specs,
        out_specs=pl.BlockSpec((1, Lq, D), lambda b: (b, 0, 0)),
        out_shape=jax.ShapeDtypeStruct((B, Lq, D), jnp.float32),
        compiler_params=pltpu.CompilerParams(dimension_semantics=("parallel",)),
    )(*batch_args, *shared_args)


# -----------------------------------------------------------------------------
# Pure-JAX reference (same math, no Pallas) for a sanity check
# -----------------------------------------------------------------------------
def _bilinear_sample(value_flat, grid, h_l, w_l):
    # value_flat: (N, h_l*w_l, dh); grid: (N, Lq, P, 2) in [-1,1] with (x, y) order.
    N, Lq, P, _ = grid.shape
    dh = value_flat.shape[-1]
    x = grid[..., 0]
    y = grid[..., 1]
    ix = (x + 1.0) * w_l / 2.0 - 0.5
    iy = (y + 1.0) * h_l / 2.0 - 0.5
    ix0 = jnp.floor(ix)
    iy0 = jnp.floor(iy)

    def gather(ixi, iyi):
        valid = (ixi >= 0) & (ixi <= w_l - 1) & (iyi >= 0) & (iyi <= h_l - 1)
        ixc = jnp.clip(ixi, 0, w_l - 1).astype(jnp.int32)
        iyc = jnp.clip(iyi, 0, h_l - 1).astype(jnp.int32)
        idx = (iyc * w_l + ixc).reshape(N, Lq * P)
        v = jnp.take_along_axis(value_flat, idx[..., None], axis=1)
        return v.reshape(N, Lq, P, dh) * valid[..., None].astype(value_flat.dtype)

    wx1 = ix - ix0
    wx0 = 1.0 - wx1
    wy1 = iy - iy0
    wy0 = 1.0 - wy1
    return (gather(ix0, iy0) * (wx0 * wy0)[..., None]
            + gather(ix0 + 1.0, iy0) * (wx1 * wy0)[..., None]
            + gather(ix0, iy0 + 1.0) * (wx0 * wy1)[..., None]
            + gather(ix0 + 1.0, iy0 + 1.0) * (wx1 * wy1)[..., None])


def ms_deform_sample(value, spatial_shapes, level_start_index, sampling_locations, n_heads):
    B, Len_in, D = value.shape
    _, Lq, H, L_, P_, _ = sampling_locations.shape
    dh = D // n_heads
    value = value.reshape(B, Len_in, n_heads, dh)
    levels = []
    for lid, (h_l, w_l) in enumerate(spatial_shapes):
        start = level_start_index[lid]
        value_l = value[:, start:start + h_l * w_l]
        value_l = jnp.transpose(value_l, (0, 2, 1, 3)).reshape(B * n_heads, h_l * w_l, dh)
        loc_l = sampling_locations[:, :, :, lid]
        grid = 2.0 * loc_l - 1.0
        grid = jnp.transpose(grid, (0, 2, 1, 3, 4)).reshape(B * n_heads, Lq, P_, 2)
        levels.append(_bilinear_sample(value_l, grid, h_l, w_l))
    sampled = jnp.stack(levels, axis=2)
    sampled = sampled.reshape(B, n_heads, Lq, L_, P_, dh)
    return jnp.transpose(sampled, (0, 2, 1, 3, 4, 5))


def reference_forward(params, tgt, query_pos, reference_points, src,
                      spatial_shapes, level_start_index, src_padding_mask,
                      n_heads, n_points):
    B, Lq, D = tgt.shape
    dh = D // n_heads
    L_ = len(spatial_shapes)

    def linear(x, w, b):
        return x @ w + b

    def layernorm(x, g, bt, eps=1e-5):
        mu = x.mean(-1, keepdims=True)
        var = ((x - mu) ** 2).mean(-1, keepdims=True)
        return (x - mu) / jnp.sqrt(var + eps) * g + bt

    # self attention
    q = tgt + query_pos
    qq = linear(q, params["wq"], params["bq"]).reshape(B, Lq, n_heads, dh)
    kk = linear(q, params["wk"], params["bk"]).reshape(B, Lq, n_heads, dh)
    vv = linear(tgt, params["wv"], params["bv"]).reshape(B, Lq, n_heads, dh)
    scores = jnp.einsum("bqhd,bkhd->bhqk", qq, kk) / math.sqrt(dh)
    probs = jax.nn.softmax(scores, -1)
    sa = jnp.einsum("bhqk,bkhd->bqhd", probs, vv).reshape(B, Lq, D)
    tgt2 = linear(sa, params["wo"], params["bo"])
    tgt = layernorm(tgt + tgt2, params["norm2_g"], params["norm2_b"])

    # deformable cross attention
    query = tgt + query_pos
    value = linear(src, params["w_value"], params["b_value"])
    value = jnp.where(src_padding_mask[..., None], 0.0, value)
    offsets = linear(query, params["w_off"], params["b_off"]).reshape(
        B, Lq, n_heads, L_, n_points, 2)
    attn_logits = linear(query, params["w_attn"], params["b_attn"]).reshape(
        B, Lq, n_heads, L_ * n_points)
    attn_w = jax.nn.softmax(attn_logits, -1).reshape(B, Lq, n_heads, L_, n_points)
    offset_normalizer = jnp.array([[w, h] for (h, w) in spatial_shapes], jnp.float32)
    locs = (reference_points[:, :, None, :, None, :]
            + offsets / offset_normalizer[None, None, None, :, None, :])
    sampled = ms_deform_sample(value, spatial_shapes, level_start_index, locs, n_heads)
    ca = (sampled * attn_w[..., None]).sum(axis=(3, 4)).reshape(B, Lq, D)
    tgt2 = linear(ca, params["w_out"], params["b_out"])
    tgt = layernorm(tgt + tgt2, params["norm1_g"], params["norm1_b"])

    # FFN
    h = jnp.maximum(linear(tgt, params["w1"], params["b1"]), 0.0)
    tgt2 = linear(h, params["w2"], params["b2"])
    tgt = layernorm(tgt + tgt2, params["norm3_g"], params["norm3_b"])
    return tgt


# -----------------------------------------------------------------------------
# Deterministic parameter init (synthetic; shapes follow the module's __init__)
# -----------------------------------------------------------------------------
def init_params(key, D, H, L_, P, F):
    ks = iter(jax.random.split(key, 32))

    def w(shape, s=0.05):
        return (jax.random.normal(next(ks), shape) * s).astype(jnp.float32)

    return dict(
        # nn.MultiheadAttention(d_model, n_heads)
        wq=w((D, D)), bq=w((D,), 0.02),
        wk=w((D, D)), bk=w((D,), 0.02),
        wv=w((D, D)), bv=w((D,), 0.02),
        wo=w((D, D)), bo=w((D,), 0.02),
        norm2_g=(1.0 + w((D,), 0.02)), norm2_b=w((D,), 0.02),
        # MSDeformAttn(d_model, n_levels, n_heads, n_points)
        w_value=w((D, D)), b_value=w((D,), 0.02),
        w_off=w((D, H * L_ * P * 2), 0.2), b_off=w((H * L_ * P * 2,), 0.3),
        w_attn=w((D, H * L_ * P)), b_attn=w((H * L_ * P,), 0.02),
        w_out=w((D, D)), b_out=w((D,), 0.02),
        norm1_g=(1.0 + w((D,), 0.02)), norm1_b=w((D,), 0.02),
        # FFN
        w1=w((D, F)), b1=w((F,), 0.02),
        w2=w((F, D)), b2=w((D,), 0.02),
        norm3_g=(1.0 + w((D,), 0.02)), norm3_b=w((D,), 0.02),
    )


# -----------------------------------------------------------------------------
if __name__ == "__main__":
    # Small shapes consistent with the module: d_model=32, n_heads=4,
    # n_levels=2, n_points=2, d_ffn=64, batch=2, num_queries=8.
    B, Lq, D, H, P, F = 2, 8, 32, 4, 2, 64
    spatial_shapes = [(8, 8), (4, 4)]
    L_ = len(spatial_shapes)
    level_start_index = [0]
    for (h_, w_) in spatial_shapes[:-1]:
        level_start_index.append(level_start_index[-1] + h_ * w_)
    Len_in = sum(h_ * w_ for h_, w_ in spatial_shapes)

    root = jax.random.PRNGKey(0)
    k_params, k0, k1, k2, k3 = jax.random.split(root, 5)
    params = init_params(k_params, D, H, L_, P, F)

    tgt = jax.random.normal(k0, (B, Lq, D), jnp.float32)
    query_pos = jax.random.normal(k1, (B, Lq, D), jnp.float32)
    reference_points = jax.random.uniform(k2, (B, Lq, L_, 2), jnp.float32)
    src = jax.random.normal(k3, (B, Len_in, D), jnp.float32)
    src_padding_mask = jnp.zeros((B, Len_in), bool).at[1, Len_in - 6:].set(True)

    out = decoder_layer_forward(params, tgt, query_pos, reference_points, src,
                                spatial_shapes, level_start_index, src_padding_mask,
                                n_heads=H, n_points=P)
    out = jax.block_until_ready(out)

    ref = reference_forward(params, tgt, query_pos, reference_points, src,
                            spatial_shapes, level_start_index, src_padding_mask,
                            n_heads=H, n_points=P)
    ref = jax.block_until_ready(ref)

    assert out.shape == (B, Lq, D)
    assert bool(jnp.all(jnp.isfinite(out)))
    # Tolerance covers MXU f32 passes + approx-EUP reciprocal in the softmaxes.
    np.testing.assert_allclose(np.asarray(out), np.asarray(ref), rtol=1e-2, atol=1e-2)
    print("KERNEL_OK")
</pallas_src>

<mosaic_0001>
module attributes {stable_mosaic.version = 11 : i64} {
  func.func @_decoder_layer_kernel(%arg0: i32, %arg1: memref<1x8x32xf32, #tpu.memory_space<vmem>>, %arg2: memref<1x8x32xf32, #tpu.memory_space<vmem>>, %arg3: memref<1x8x4xf32, #tpu.memory_space<vmem>>, %arg4: memref<1x80x32xf32, #tpu.memory_space<vmem>>, %arg5: memref<1x80x1xf32, #tpu.memory_space<vmem>>, %arg6: memref<32x64xf32, #tpu.memory_space<vmem>>, %arg7: memref<1x64xf32, #tpu.memory_space<vmem>>, %arg8: memref<32x32xf32, #tpu.memory_space<vmem>>, %arg9: memref<1x32xf32, #tpu.memory_space<vmem>>, %arg10: memref<32x32xf32, #tpu.memory_space<vmem>>, %arg11: memref<1x32xf32, #tpu.memory_space<vmem>>, %arg12: memref<1x32xf32, #tpu.memory_space<vmem>>, %arg13: memref<1x32xf32, #tpu.memory_space<vmem>>, %arg14: memref<32x32xf32, #tpu.memory_space<vmem>>, %arg15: memref<1x32xf32, #tpu.memory_space<vmem>>, %arg16: memref<32x48xf32, #tpu.memory_space<vmem>>, %arg17: memref<1x48xf32, #tpu.memory_space<vmem>>, %arg18: memref<32x32xf32, #tpu.memory_space<vmem>>, %arg19: memref<1x32xf32, #tpu.memory_space<vmem>>, %arg20: memref<1x32xf32, #tpu.memory_space<vmem>>, %arg21: memref<1x32xf32, #tpu.memory_space<vmem>>, %arg22: memref<32x64xf32, #tpu.memory_space<vmem>>, %arg23: memref<1x64xf32, #tpu.memory_space<vmem>>, %arg24: memref<64x32xf32, #tpu.memory_space<vmem>>, %arg25: memref<1x32xf32, #tpu.memory_space<vmem>>, %arg26: memref<1x32xf32, #tpu.memory_space<vmem>>, %arg27: memref<1x32xf32, #tpu.memory_space<vmem>>, %arg28: memref<32x32xf32, #tpu.memory_space<vmem>>, %arg29: memref<32x32xf32, #tpu.memory_space<vmem>>, %arg30: memref<16x16xf32, #tpu.memory_space<vmem>>, %arg31: memref<64x8xf32, #tpu.memory_space<vmem>>, %arg32: memref<8x64xf32, #tpu.memory_space<vmem>>, %arg33: memref<64x32xf32, #tpu.memory_space<vmem>>, %arg34: memref<64x32xf32, #tpu.memory_space<vmem>>, %arg35: memref<64x32xf32, #tpu.memory_space<vmem>>, %arg36: memref<64x16xf32, #tpu.memory_space<vmem>>, %arg37: memref<64x32xf32, #tpu.memory_space<vmem>>, %arg38: memref<64x32xf32, #tpu.memory_space<vmem>>, %arg39: memref<64x16xf32, #tpu.memory_space<vmem>>, %arg40: memref<1x8x32xf32, #tpu.memory_space<vmem>>) attributes {dimension_semantics = [#tpu.dimension_semantics<parallel>], iteration_bounds = array<i64: 2>, scalar_prefetch = 0 : i64, scratch_operands = 0 : i64, tpu.core_type = #tpu.core_type<tc>, window_params = [{transform_indices = @transform_0, window_bounds = array<i64: 1, 8, 32>}, {transform_indices = @transform_1, window_bounds = array<i64: 1, 8, 32>}, {transform_indices = @transform_2, window_bounds = array<i64: 1, 8, 4>}, {transform_indices = @transform_3, window_bounds = array<i64: 1, 80, 32>}, {transform_indices = @transform_4, window_bounds = array<i64: 1, 80, 1>}, {pipeline_mode = #tpu.pipeline_mode<synchronous>, transform_indices = @transform_5, window_bounds = array<i64: 32, 64>}, {pipeline_mode = #tpu.pipeline_mode<synchronous>, transform_indices = @transform_6, window_bounds = array<i64: 1, 64>}, {pipeline_mode = #tpu.pipeline_mode<synchronous>, transform_indices = @transform_7, window_bounds = array<i64: 32, 32>}, {pipeline_mode = #tpu.pipeline_mode<synchronous>, transform_indices = @transform_8, window_bounds = array<i64: 1, 32>}, {pipeline_mode = #tpu.pipeline_mode<synchronous>, transform_indices = @transform_9, window_bounds = array<i64: 32, 32>}, {pipeline_mode = #tpu.pipeline_mode<synchronous>, transform_indices = @transform_10, window_bounds = array<i64: 1, 32>}, {pipeline_mode = #tpu.pipeline_mode<synchronous>, transform_indices = @transform_11, window_bounds = array<i64: 1, 32>}, {pipeline_mode = #tpu.pipeline_mode<synchronous>, transform_indices = @transform_12, window_bounds = array<i64: 1, 32>}, {pipeline_mode = #tpu.pipeline_mode<synchronous>, transform_indices = @transform_13, window_bounds = array<i64: 32, 32>}, {pipeline_mode = #tpu.pipeline_mode<synchronous>, transform_indices = @transform_14, window_bounds = array<i64: 1, 32>}, {pipeline_mode = #tpu.pipeline_mode<synchronous>, transform_indices = @transform_15, window_bounds = array<i64: 32, 48>}, {pipeline_mode = #tpu.pipeline_mode<synchronous>, transform_indices = @transform_16, window_bounds = array<i64: 1, 48>}, {pipeline_mode = #tpu.pipeline_mode<synchronous>, transform_indices = @transform_17, window_bounds = array<i64: 32, 32>}, {pipeline_mode = #tpu.pipeline_mode<synchronous>, transform_indices = @transform_18, window_bounds = array<i64: 1, 32>}, {pipeline_mode = #tpu.pipeline_mode<synchronous>, transform_indices = @transform_19, window_bounds = array<i64: 1, 32>}, {pipeline_mode = #tpu.pipeline_mode<synchronous>, transform_indices = @transform_20, window_bounds = array<i64: 1, 32>}, {pipeline_mode = #tpu.pipeline_mode<synchronous>, transform_indices = @transform_21, window_bounds = array<i64: 32, 64>}, {pipeline_mode = #tpu.pipeline_mode<synchronous>, transform_indices = @transform_22, window_bounds = array<i64: 1, 64>}, {pipeline_mode = #tpu.pipeline_mode<synchronous>, transform_indices = @transform_23, window_bounds = array<i64: 64, 32>}, {pipeline_mode = #tpu.pipeline_mode<synchronous>, transform_indices = @transform_24, window_bounds = array<i64: 1, 32>}, {pipeline_mode = #tpu.pipeline_mode<synchronous>, transform_indices = @transform_25, window_bounds = array<i64: 1, 32>}, {pipeline_mode = #tpu.pipeline_mode<synchronous>, transform_indices = @transform_26, window_bounds = array<i64: 1, 32>}, {pipeline_mode = #tpu.pipeline_mode<synchronous>, transform_indices = @transform_27, window_bounds = array<i64: 32, 32>}, {pipeline_mode = #tpu.pipeline_mode<synchronous>, transform_indices = @transform_28, window_bounds = array<i64: 32, 32>}, {pipeline_mode = #tpu.pipeline_mode<synchronous>, transform_indices = @transform_29, window_bounds = array<i64: 16, 16>}, {pipeline_mode = #tpu.pipeline_mode<synchronous>, transform_indices = @transform_30, window_bounds = array<i64: 64, 8>}, {pipeline_mode = #tpu.pipeline_mode<synchronous>, transform_indices = @transform_31, window_bounds = array<i64: 8, 64>}, {pipeline_mode = #tpu.pipeline_mode<synchronous>, transform_indices = @transform_32, window_bounds = array<i64: 64, 32>}, {pipeline_mode = #tpu.pipeline_mode<synchronous>, transform_indices = @transform_33, window_bounds = array<i64: 64, 32>}, {pipeline_mode = #tpu.pipeline_mode<synchronous>, transform_indices = @transform_34, window_bounds = array<i64: 64, 32>}, {pipeline_mode = #tpu.pipeline_mode<synchronous>, transform_indices = @transform_35, window_bounds = array<i64: 64, 16>}, {pipeline_mode = #tpu.pipeline_mode<synchronous>, transform_indices = @transform_36, window_bounds = array<i64: 64, 32>}, {pipeline_mode = #tpu.pipeline_mode<synchronous>, transform_indices = @transform_37, window_bounds = array<i64: 64, 32>}, {pipeline_mode = #tpu.pipeline_mode<synchronous>, transform_indices = @transform_38, window_bounds = array<i64: 64, 16>}, {transform_indices = @transform_39, window_bounds = array<i64: 1, 8, 32>}]} {
    %c0 = arith.constant 0 : index
    %c0_0 = arith.constant 0 : index
    %c0_1 = arith.constant 0 : index
    %0 = vector.load %arg1[%c0, %c0_0, %c0_1] : memref<1x8x32xf32, #tpu.memory_space<vmem>>, vector<1x8x32xf32>
    %1 = vector.shape_cast %0 : vector<1x8x32xf32> to vector<8x32xf32>
    %c0_2 = arith.constant 0 : index
    %c0_3 = arith.constant 0 : index
    %c0_4 = arith.constant 0 : index
    %2 = vector.load %arg2[%c0_2, %c0_3, %c0_4] : memref<1x8x32xf32, #tpu.memory_space<vmem>>, vector<1x8x32xf32>
    %3 = vector.shape_cast %2 : vector<1x8x32xf32> to vector<8x32xf32>
    %4 = arith.addf %1, %3 : vector<8x32xf32>
    %c0_5 = arith.constant 0 : index
    %c0_6 = arith.constant 0 : index
    %5 = vector.load %arg6[%c0_5, %c0_6] : memref<32x64xf32, #tpu.memory_space<vmem>>, vector<32x64xf32>
    %cst = arith.constant dense<0.000000e+00> : vector<8x64xf32>
    %6 = tpu.matmul %4, %5, %cst {dimension_numbers = #tpu.dot_dimension_numbers<[1], [0], [0], [1], [0, 0, 1, 1], [], []>} : vector<8x32xf32>, vector<32x64xf32>, vector<8x64xf32> -> vector<8x64xf32>
    %c0_7 = arith.constant 0 : index
    %c0_8 = arith.constant 0 : index
    %7 = vector.load %arg7[%c0_7, %c0_8] : memref<1x64xf32, #tpu.memory_space<vmem>>, vector<1x64xf32>
    %8 = vector.broadcast %7 : vector<1x64xf32> to vector<8x64xf32>
    %9 = arith.addf %6, %8 : vector<8x64xf32>
    %10 = vector.extract_strided_slice %9 {offsets = [0, 0], sizes = [8, 32], strides = [1, 1]} : vector<8x64xf32> to vector<8x32xf32>
    %cst_9 = arith.constant 0.353553385 : f32
    %11 = vector.broadcast %cst_9 : f32 to vector<8x32xf32>
    %12 = arith.mulf %10, %11 : vector<8x32xf32>
    %13 = vector.extract_strided_slice %9 {offsets = [0, 32], sizes = [8, 32], strides = [1, 1]} : vector<8x64xf32> to vector<8x32xf32>
    %c0_10 = arith.constant 0 : index
    %c0_11 = arith.constant 0 : index
    %14 = vector.load %arg8[%c0_10, %c0_11] : memref<32x32xf32, #tpu.memory_space<vmem>>, vector<32x32xf32>
    %cst_12 = arith.constant dense<0.000000e+00> : vector<8x32xf32>
    %15 = tpu.matmul %1, %14, %cst_12 {dimension_numbers = #tpu.dot_dimension_numbers<[1], [0], [0], [1], [0, 0, 1, 1], [], []>} : vector<8x32xf32>, vector<32x32xf32>, vector<8x32xf32> -> vector<8x32xf32>
    %c0_13 = arith.constant 0 : index
    %c0_14 = arith.constant 0 : index
    %16 = vector.load %arg9[%c0_13, %c0_14] : memref<1x32xf32, #tpu.memory_space<vmem>>, vector<1x32xf32>
    %17 = vector.broadcast %16 : vector<1x32xf32> to vector<8x32xf32>
    %18 = arith.addf %15, %17 : vector<8x32xf32>
    %c0_15 = arith.constant 0 : index
    %c0_16 = arith.constant 0 : index
    %19 = vector.load %arg28[%c0_15, %c0_16] : memref<32x32xf32, #tpu.memory_space<vmem>>, vector<32x32xf32>
    %20 = tpu.concatenate %13, %13, %13, %13 in 0 : vector<8x32xf32>, vector<8x32xf32>, vector<8x32xf32>, vector<8x32xf32> -> vector<32x32xf32>
    %21 = arith.mulf %20, %19 : vector<32x32xf32>
    %22 = tpu.concatenate %18, %18, %18, %18 in 0 : vector<8x32xf32>, vector<8x32xf32>, vector<8x32xf32>, vector<8x32xf32> -> vector<32x32xf32>
    %23 = arith.mulf %22, %19 : vector<32x32xf32>
    %cst_17 = arith.constant dense<0.000000e+00> : vector<8x32xf32>
    %24 = tpu.matmul %12, %21, %cst_17 {dimension_numbers = #tpu.dot_dimension_numbers<[1], [1], [0], [0], [0, 0, 1, 0], [], []>} : vector<8x32xf32>, vector<32x32xf32>, vector<8x32xf32> -> vector<8x32xf32>
    %c0_18 = arith.constant 0 : index
    %c0_19 = arith.constant 0 : index
    %25 = vector.load %arg29[%c0_18, %c0_19] : memref<32x32xf32, #tpu.memory_space<vmem>>, vector<32x32xf32>
    %cst_20 = arith.constant dense<0xFF800000> : vector<8xf32>
    %26 = vector.multi_reduction <maximumf>, %24, %cst_20 [1] : vector<8x32xf32> to vector<8xf32>
    %27 = vector.shape_cast %26 : vector<8xf32> to vector<8x1xf32>
    %28 = vector.broadcast %27 : vector<8x1xf32> to vector<8x32xf32>
    %29 = arith.subf %24, %28 : vector<8x32xf32>
    %30 = math.exp %29 : vector<8x32xf32>
    %cst_21 = arith.constant dense<0.000000e+00> : vector<8x32xf32>
    %31 = tpu.matmul %30, %25, %cst_21 {dimension_numbers = #tpu.dot_dimension_numbers<[1], [0], [0], [1], [0, 0, 1, 1], [], []>} : vector<8x32xf32>, vector<32x32xf32>, vector<8x32xf32> -> vector<8x32xf32>
    %32 = tpu.reciprocal %31 {approx = true} : vector<8x32xf32> -> vector<8x32xf32>
    %33 = arith.mulf %30, %32 : vector<8x32xf32>
    %cst_22 = arith.constant dense<0.000000e+00> : vector<8x32xf32>
    %34 = tpu.matmul %33, %23, %cst_22 {dimension_numbers = #tpu.dot_dimension_numbers<[1], [0], [0], [1], [0, 0, 1, 1], [], []>} : vector<8x32xf32>, vector<32x32xf32>, vector<8x32xf32> -> vector<8x32xf32>
    %c0_23 = arith.constant 0 : index
    %c0_24 = arith.constant 0 : index
    %35 = vector.load %arg10[%c0_23, %c0_24] : memref<32x32xf32, #tpu.memory_space<vmem>>, vector<32x32xf32>
    %cst_25 = arith.constant dense<0.000000e+00> : vector<8x32xf32>
    %36 = tpu.matmul %34, %35, %cst_25 {dimension_numbers = #tpu.dot_dimension_numbers<[1], [0], [0], [1], [0, 0, 1, 1], [], []>} : vector<8x32xf32>, vector<32x32xf32>, vector<8x32xf32> -> vector<8x32xf32>
    %c0_26 = arith.constant 0 : index
    %c0_27 = arith.constant 0 : index
    %37 = vector.load %arg11[%c0_26, %c0_27] : memref<1x32xf32, #tpu.memory_space<vmem>>, vector<1x32xf32>
    %38 = vector.broadcast %37 : vector<1x32xf32> to vector<8x32xf32>
    %39 = arith.addf %36, %38 : vector<8x32xf32>
    %40 = arith.addf %1, %39 : vector<8x32xf32>
    %cst_28 = arith.constant dense<0.000000e+00> : vector<8xf32>
    %41 = vector.multi_reduction <add>, %40, %cst_28 [1] : vector<8x32xf32> to vector<8xf32>
    %42 = vector.shape_cast %41 : vector<8xf32> to vector<8x1xf32>
    %cst_29 = arith.constant 3.200000e+01 : f32
    %43 = vector.broadcast %cst_29 : f32 to vector<8x1xf32>
    %44 = arith.divf %42, %43 : vector<8x1xf32>
    %45 = vector.broadcast %44 : vector<8x1xf32> to vector<8x32xf32>
    %46 = arith.subf %40, %45 : vector<8x32xf32>
    %47 = arith.mulf %46, %46 : vector<8x32xf32>
    %cst_30 = arith.constant dense<0.000000e+00> : vector<8xf32>
    %48 = vector.multi_reduction <add>, %47, %cst_30 [1] : vector<8x32xf32> to vector<8xf32>
    %49 = vector.shape_cast %48 : vector<8xf32> to vector<8x1xf32>
    %cst_31 = arith.constant 3.200000e+01 : f32
    %50 = vector.broadcast %cst_31 : f32 to vector<8x1xf32>
    %51 = arith.divf %49, %50 : vector<8x1xf32>
    %52 = vector.broadcast %44 : vector<8x1xf32> to vector<8x32xf32>
    %53 = arith.subf %40, %52 : vector<8x32xf32>
    %cst_32 = arith.constant 9.99999974E-6 : f32
    %54 = vector.broadcast %cst_32 : f32 to vector<8x1xf32>
    %55 = arith.addf %51, %54 : vector<8x1xf32>
    %56 = math.rsqrt %55 : vector<8x1xf32>
    %57 = vector.broadcast %56 : vector<8x1xf32> to vector<8x32xf32>
    %58 = arith.mulf %53, %57 : vector<8x32xf32>
    %c0_33 = arith.constant 0 : index
    %c0_34 = arith.constant 0 : index
    %59 = vector.load %arg12[%c0_33, %c0_34] : memref<1x32xf32, #tpu.memory_space<vmem>>, vector<1x32xf32>
    %60 = vector.broadcast %59 : vector<1x32xf32> to vector<8x32xf32>
    %61 = arith.mulf %58, %60 : vector<8x32xf32>
    %c0_35 = arith.constant 0 : index
    %c0_36 = arith.constant 0 : index
    %62 = vector.load %arg13[%c0_35, %c0_36] : memref<1x32xf32, #tpu.memory_space<vmem>>, vector<1x32xf32>
    %63 = vector.broadcast %62 : vector<1x32xf32> to vector<8x32xf32>
    %64 = arith.addf %61, %63 : vector<8x32xf32>
    %65 = arith.addf %64, %3 : vector<8x32xf32>
    %c0_37 = arith.constant 0 : index
    %c0_38 = arith.constant 0 : index
    %c0_39 = arith.constant 0 : index
    %66 = vector.load %arg4[%c0_37, %c0_38, %c0_39] : memref<1x80x32xf32, #tpu.memory_space<vmem>>, vector<1x80x32xf32>
    %67 = vector.shape_cast %66 : vector<1x80x32xf32> to vector<80x32xf32>
    %c0_40 = arith.constant 0 : index
    %c0_41 = arith.constant 0 : index
    %68 = vector.load %arg14[%c0_40, %c0_41] : memref<32x32xf32, #tpu.memory_space<vmem>>, vector<32x32xf32>
    %cst_42 = arith.constant dense<0.000000e+00> : vector<80x32xf32>
    %69 = tpu.matmul %67, %68, %cst_42 {dimension_numbers = #tpu.dot_dimension_numbers<[1], [0], [0], [1], [0, 0, 1, 1], [], []>} : vector<80x32xf32>, vector<32x32xf32>, vector<80x32xf32> -> vector<80x32xf32>
    %c0_43 = arith.constant 0 : index
    %c0_44 = arith.constant 0 : index
    %70 = vector.load %arg15[%c0_43, %c0_44] : memref<1x32xf32, #tpu.memory_space<vmem>>, vector<1x32xf32>
    %71 = vector.broadcast %70 : vector<1x32xf32> to vector<80x32xf32>
    %72 = arith.addf %69, %71 : vector<80x32xf32>
    %c0_45 = arith.constant 0 : index
    %c0_46 = arith.constant 0 : index
    %c0_47 = arith.constant 0 : index
    %73 = vector.load %arg5[%c0_45, %c0_46, %c0_47] : memref<1x80x1xf32, #tpu.memory_space<vmem>>, vector<1x80x1xf32>
    %74 = vector.shape_cast %73 : vector<1x80x1xf32> to vector<80x1xf32>
    %75 = vector.broadcast %74 : vector<80x1xf32> to vector<80x32xf32>
    %76 = arith.mulf %72, %75 : vector<80x32xf32>
    %c0_48 = arith.constant 0 : index
    %c0_49 = arith.constant 0 : index
    %77 = vector.load %arg16[%c0_48, %c0_49] : memref<32x48xf32, #tpu.memory_space<vmem>>, vector<32x48xf32>
    %cst_50 = arith.constant dense<0.000000e+00> : vector<8x48xf32>
    %78 = tpu.matmul %65, %77, %cst_50 {dimension_numbers = #tpu.dot_dimension_numbers<[1], [0], [0], [1], [0, 0, 1, 1], [], []>} : vector<8x32xf32>, vector<32x48xf32>, vector<8x48xf32> -> vector<8x48xf32>
    %c0_51 = arith.constant 0 : index
    %c0_52 = arith.constant 0 : index
    %79 = vector.load %arg17[%c0_51, %c0_52] : memref<1x48xf32, #tpu.memory_space<vmem>>, vector<1x48xf32>
    %80 = vector.broadcast %79 : vector<1x48xf32> to vector<8x48xf32>
    %81 = arith.addf %78, %80 : vector<8x48xf32>
    %82 = vector.extract_strided_slice %81 {offsets = [0, 0], sizes = [8, 32], strides = [1, 1]} : vector<8x48xf32> to vector<8x32xf32>
    %83 = vector.extract_strided_slice %81 {offsets = [0, 32], sizes = [8, 16], strides = [1, 1]} : vector<8x48xf32> to vector<8x16xf32>
    %c0_53 = arith.constant 0 : index
    %c0_54 = arith.constant 0 : index
    %84 = vector.load %arg30[%c0_53, %c0_54] : memref<16x16xf32, #tpu.memory_space<vmem>>, vector<16x16xf32>
    %cst_55 = arith.constant dense<0xFF800000> : vector<8xf32>
    %85 = vector.multi_reduction <maximumf>, %83, %cst_55 [1] : vector<8x16xf32> to vector<8xf32>
    %86 = vector.shape_cast %85 : vector<8xf32> to vector<8x1xf32>
    %87 = vector.broadcast %86 : vector<8x1xf32> to vector<8x16xf32>
    %88 = arith.subf %83, %87 : vector<8x16xf32>
    %89 = math.exp %88 : vector<8x16xf32>
    %cst_56 = arith.constant dense<0.000000e+00> : vector<8x16xf32>
    %90 = tpu.matmul %89, %84, %cst_56 {dimension_numbers = #tpu.dot_dimension_numbers<[1], [0], [0], [1], [0, 0, 1, 1], [], []>} : vector<8x16xf32>, vector<16x16xf32>, vector<8x16xf32> -> vector<8x16xf32>
    %91 = tpu.reciprocal %90 {approx = true} : vector<8x16xf32> -> vector<8x16xf32>
    %92 = arith.mulf %89, %91 : vector<8x16xf32>
    %c0_57 = arith.constant 0 : index
    %c0_58 = arith.constant 0 : index
    %93 = vector.load %arg31[%c0_57, %c0_58] : memref<64x8xf32, #tpu.memory_space<vmem>>, vector<64x8xf32>
    %cst_59 = arith.constant dense<0.000000e+00> : vector<64x32xf32>
    %94 = tpu.matmul %93, %82, %cst_59 {dimension_numbers = #tpu.dot_dimension_numbers<[1], [0], [0], [1], [0, 0, 1, 1], [], []>} : vector<64x8xf32>, vector<8x32xf32>, vector<64x32xf32> -> vector<64x32xf32>
    %cst_60 = arith.constant dense<0.000000e+00> : vector<64x16xf32>
    %95 = tpu.matmul %93, %92, %cst_60 {dimension_numbers = #tpu.dot_dimension_numbers<[1], [0], [0], [1], [0, 0, 1, 1], [], []>} : vector<64x8xf32>, vector<8x16xf32>, vector<64x16xf32> -> vector<64x16xf32>
    %c0_61 = arith.constant 0 : index
    %c0_62 = arith.constant 0 : index
    %c0_63 = arith.constant 0 : index
    %96 = vector.load %arg3[%c0_61, %c0_62, %c0_63] : memref<1x8x4xf32, #tpu.memory_space<vmem>>, vector<1x8x4xf32>
    %97 = vector.shape_cast %96 : vector<1x8x4xf32> to vector<8x4xf32>
    %cst_64 = arith.constant dense<0.000000e+00> : vector<64x4xf32>
    %98 = tpu.matmul %93, %97, %cst_64 {dimension_numbers = #tpu.dot_dimension_numbers<[1], [0], [0], [1], [0, 0, 1, 1], [], []>} : vector<64x8xf32>, vector<8x4xf32>, vector<64x4xf32> -> vector<64x4xf32>
    %cst_65 = arith.constant 0.000000e+00 : f32
    %99 = vector.broadcast %cst_65 : f32 to vector<64x32xf32>
    %100 = vector.extract_strided_slice %76 {offsets = [0, 0], sizes = [64, 32], strides = [1, 1]} : vector<80x32xf32> to vector<64x32xf32>
    %c0_66 = arith.constant 0 : index
    %c0_67 = arith.constant 0 : index
    %101 = vector.load %arg34[%c0_66, %c0_67] : memref<64x32xf32, #tpu.memory_space<vmem>>, vector<64x32xf32>
    %c0_68 = arith.constant 0 : index
    %c0_69 = arith.constant 0 : index
    %102 = vector.load %arg35[%c0_68, %c0_69] : memref<64x32xf32, #tpu.memory_space<vmem>>, vector<64x32xf32>
    %c0_70 = arith.constant 0 : index
    %c0_71 = arith.constant 0 : index
    %103 = vector.load %arg36[%c0_70, %c0_71] : memref<64x16xf32, #tpu.memory_space<vmem>>, vector<64x16xf32>
    %104 = arith.mulf %94, %101 : vector<64x32xf32>
    %cst_72 = arith.constant dense<0.000000e+00> : vector<64xf32>
    %105 = vector.multi_reduction <add>, %104, %cst_72 [1] : vector<64x32xf32> to vector<64xf32>
    %106 = vector.shape_cast %105 : vector<64xf32> to vector<64x1xf32>
    %107 = arith.mulf %94, %102 : vector<64x32xf32>
    %cst_73 = arith.constant dense<0.000000e+00> : vector<64xf32>
    %108 = vector.multi_reduction <add>, %107, %cst_73 [1] : vector<64x32xf32> to vector<64xf32>
    %109 = vector.shape_cast %108 : vector<64xf32> to vector<64x1xf32>
    %110 = arith.mulf %95, %103 : vector<64x16xf32>
    %cst_74 = arith.constant dense<0.000000e+00> : vector<64xf32>
    %111 = vector.multi_reduction <add>, %110, %cst_74 [1] : vector<64x16xf32> to vector<64xf32>
    %112 = vector.shape_cast %111 : vector<64xf32> to vector<64x1xf32>
    %113 = vector.extract_strided_slice %98 {offsets = [0, 0], sizes = [64, 1], strides = [1, 1]} : vector<64x4xf32> to vector<64x1xf32>
    %cst_75 = arith.constant 1.250000e-01 : f32
    %114 = vector.broadcast %cst_75 : f32 to vector<64x1xf32>
    %115 = arith.mulf %106, %114 : vector<64x1xf32>
    %116 = arith.addf %113, %115 : vector<64x1xf32>
    %117 = vector.extract_strided_slice %98 {offsets = [0, 1], sizes = [64, 1], strides = [1, 1]} : vector<64x4xf32> to vector<64x1xf32>
    %cst_76 = arith.constant 1.250000e-01 : f32
    %118 = vector.broadcast %cst_76 : f32 to vector<64x1xf32>
    %119 = arith.mulf %109, %118 : vector<64x1xf32>
    %120 = arith.addf %117, %119 : vector<64x1xf32>
    %cst_77 = arith.constant 8.000000e+00 : f32
    %121 = vector.broadcast %cst_77 : f32 to vector<64x1xf32>
    %122 = arith.mulf %116, %121 : vector<64x1xf32>
    %cst_78 = arith.constant 5.000000e-01 : f32
    %123 = vector.broadcast %cst_78 : f32 to vector<64x1xf32>
    %124 = arith.subf %122, %123 : vector<64x1xf32>
    %cst_79 = arith.constant 8.000000e+00 : f32
    %125 = vector.broadcast %cst_79 : f32 to vector<64x1xf32>
    %126 = arith.mulf %120, %125 : vector<64x1xf32>
    %cst_80 = arith.constant 5.000000e-01 : f32
    %127 = vector.broadcast %cst_80 : f32 to vector<64x1xf32>
    %128 = arith.subf %126, %127 : vector<64x1xf32>
    %129 = math.floor %124 : vector<64x1xf32>
    %130 = math.floor %128 : vector<64x1xf32>
    %131 = arith.subf %124, %129 : vector<64x1xf32>
    %132 = arith.subf %128, %130 : vector<64x1xf32>
    %133 = tpu.iota {dimensions = array<i32: 1>} : vector<64x64xi32>
    %134 = arith.sitofp %133 : vector<64x64xi32> to vector<64x64xf32>
    %cst_81 = arith.constant 0.000000e+00 : f32
    %135 = vector.broadcast %cst_81 : f32 to vector<64x64xf32>
    %cst_82 = arith.constant 1.000000e+00 : f32
    %136 = vector.broadcast %cst_82 : f32 to vector<64x1xf32>
    %137 = arith.subf %136, %131 : vector<64x1xf32>
    %cst_83 = arith.constant 1.000000e+00 : f32
    %138 = vector.broadcast %cst_83 : f32 to vector<64x1xf32>
    %139 = arith.subf %138, %132 : vector<64x1xf32>
    %140 = arith.mulf %137, %139 : vector<64x1xf32>
    %cst_84 = arith.constant 1.000000e+00 : f32
    %141 = vector.broadcast %cst_84 : f32 to vector<64x1xf32>
    %142 = arith.subf %141, %132 : vector<64x1xf32>
    %143 = arith.mulf %131, %142 : vector<64x1xf32>
    %cst_85 = arith.constant 1.000000e+00 : f32
    %144 = vector.broadcast %cst_85 : f32 to vector<64x1xf32>
    %145 = arith.subf %144, %131 : vector<64x1xf32>
    %146 = arith.mulf %145, %132 : vector<64x1xf32>
    %147 = arith.mulf %131, %132 : vector<64x1xf32>
    %cst_86 = arith.constant 0.000000e+00 : f32
    %148 = vector.broadcast %cst_86 : f32 to vector<64x1xf32>
    %149 = arith.addf %129, %148 : vector<64x1xf32>
    %cst_87 = arith.constant 0.000000e+00 : f32
    %150 = vector.broadcast %cst_87 : f32 to vector<64x1xf32>
    %151 = arith.addf %130, %150 : vector<64x1xf32>
    %cst_88 = arith.constant 0.000000e+00 : f32
    %152 = vector.broadcast %cst_88 : f32 to vector<64x1xf32>
    %153 = arith.cmpf oge, %149, %152 : vector<64x1xf32>
    %cst_89 = arith.constant 7.000000e+00 : f32
    %154 = vector.broadcast %cst_89 : f32 to vector<64x1xf32>
    %155 = arith.cmpf ole, %149, %154 : vector<64x1xf32>
    %156 = arith.andi %153, %155 : vector<64x1xi1>
    %cst_90 = arith.constant 0.000000e+00 : f32
    %157 = vector.broadcast %cst_90 : f32 to vector<64x1xf32>
    %158 = arith.cmpf oge, %151, %157 : vector<64x1xf32>
    %159 = arith.andi %156, %158 : vector<64x1xi1>
    %cst_91 = arith.constant 7.000000e+00 : f32
    %160 = vector.broadcast %cst_91 : f32 to vector<64x1xf32>
    %161 = arith.cmpf ole, %151, %160 : vector<64x1xf32>
    %162 = arith.andi %159, %161 : vector<64x1xi1>
    %163 = arith.extui %162 : vector<64x1xi1> to vector<64x1xi32>
    %164 = arith.sitofp %163 : vector<64x1xi32> to vector<64x1xf32>
    %cst_92 = arith.constant 0.000000e+00 : f32
    %cst_93 = arith.constant 7.000000e+00 : f32
    %165 = vector.broadcast %cst_92 : f32 to vector<64x1xf32>
    %166 = arith.maximumf %165, %149 : vector<64x1xf32>
    %167 = vector.broadcast %cst_93 : f32 to vector<64x1xf32>
    %168 = arith.minimumf %167, %166 : vector<64x1xf32>
    %cst_94 = arith.constant 0.000000e+00 : f32
    %cst_95 = arith.constant 7.000000e+00 : f32
    %169 = vector.broadcast %cst_94 : f32 to vector<64x1xf32>
    %170 = arith.maximumf %169, %151 : vector<64x1xf32>
    %171 = vector.broadcast %cst_95 : f32 to vector<64x1xf32>
    %172 = arith.minimumf %171, %170 : vector<64x1xf32>
    %cst_96 = arith.constant 8.000000e+00 : f32
    %173 = vector.broadcast %cst_96 : f32 to vector<64x1xf32>
    %174 = arith.mulf %172, %173 : vector<64x1xf32>
    %175 = arith.addf %174, %168 : vector<64x1xf32>
    %176 = vector.broadcast %175 : vector<64x1xf32> to vector<64x64xf32>
    %177 = arith.cmpf oeq, %134, %176 : vector<64x64xf32>
    %178 = arith.extui %177 : vector<64x64xi1> to vector<64x64xi32>
    %179 = arith.sitofp %178 : vector<64x64xi32> to vector<64x64xf32>
    %180 = arith.mulf %140, %164 : vector<64x1xf32>
    %181 = vector.broadcast %180 : vector<64x1xf32> to vector<64x64xf32>
    %182 = arith.mulf %179, %181 : vector<64x64xf32>
    %183 = arith.addf %135, %182 : vector<64x64xf32>
    %cst_97 = arith.constant 1.000000e+00 : f32
    %184 = vector.broadcast %cst_97 : f32 to vector<64x1xf32>
    %185 = arith.addf %129, %184 : vector<64x1xf32>
    %cst_98 = arith.constant 0.000000e+00 : f32
    %186 = vector.broadcast %cst_98 : f32 to vector<64x1xf32>
    %187 = arith.addf %130, %186 : vector<64x1xf32>
    %cst_99 = arith.constant 0.000000e+00 : f32
    %188 = vector.broadcast %cst_99 : f32 to vector<64x1xf32>
    %189 = arith.cmpf oge, %185, %188 : vector<64x1xf32>
    %cst_100 = arith.constant 7.000000e+00 : f32
    %190 = vector.broadcast %cst_100 : f32 to vector<64x1xf32>
    %191 = arith.cmpf ole, %185, %190 : vector<64x1xf32>
    %192 = arith.andi %189, %191 : vector<64x1xi1>
    %cst_101 = arith.constant 0.000000e+00 : f32
    %193 = vector.broadcast %cst_101 : f32 to vector<64x1xf32>
    %194 = arith.cmpf oge, %187, %193 : vector<64x1xf32>
    %195 = arith.andi %192, %194 : vector<64x1xi1>
    %cst_102 = arith.constant 7.000000e+00 : f32
    %196 = vector.broadcast %cst_102 : f32 to vector<64x1xf32>
    %197 = arith.cmpf ole, %187, %196 : vector<64x1xf32>
    %198 = arith.andi %195, %197 : vector<64x1xi1>
    %199 = arith.extui %198 : vector<64x1xi1> to vector<64x1xi32>
    %200 = arith.sitofp %199 : vector<64x1xi32> to vector<64x1xf32>
    %cst_103 = arith.constant 0.000000e+00 : f32
    %cst_104 = arith.constant 7.000000e+00 : f32
    %201 = vector.broadcast %cst_103 : f32 to vector<64x1xf32>
    %202 = arith.maximumf %201, %185 : vector<64x1xf32>
    %203 = vector.broadcast %cst_104 : f32 to vector<64x1xf32>
    %204 = arith.minimumf %203, %202 : vector<64x1xf32>
    %cst_105 = arith.constant 0.000000e+00 : f32
    %cst_106 = arith.constant 7.000000e+00 : f32
    %205 = vector.broadcast %cst_105 : f32 to vector<64x1xf32>
    %206 = arith.maximumf %205, %187 : vector<64x1xf32>
    %207 = vector.broadcast %cst_106 : f32 to vector<64x1xf32>
    %208 = arith.minimumf %207, %206 : vector<64x1xf32>
    %cst_107 = arith.constant 8.000000e+00 : f32
    %209 = vector.broadcast %cst_107 : f32 to vector<64x1xf32>
    %210 = arith.mulf %208, %209 : vector<64x1xf32>
    %211 = arith.addf %210, %204 : vector<64x1xf32>
    %212 = vector.broadcast %211 : vector<64x1xf32> to vector<64x64xf32>
    %213 = arith.cmpf oeq, %134, %212 : vector<64x64xf32>
    %214 = arith.extui %213 : vector<64x64xi1> to vector<64x64xi32>
    %215 = arith.sitofp %214 : vector<64x64xi32> to vector<64x64xf32>
    %216 = arith.mulf %143, %200 : vector<64x1xf32>
    %217 = vector.broadcast %216 : vector<64x1xf32> to vector<64x64xf32>
    %218 = arith.mulf %215, %217 : vector<64x64xf32>
    %219 = arith.addf %183, %218 : vector<64x64xf32>
    %cst_108 = arith.constant 0.000000e+00 : f32
    %220 = vector.broadcast %cst_108 : f32 to vector<64x1xf32>
    %221 = arith.addf %129, %220 : vector<64x1xf32>
    %cst_109 = arith.constant 1.000000e+00 : f32
    %222 = vector.broadcast %cst_109 : f32 to vector<64x1xf32>
    %223 = arith.addf %130, %222 : vector<64x1xf32>
    %cst_110 = arith.constant 0.000000e+00 : f32
    %224 = vector.broadcast %cst_110 : f32 to vector<64x1xf32>
    %225 = arith.cmpf oge, %221, %224 : vector<64x1xf32>
    %cst_111 = arith.constant 7.000000e+00 : f32
    %226 = vector.broadcast %cst_111 : f32 to vector<64x1xf32>
    %227 = arith.cmpf ole, %221, %226 : vector<64x1xf32>
    %228 = arith.andi %225, %227 : vector<64x1xi1>
    %cst_112 = arith.constant 0.000000e+00 : f32
    %229 = vector.broadcast %cst_112 : f32 to vector<64x1xf32>
    %230 = arith.cmpf oge, %223, %229 : vector<64x1xf32>
    %231 = arith.andi %228, %230 : vector<64x1xi1>
    %cst_113 = arith.constant 7.000000e+00 : f32
    %232 = vector.broadcast %cst_113 : f32 to vector<64x1xf32>
    %233 = arith.cmpf ole, %223, %232 : vector<64x1xf32>
    %234 = arith.andi %231, %233 : vector<64x1xi1>
    %235 = arith.extui %234 : vector<64x1xi1> to vector<64x1xi32>
    %236 = arith.sitofp %235 : vector<64x1xi32> to vector<64x1xf32>
    %cst_114 = arith.constant 0.000000e+00 : f32
    %cst_115 = arith.constant 7.000000e+00 : f32
    %237 = vector.broadcast %cst_114 : f32 to vector<64x1xf32>
    %238 = arith.maximumf %237, %221 : vector<64x1xf32>
    %239 = vector.broadcast %cst_115 : f32 to vector<64x1xf32>
    %240 = arith.minimumf %239, %238 : vector<64x1xf32>
    %cst_116 = arith.constant 0.000000e+00 : f32
    %cst_117 = arith.constant 7.000000e+00 : f32
    %241 = vector.broadcast %cst_116 : f32 to vector<64x1xf32>
    %242 = arith.maximumf %241, %223 : vector<64x1xf32>
    %243 = vector.broadcast %cst_117 : f32 to vector<64x1xf32>
    %244 = arith.minimumf %243, %242 : vector<64x1xf32>
    %cst_118 = arith.constant 8.000000e+00 : f32
    %245 = vector.broadcast %cst_118 : f32 to vector<64x1xf32>
    %246 = arith.mulf %244, %245 : vector<64x1xf32>
    %247 = arith.addf %246, %240 : vector<64x1xf32>
    %248 = vector.broadcast %247 : vector<64x1xf32> to vector<64x64xf32>
    %249 = arith.cmpf oeq, %134, %248 : vector<64x64xf32>
    %250 = arith.extui %249 : vector<64x64xi1> to vector<64x64xi32>
    %251 = arith.sitofp %250 : vector<64x64xi32> to vector<64x64xf32>
    %252 = arith.mulf %146, %236 : vector<64x1xf32>
    %253 = vector.broadcast %252 : vector<64x1xf32> to vector<64x64xf32>
    %254 = arith.mulf %251, %253 : vector<64x64xf32>
    %255 = arith.addf %219, %254 : vector<64x64xf32>
    %cst_119 = arith.constant 1.000000e+00 : f32
    %256 = vector.broadcast %cst_119 : f32 to vector<64x1xf32>
    %257 = arith.addf %129, %256 : vector<64x1xf32>
    %cst_120 = arith.constant 1.000000e+00 : f32
    %258 = vector.broadcast %cst_120 : f32 to vector<64x1xf32>
    %259 = arith.addf %130, %258 : vector<64x1xf32>
    %cst_121 = arith.constant 0.000000e+00 : f32
    %260 = vector.broadcast %cst_121 : f32 to vector<64x1xf32>
    %261 = arith.cmpf oge, %257, %260 : vector<64x1xf32>
    %cst_122 = arith.constant 7.000000e+00 : f32
    %262 = vector.broadcast %cst_122 : f32 to vector<64x1xf32>
    %263 = arith.cmpf ole, %257, %262 : vector<64x1xf32>
    %264 = arith.andi %261, %263 : vector<64x1xi1>
    %cst_123 = arith.constant 0.000000e+00 : f32
    %265 = vector.broadcast %cst_123 : f32 to vector<64x1xf32>
    %266 = arith.cmpf oge, %259, %265 : vector<64x1xf32>
    %267 = arith.andi %264, %266 : vector<64x1xi1>
    %cst_124 = arith.constant 7.000000e+00 : f32
    %268 = vector.broadcast %cst_124 : f32 to vector<64x1xf32>
    %269 = arith.cmpf ole, %259, %268 : vector<64x1xf32>
    %270 = arith.andi %267, %269 : vector<64x1xi1>
    %271 = arith.extui %270 : vector<64x1xi1> to vector<64x1xi32>
    %272 = arith.sitofp %271 : vector<64x1xi32> to vector<64x1xf32>
    %cst_125 = arith.constant 0.000000e+00 : f32
    %cst_126 = arith.constant 7.000000e+00 : f32
    %273 = vector.broadcast %cst_125 : f32 to vector<64x1xf32>
    %274 = arith.maximumf %273, %257 : vector<64x1xf32>
    %275 = vector.broadcast %cst_126 : f32 to vector<64x1xf32>
    %276 = arith.minimumf %275, %274 : vector<64x1xf32>
    %cst_127 = arith.constant 0.000000e+00 : f32
    %cst_128 = arith.constant 7.000000e+00 : f32
    %277 = vector.broadcast %cst_127 : f32 to vector<64x1xf32>
    %278 = arith.maximumf %277, %259 : vector<64x1xf32>
    %279 = vector.broadcast %cst_128 : f32 to vector<64x1xf32>
    %280 = arith.minimumf %279, %278 : vector<64x1xf32>
    %cst_129 = arith.constant 8.000000e+00 : f32
    %281 = vector.broadcast %cst_129 : f32 to vector<64x1xf32>
    %282 = arith.mulf %280, %281 : vector<64x1xf32>
    %283 = arith.addf %282, %276 : vector<64x1xf32>
    %284 = vector.broadcast %283 : vector<64x1xf32> to vector<64x64xf32>
    %285 = arith.cmpf oeq, %134, %284 : vector<64x64xf32>
    %286 = arith.extui %285 : vector<64x64xi1> to vector<64x64xi32>
    %287 = arith.sitofp %286 : vector<64x64xi32> to vector<64x64xf32>
    %288 = arith.mulf %147, %272 : vector<64x1xf32>
    %289 = vector.broadcast %288 : vector<64x1xf32> to vector<64x64xf32>
    %290 = arith.mulf %287, %289 : vector<64x64xf32>
    %291 = arith.addf %255, %290 : vector<64x64xf32>
    %292 = vector.broadcast %112 : vector<64x1xf32> to vector<64x64xf32>
    %293 = arith.mulf %291, %292 : vector<64x64xf32>
    %cst_130 = arith.constant dense<0.000000e+00> : vector<64x32xf32>
    %294 = tpu.matmul %293, %100, %cst_130 {dimension_numbers = #tpu.dot_dimension_numbers<[1], [0], [0], [1], [0, 0, 1, 1], [], []>} : vector<64x64xf32>, vector<64x32xf32>, vector<64x32xf32> -> vector<64x32xf32>
    %295 = arith.addf %99, %294 : vector<64x32xf32>
    %296 = vector.extract_strided_slice %76 {offsets = [64, 0], sizes = [16, 32], strides = [1, 1]} : vector<80x32xf32> to vector<16x32xf32>
    %c0_131 = arith.constant 0 : index
    %c0_132 = arith.constant 0 : index
    %297 = vector.load %arg37[%c0_131, %c0_132] : memref<64x32xf32, #tpu.memory_space<vmem>>, vector<64x32xf32>
    %c0_133 = arith.constant 0 : index
    %c0_134 = arith.constant 0 : index
    %298 = vector.load %arg38[%c0_133, %c0_134] : memref<64x32xf32, #tpu.memory_space<vmem>>, vector<64x32xf32>
    %c0_135 = arith.constant 0 : index
    %c0_136 = arith.constant 0 : index
    %299 = vector.load %arg39[%c0_135, %c0_136] : memref<64x16xf32, #tpu.memory_space<vmem>>, vector<64x16xf32>
    %300 = arith.mulf %94, %297 : vector<64x32xf32>
    %cst_137 = arith.constant dense<0.000000e+00> : vector<64xf32>
    %301 = vector.multi_reduction <add>, %300, %cst_137 [1] : vector<64x32xf32> to vector<64xf32>
    %302 = vector.shape_cast %301 : vector<64xf32> to vector<64x1xf32>
    %303 = arith.mulf %94, %298 : vector<64x32xf32>
    %cst_138 = arith.constant dense<0.000000e+00> : vector<64xf32>
    %304 = vector.multi_reduction <add>, %303, %cst_138 [1] : vector<64x32xf32> to vector<64xf32>
    %305 = vector.shape_cast %304 : vector<64xf32> to vector<64x1xf32>
    %306 = arith.mulf %95, %299 : vector<64x16xf32>
    %cst_139 = arith.constant dense<0.000000e+00> : vector<64xf32>
    %307 = vector.multi_reduction <add>, %306, %cst_139 [1] : vector<64x16xf32> to vector<64xf32>
    %308 = vector.shape_cast %307 : vector<64xf32> to vector<64x1xf32>
    %309 = vector.extract_strided_slice %98 {offsets = [0, 2], sizes = [64, 1], strides = [1, 1]} : vector<64x4xf32> to vector<64x1xf32>
    %cst_140 = arith.constant 2.500000e-01 : f32
    %310 = vector.broadcast %cst_140 : f32 to vector<64x1xf32>
    %311 = arith.mulf %302, %310 : vector<64x1xf32>
    %312 = arith.addf %309, %311 : vector<64x1xf32>
    %313 = vector.extract_strided_slice %98 {offsets = [0, 3], sizes = [64, 1], strides = [1, 1]} : vector<64x4xf32> to vector<64x1xf32>
    %cst_141 = arith.constant 2.500000e-01 : f32
    %314 = vector.broadcast %cst_141 : f32 to vector<64x1xf32>
    %315 = arith.mulf %305, %314 : vector<64x1xf32>
    %316 = arith.addf %313, %315 : vector<64x1xf32>
    %cst_142 = arith.constant 4.000000e+00 : f32
    %317 = vector.broadcast %cst_142 : f32 to vector<64x1xf32>
    %318 = arith.mulf %312, %317 : vector<64x1xf32>
    %cst_143 = arith.constant 5.000000e-01 : f32
    %319 = vector.broadcast %cst_143 : f32 to vector<64x1xf32>
    %320 = arith.subf %318, %319 : vector<64x1xf32>
    %cst_144 = arith.constant 4.000000e+00 : f32
    %321 = vector.broadcast %cst_144 : f32 to vector<64x1xf32>
    %322 = arith.mulf %316, %321 : vector<64x1xf32>
    %cst_145 = arith.constant 5.000000e-01 : f32
    %323 = vector.broadcast %cst_145 : f32 to vector<64x1xf32>
    %324 = arith.subf %322, %323 : vector<64x1xf32>
    %325 = math.floor %320 : vector<64x1xf32>
    %326 = math.floor %324 : vector<64x1xf32>
    %327 = arith.subf %320, %325 : vector<64x1xf32>
    %328 = arith.subf %324, %326 : vector<64x1xf32>
    %329 = tpu.iota {dimensions = array<i32: 1>} : vector<64x16xi32>
    %330 = arith.sitofp %329 : vector<64x16xi32> to vector<64x16xf32>
    %cst_146 = arith.constant 0.000000e+00 : f32
    %331 = vector.broadcast %cst_146 : f32 to vector<64x16xf32>
    %cst_147 = arith.constant 1.000000e+00 : f32
    %332 = vector.broadcast %cst_147 : f32 to vector<64x1xf32>
    %333 = arith.subf %332, %327 : vector<64x1xf32>
    %cst_148 = arith.constant 1.000000e+00 : f32
    %334 = vector.broadcast %cst_148 : f32 to vector<64x1xf32>
    %335 = arith.subf %334, %328 : vector<64x1xf32>
    %336 = arith.mulf %333, %335 : vector<64x1xf32>
    %cst_149 = arith.constant 1.000000e+00 : f32
    %337 = vector.broadcast %cst_149 : f32 to vector<64x1xf32>
    %338 = arith.subf %337, %328 : vector<64x1xf32>
    %339 = arith.mulf %327, %338 : vector<64x1xf32>
    %cst_150 = arith.constant 1.000000e+00 : f32
    %340 = vector.broadcast %cst_150 : f32 to vector<64x1xf32>
    %341 = arith.subf %340, %327 : vector<64x1xf32>
    %342 = arith.mulf %341, %328 : vector<64x1xf32>
    %343 = arith.mulf %327, %328 : vector<64x1xf32>
    %cst_151 = arith.constant 0.000000e+00 : f32
    %344 = vector.broadcast %cst_151 : f32 to vector<64x1xf32>
    %345 = arith.addf %325, %344 : vector<64x1xf32>
    %cst_152 = arith.constant 0.000000e+00 : f32
    %346 = vector.broadcast %cst_152 : f32 to vector<64x1xf32>
    %347 = arith.addf %326, %346 : vector<64x1xf32>
    %cst_153 = arith.constant 0.000000e+00 : f32
    %348 = vector.broadcast %cst_153 : f32 to vector<64x1xf32>
    %349 = arith.cmpf oge, %345, %348 : vector<64x1xf32>
    %cst_154 = arith.constant 3.000000e+00 : f32
    %350 = vector.broadcast %cst_154 : f32 to vector<64x1xf32>
    %351 = arith.cmpf ole, %345, %350 : vector<64x1xf32>
    %352 = arith.andi %349, %351 : vector<64x1xi1>
    %cst_155 = arith.constant 0.000000e+00 : f32
    %353 = vector.broadcast %cst_155 : f32 to vector<64x1xf32>
    %354 = arith.cmpf oge, %347, %353 : vector<64x1xf32>
    %355 = arith.andi %352, %354 : vector<64x1xi1>
    %cst_156 = arith.constant 3.000000e+00 : f32
    %356 = vector.broadcast %cst_156 : f32 to vector<64x1xf32>
    %357 = arith.cmpf ole, %347, %356 : vector<64x1xf32>
    %358 = arith.andi %355, %357 : vector<64x1xi1>
    %359 = arith.extui %358 : vector<64x1xi1> to vector<64x1xi32>
    %360 = arith.sitofp %359 : vector<64x1xi32> to vector<64x1xf32>
    %cst_157 = arith.constant 0.000000e+00 : f32
    %cst_158 = arith.constant 3.000000e+00 : f32
    %361 = vector.broadcast %cst_157 : f32 to vector<64x1xf32>
    %362 = arith.maximumf %361, %345 : vector<64x1xf32>
    %363 = vector.broadcast %cst_158 : f32 to vector<64x1xf32>
    %364 = arith.minimumf %363, %362 : vector<64x1xf32>
    %cst_159 = arith.constant 0.000000e+00 : f32
    %cst_160 = arith.constant 3.000000e+00 : f32
    %365 = vector.broadcast %cst_159 : f32 to vector<64x1xf32>
    %366 = arith.maximumf %365, %347 : vector<64x1xf32>
    %367 = vector.broadcast %cst_160 : f32 to vector<64x1xf32>
    %368 = arith.minimumf %367, %366 : vector<64x1xf32>
    %cst_161 = arith.constant 4.000000e+00 : f32
    %369 = vector.broadcast %cst_161 : f32 to vector<64x1xf32>
    %370 = arith.mulf %368, %369 : vector<64x1xf32>
    %371 = arith.addf %370, %364 : vector<64x1xf32>
    %372 = vector.broadcast %371 : vector<64x1xf32> to vector<64x16xf32>
    %373 = arith.cmpf oeq, %330, %372 : vector<64x16xf32>
    %374 = arith.extui %373 : vector<64x16xi1> to vector<64x16xi32>
    %375 = arith.sitofp %374 : vector<64x16xi32> to vector<64x16xf32>
    %376 = arith.mulf %336, %360 : vector<64x1xf32>
    %377 = vector.broadcast %376 : vector<64x1xf32> to vector<64x16xf32>
    %378 = arith.mulf %375, %377 : vector<64x16xf32>
    %379 = arith.addf %331, %378 : vector<64x16xf32>
    %cst_162 = arith.constant 1.000000e+00 : f32
    %380 = vector.broadcast %cst_162 : f32 to vector<64x1xf32>
    %381 = arith.addf %325, %380 : vector<64x1xf32>
    %cst_163 = arith.constant 0.000000e+00 : f32
    %382 = vector.broadcast %cst_163 : f32 to vector<64x1xf32>
    %383 = arith.addf %326, %382 : vector<64x1xf32>
    %cst_164 = arith.constant 0.000000e+00 : f32
    %384 = vector.broadcast %cst_164 : f32 to vector<64x1xf32>
    %385 = arith.cmpf oge, %381, %384 : vector<64x1xf32>
    %cst_165 = arith.constant 3.000000e+00 : f32
    %386 = vector.broadcast %cst_165 : f32 to vector<64x1xf32>
    %387 = arith.cmpf ole, %381, %386 : vector<64x1xf32>
    %388 = arith.andi %385, %387 : vector<64x1xi1>
    %cst_166 = arith.constant 0.000000e+00 : f32
    %389 = vector.broadcast %cst_166 : f32 to vector<64x1xf32>
    %390 = arith.cmpf oge, %383, %389 : vector<64x1xf32>
    %391 = arith.andi %388, %390 : vector<64x1xi1>
    %cst_167 = arith.constant 3.000000e+00 : f32
    %392 = vector.broadcast %cst_167 : f32 to vector<64x1xf32>
    %393 = arith.cmpf ole, %383, %392 : vector<64x1xf32>
    %394 = arith.andi %391, %393 : vector<64x1xi1>
    %395 = arith.extui %394 : vector<64x1xi1> to vector<64x1xi32>
    %396 = arith.sitofp %395 : vector<64x1xi32> to vector<64x1xf32>
    %cst_168 = arith.constant 0.000000e+00 : f32
    %cst_169 = arith.constant 3.000000e+00 : f32
    %397 = vector.broadcast %cst_168 : f32 to vector<64x1xf32>
    %398 = arith.maximumf %397, %381 : vector<64x1xf32>
    %399 = vector.broadcast %cst_169 : f32 to vector<64x1xf32>
    %400 = arith.minimumf %399, %398 : vector<64x1xf32>
    %cst_170 = arith.constant 0.000000e+00 : f32
    %cst_171 = arith.constant 3.000000e+00 : f32
    %401 = vector.broadcast %cst_170 : f32 to vector<64x1xf32>
    %402 = arith.maximumf %401, %383 : vector<64x1xf32>
    %403 = vector.broadcast %cst_171 : f32 to vector<64x1xf32>
    %404 = arith.minimumf %403, %402 : vector<64x1xf32>
    %cst_172 = arith.constant 4.000000e+00 : f32
    %405 = vector.broadcast %cst_172 : f32 to vector<64x1xf32>
    %406 = arith.mulf %404, %405 : vector<64x1xf32>
    %407 = arith.addf %406, %400 : vector<64x1xf32>
    %408 = vector.broadcast %407 : vector<64x1xf32> to vector<64x16xf32>
    %409 = arith.cmpf oeq, %330, %408 : vector<64x16xf32>
    %410 = arith.extui %409 : vector<64x16xi1> to vector<64x16xi32>
    %411 = arith.sitofp %410 : vector<64x16xi32> to vector<64x16xf32>
    %412 = arith.mulf %339, %396 : vector<64x1xf32>
    %413 = vector.broadcast %412 : vector<64x1xf32> to vector<64x16xf32>
    %414 = arith.mulf %411, %413 : vector<64x16xf32>
    %415 = arith.addf %379, %414 : vector<64x16xf32>
    %cst_173 = arith.constant 0.000000e+00 : f32
    %416 = vector.broadcast %cst_173 : f32 to vector<64x1xf32>
    %417 = arith.addf %325, %416 : vector<64x1xf32>
    %cst_174 = arith.constant 1.000000e+00 : f32
    %418 = vector.broadcast %cst_174 : f32 to vector<64x1xf32>
    %419 = arith.addf %326, %418 : vector<64x1xf32>
    %cst_175 = arith.constant 0.000000e+00 : f32
    %420 = vector.broadcast %cst_175 : f32 to vector<64x1xf32>
    %421 = arith.cmpf oge, %417, %420 : vector<64x1xf32>
    %cst_176 = arith.constant 3.000000e+00 : f32
    %422 = vector.broadcast %cst_176 : f32 to vector<64x1xf32>
    %423 = arith.cmpf ole, %417, %422 : vector<64x1xf32>
    %424 = arith.andi %421, %423 : vector<64x1xi1>
    %cst_177 = arith.constant 0.000000e+00 : f32
    %425 = vector.broadcast %cst_177 : f32 to vector<64x1xf32>
    %426 = arith.cmpf oge, %419, %425 : vector<64x1xf32>
    %427 = arith.andi %424, %426 : vector<64x1xi1>
    %cst_178 = arith.constant 3.000000e+00 : f32
    %428 = vector.broadcast %cst_178 : f32 to vector<64x1xf32>
    %429 = arith.cmpf ole, %419, %428 : vector<64x1xf32>
    %430 = arith.andi %427, %429 : vector<64x1xi1>
    %431 = arith.extui %430 : vector<64x1xi1> to vector<64x1xi32>
    %432 = arith.sitofp %431 : vector<64x1xi32> to vector<64x1xf32>
    %cst_179 = arith.constant 0.000000e+00 : f32
    %cst_180 = arith.constant 3.000000e+00 : f32
    %433 = vector.broadcast %cst_179 : f32 to vector<64x1xf32>
    %434 = arith.maximumf %433, %417 : vector<64x1xf32>
    %435 = vector.broadcast %cst_180 : f32 to vector<64x1xf32>
    %436 = arith.minimumf %435, %434 : vector<64x1xf32>
    %cst_181 = arith.constant 0.000000e+00 : f32
    %cst_182 = arith.constant 3.000000e+00 : f32
    %437 = vector.broadcast %cst_181 : f32 to vector<64x1xf32>
    %438 = arith.maximumf %437, %419 : vector<64x1xf32>
    %439 = vector.broadcast %cst_182 : f32 to vector<64x1xf32>
    %440 = arith.minimumf %439, %438 : vector<64x1xf32>
    %cst_183 = arith.constant 4.000000e+00 : f32
    %441 = vector.broadcast %cst_183 : f32 to vector<64x1xf32>
    %442 = arith.mulf %440, %441 : vector<64x1xf32>
    %443 = arith.addf %442, %436 : vector<64x1xf32>
    %444 = vector.broadcast %443 : vector<64x1xf32> to vector<64x16xf32>
    %445 = arith.cmpf oeq, %330, %444 : vector<64x16xf32>
    %446 = arith.extui %445 : vector<64x16xi1> to vector<64x16xi32>
    %447 = arith.sitofp %446 : vector<64x16xi32> to vector<64x16xf32>
    %448 = arith.mulf %342, %432 : vector<64x1xf32>
    %449 = vector.broadcast %448 : vector<64x1xf32> to vector<64x16xf32>
    %450 = arith.mulf %447, %449 : vector<64x16xf32>
    %451 = arith.addf %415, %450 : vector<64x16xf32>
    %cst_184 = arith.constant 1.000000e+00 : f32
    %452 = vector.broadcast %cst_184 : f32 to vector<64x1xf32>
    %453 = arith.addf %325, %452 : vector<64x1xf32>
    %cst_185 = arith.constant 1.000000e+00 : f32
    %454 = vector.broadcast %cst_185 : f32 to vector<64x1xf32>
    %455 = arith.addf %326, %454 : vector<64x1xf32>
    %cst_186 = arith.constant 0.000000e+00 : f32
    %456 = vector.broadcast %cst_186 : f32 to vector<64x1xf32>
    %457 = arith.cmpf oge, %453, %456 : vector<64x1xf32>
    %cst_187 = arith.constant 3.000000e+00 : f32
    %458 = vector.broadcast %cst_187 : f32 to vector<64x1xf32>
    %459 = arith.cmpf ole, %453, %458 : vector<64x1xf32>
    %460 = arith.andi %457, %459 : vector<64x1xi1>
    %cst_188 = arith.constant 0.000000e+00 : f32
    %461 = vector.broadcast %cst_188 : f32 to vector<64x1xf32>
    %462 = arith.cmpf oge, %455, %461 : vector<64x1xf32>
    %463 = arith.andi %460, %462 : vector<64x1xi1>
    %cst_189 = arith.constant 3.000000e+00 : f32
    %464 = vector.broadcast %cst_189 : f32 to vector<64x1xf32>
    %465 = arith.cmpf ole, %455, %464 : vector<64x1xf32>
    %466 = arith.andi %463, %465 : vector<64x1xi1>
    %467 = arith.extui %466 : vector<64x1xi1> to vector<64x1xi32>
    %468 = arith.sitofp %467 : vector<64x1xi32> to vector<64x1xf32>
    %cst_190 = arith.constant 0.000000e+00 : f32
    %cst_191 = arith.constant 3.000000e+00 : f32
    %469 = vector.broadcast %cst_190 : f32 to vector<64x1xf32>
    %470 = arith.maximumf %469, %453 : vector<64x1xf32>
    %471 = vector.broadcast %cst_191 : f32 to vector<64x1xf32>
    %472 = arith.minimumf %471, %470 : vector<64x1xf32>
    %cst_192 = arith.constant 0.000000e+00 : f32
    %cst_193 = arith.constant 3.000000e+00 : f32
    %473 = vector.broadcast %cst_192 : f32 to vector<64x1xf32>
    %474 = arith.maximumf %473, %455 : vector<64x1xf32>
    %475 = vector.broadcast %cst_193 : f32 to vector<64x1xf32>
    %476 = arith.minimumf %475, %474 : vector<64x1xf32>
    %cst_194 = arith.constant 4.000000e+00 : f32
    %477 = vector.broadcast %cst_194 : f32 to vector<64x1xf32>
    %478 = arith.mulf %476, %477 : vector<64x1xf32>
    %479 = arith.addf %478, %472 : vector<64x1xf32>
    %480 = vector.broadcast %479 : vector<64x1xf32> to vector<64x16xf32>
    %481 = arith.cmpf oeq, %330, %480 : vector<64x16xf32>
    %482 = arith.extui %481 : vector<64x16xi1> to vector<64x16xi32>
    %483 = arith.sitofp %482 : vector<64x16xi32> to vector<64x16xf32>
    %484 = arith.mulf %343, %468 : vector<64x1xf32>
    %485 = vector.broadcast %484 : vector<64x1xf32> to vector<64x16xf32>
    %486 = arith.mulf %483, %485 : vector<64x16xf32>
    %487 = arith.addf %451, %486 : vector<64x16xf32>
    %488 = vector.broadcast %308 : vector<64x1xf32> to vector<64x16xf32>
    %489 = arith.mulf %487, %488 : vector<64x16xf32>
    %cst_195 = arith.constant dense<0.000000e+00> : vector<64x32xf32>
    %490 = tpu.matmul %489, %296, %cst_195 {dimension_numbers = #tpu.dot_dimension_numbers<[1], [0], [0], [1], [0, 0, 1, 1], [], []>} : vector<64x16xf32>, vector<16x32xf32>, vector<64x32xf32> -> vector<64x32xf32>
    %491 = arith.addf %295, %490 : vector<64x32xf32>
    %c0_196 = arith.constant 0 : index
    %c0_197 = arith.constant 0 : index
    %492 = vector.load %arg33[%c0_196, %c0_197] : memref<64x32xf32, #tpu.memory_space<vmem>>, vector<64x32xf32>
    %493 = arith.mulf %491, %492 : vector<64x32xf32>
    %c0_198 = arith.constant 0 : index
    %c0_199 = arith.constant 0 : index
    %494 = vector.load %arg32[%c0_198, %c0_199] : memref<8x64xf32, #tpu.memory_space<vmem>>, vector<8x64xf32>
    %cst_200 = arith.constant dense<0.000000e+00> : vector<8x32xf32>
    %495 = tpu.matmul %494, %493, %cst_200 {dimension_numbers = #tpu.dot_dimension_numbers<[1], [0], [0], [1], [0, 0, 1, 1], [], []>} : vector<8x64xf32>, vector<64x32xf32>, vector<8x32xf32> -> vector<8x32xf32>
    %c0_201 = arith.constant 0 : index
    %c0_202 = arith.constant 0 : index
    %496 = vector.load %arg18[%c0_201, %c0_202] : memref<32x32xf32, #tpu.memory_space<vmem>>, vector<32x32xf32>
    %cst_203 = arith.constant dense<0.000000e+00> : vector<8x32xf32>
    %497 = tpu.matmul %495, %496, %cst_203 {dimension_numbers = #tpu.dot_dimension_numbers<[1], [0], [0], [1], [0, 0, 1, 1], [], []>} : vector<8x32xf32>, vector<32x32xf32>, vector<8x32xf32> -> vector<8x32xf32>
    %c0_204 = arith.constant 0 : index
    %c0_205 = arith.constant 0 : index
    %498 = vector.load %arg19[%c0_204, %c0_205] : memref<1x32xf32, #tpu.memory_space<vmem>>, vector<1x32xf32>
    %499 = vector.broadcast %498 : vector<1x32xf32> to vector<8x32xf32>
    %500 = arith.addf %497, %499 : vector<8x32xf32>
    %501 = arith.addf %64, %500 : vector<8x32xf32>
    %cst_206 = arith.constant dense<0.000000e+00> : vector<8xf32>
    %502 = vector.multi_reduction <add>, %501, %cst_206 [1] : vector<8x32xf32> to vector<8xf32>
    %503 = vector.shape_cast %502 : vector<8xf32> to vector<8x1xf32>
    %cst_207 = arith.constant 3.200000e+01 : f32
    %504 = vector.broadcast %cst_207 : f32 to vector<8x1xf32>
    %505 = arith.divf %503, %504 : vector<8x1xf32>
    %506 = vector.broadcast %505 : vector<8x1xf32> to vector<8x32xf32>
    %507 = arith.subf %501, %506 : vector<8x32xf32>
    %508 = arith.mulf %507, %507 : vector<8x32xf32>
    %cst_208 = arith.constant dense<0.000000e+00> : vector<8xf32>
    %509 = vector.multi_reduction <add>, %508, %cst_208 [1] : vector<8x32xf32> to vector<8xf32>
    %510 = vector.shape_cast %509 : vector<8xf32> to vector<8x1xf32>
    %cst_209 = arith.constant 3.200000e+01 : f32
    %511 = vector.broadcast %cst_209 : f32 to vector<8x1xf32>
    %512 = arith.divf %510, %511 : vector<8x1xf32>
    %513 = vector.broadcast %505 : vector<8x1xf32> to vector<8x32xf32>
    %514 = arith.subf %501, %513 : vector<8x32xf32>
    %cst_210 = arith.constant 9.99999974E-6 : f32
    %515 = vector.broadcast %cst_210 : f32 to vector<8x1xf32>
    %516 = arith.addf %512, %515 : vector<8x1xf32>
    %517 = math.rsqrt %516 : vector<8x1xf32>
    %518 = vector.broadcast %517 : vector<8x1xf32> to vector<8x32xf32>
    %519 = arith.mulf %514, %518 : vector<8x32xf32>
    %c0_211 = arith.constant 0 : index
    %c0_212 = arith.constant 0 : index
    %520 = vector.load %arg20[%c0_211, %c0_212] : memref<1x32xf32, #tpu.memory_space<vmem>>, vector<1x32xf32>
    %521 = vector.broadcast %520 : vector<1x32xf32> to vector<8x32xf32>
    %522 = arith.mulf %519, %521 : vector<8x32xf32>
    %c0_213 = arith.constant 0 : index
    %c0_214 = arith.constant 0 : index
    %523 = vector.load %arg21[%c0_213, %c0_214] : memref<1x32xf32, #tpu.memory_space<vmem>>, vector<1x32xf32>
    %524 = vector.broadcast %523 : vector<1x32xf32> to vector<8x32xf32>
    %525 = arith.addf %522, %524 : vector<8x32xf32>
    %c0_215 = arith.constant 0 : index
    %c0_216 = arith.constant 0 : index
    %526 = vector.load %arg22[%c0_215, %c0_216] : memref<32x64xf32, #tpu.memory_space<vmem>>, vector<32x64xf32>
    %cst_217 = arith.constant dense<0.000000e+00> : vector<8x64xf32>
    %527 = tpu.matmul %525, %526, %cst_217 {dimension_numbers = #tpu.dot_dimension_numbers<[1], [0], [0], [1], [0, 0, 1, 1], [], []>} : vector<8x32xf32>, vector<32x64xf32>, vector<8x64xf32> -> vector<8x64xf32>
    %c0_218 = arith.constant 0 : index
    %c0_219 = arith.constant 0 : index
    %528 = vector.load %arg23[%c0_218, %c0_219] : memref<1x64xf32, #tpu.memory_space<vmem>>, vector<1x64xf32>
    %529 = vector.broadcast %528 : vector<1x64xf32> to vector<8x64xf32>
    %530 = arith.addf %527, %529 : vector<8x64xf32>
    %cst_220 = arith.constant 0.000000e+00 : f32
    %531 = vector.broadcast %cst_220 : f32 to vector<8x64xf32>
    %532 = arith.maximumf %530, %531 : vector<8x64xf32>
    %c0_221 = arith.constant 0 : index
    %c0_222 = arith.constant 0 : index
    %533 = vector.load %arg24[%c0_221, %c0_222] : memref<64x32xf32, #tpu.memory_space<vmem>>, vector<64x32xf32>
    %cst_223 = arith.constant dense<0.000000e+00> : vector<8x32xf32>
    %534 = tpu.matmul %532, %533, %cst_223 {dimension_numbers = #tpu.dot_dimension_numbers<[1], [0], [0], [1], [0, 0, 1, 1], [], []>} : vector<8x64xf32>, vector<64x32xf32>, vector<8x32xf32> -> vector<8x32xf32>
    %c0_224 = arith.constant 0 : index
    %c0_225 = arith.constant 0 : index
    %535 = vector.load %arg25[%c0_224, %c0_225] : memref<1x32xf32, #tpu.memory_space<vmem>>, vector<1x32xf32>
    %536 = vector.broadcast %535 : vector<1x32xf32> to vector<8x32xf32>
    %537 = arith.addf %534, %536 : vector<8x32xf32>
    %538 = arith.addf %525, %537 : vector<8x32xf32>
    %cst_226 = arith.constant dense<0.000000e+00> : vector<8xf32>
    %539 = vector.multi_reduction <add>, %538, %cst_226 [1] : vector<8x32xf32> to vector<8xf32>
    %540 = vector.shape_cast %539 : vector<8xf32> to vector<8x1xf32>
    %cst_227 = arith.constant 3.200000e+01 : f32
    %541 = vector.broadcast %cst_227 : f32 to vector<8x1xf32>
    %542 = arith.divf %540, %541 : vector<8x1xf32>
    %543 = vector.broadcast %542 : vector<8x1xf32> to vector<8x32xf32>
    %544 = arith.subf %538, %543 : vector<8x32xf32>
    %545 = arith.mulf %544, %544 : vector<8x32xf32>
    %cst_228 = arith.constant dense<0.000000e+00> : vector<8xf32>
    %546 = vector.multi_reduction <add>, %545, %cst_228 [1] : vector<8x32xf32> to vector<8xf32>
    %547 = vector.shape_cast %546 : vector<8xf32> to vector<8x1xf32>
    %cst_229 = arith.constant 3.200000e+01 : f32
    %548 = vector.broadcast %cst_229 : f32 to vector<8x1xf32>
    %549 = arith.divf %547, %548 : vector<8x1xf32>
    %550 = vector.broadcast %542 : vector<8x1xf32> to vector<8x32xf32>
    %551 = arith.subf %538, %550 : vector<8x32xf32>
    %cst_230 = arith.constant 9.99999974E-6 : f32
    %552 = vector.broadcast %cst_230 : f32 to vector<8x1xf32>
    %553 = arith.addf %549, %552 : vector<8x1xf32>
    %554 = math.rsqrt %553 : vector<8x1xf32>
    %555 = vector.broadcast %554 : vector<8x1xf32> to vector<8x32xf32>
    %556 = arith.mulf %551, %555 : vector<8x32xf32>
    %c0_231 = arith.constant 0 : index
    %c0_232 = arith.constant 0 : index
    %557 = vector.load %arg26[%c0_231, %c0_232] : memref<1x32xf32, #tpu.memory_space<vmem>>, vector<1x32xf32>
    %558 = vector.broadcast %557 : vector<1x32xf32> to vector<8x32xf32>
    %559 = arith.mulf %556, %558 : vector<8x32xf32>
    %c0_233 = arith.constant 0 : index
    %c0_234 = arith.constant 0 : index
    %560 = vector.load %arg27[%c0_233, %c0_234] : memref<1x32xf32, #tpu.memory_space<vmem>>, vector<1x32xf32>
    %561 = vector.broadcast %560 : vector<1x32xf32> to vector<8x32xf32>
    %562 = arith.addf %559, %561 : vector<8x32xf32>
    %c0_235 = arith.constant 0 : index
    %c0_236 = arith.constant 0 : index
    %c0_237 = arith.constant 0 : index
    %563 = vector.load %arg40[%c0_235, %c0_236, %c0_237] : memref<1x8x32xf32, #tpu.memory_space<vmem>>, vector<1x8x32xf32>
    %564 = vector.shape_cast %563 : vector<1x8x32xf32> to vector<8x32xf32>
    %565 = vector.shape_cast %562 : vector<8x32xf32> to vector<1x8x32xf32>
    tpu.vector_store %arg40[%c0_235, %c0_236, %c0_237], %565 {strides = array<i32>} : memref<1x8x32xf32, #tpu.memory_space<vmem>>, vector<1x8x32xf32>,
    return
  }
  func.func @transform_0(%arg0: i32) -> (i32, i32, i32) {
    %c0_i32 = arith.constant 0 : i32
    %c0_i32_0 = arith.constant 0 : i32
    %c0_i32_1 = arith.constant 0 : i32
    return %arg0, %c0_i32, %c0_i32_0 : i32, i32, i32
  }
  func.func @transform_1(%arg0: i32) -> (i32, i32, i32) {
    %c0_i32 = arith.constant 0 : i32
    %c0_i32_0 = arith.constant 0 : i32
    %c0_i32_1 = arith.constant 0 : i32
    return %arg0, %c0_i32, %c0_i32_0 : i32, i32, i32
  }
  func.func @transform_2(%arg0: i32) -> (i32, i32, i32) {
    %c0_i32 = arith.constant 0 : i32
    %c0_i32_0 = arith.constant 0 : i32
    %c0_i32_1 = arith.constant 0 : i32
    return %arg0, %c0_i32, %c0_i32_0 : i32, i32, i32
  }
  func.func @transform_3(%arg0: i32) -> (i32, i32, i32) {
    %c0_i32 = arith.constant 0 : i32
    %c0_i32_0 = arith.constant 0 : i32
    %c0_i32_1 = arith.constant 0 : i32
    return %arg0, %c0_i32, %c0_i32_0 : i32, i32, i32
  }
  func.func @transform_4(%arg0: i32) -> (i32, i32, i32) {
    %c0_i32 = arith.constant 0 : i32
    %c0_i32_0 = arith.constant 0 : i32
    %c0_i32_1 = arith.constant 0 : i32
    return %arg0, %c0_i32, %c0_i32_0 : i32, i32, i32
  }
  func.func @transform_5(%arg0: i32) -> (i32, i32) {
    %c0_i32 = arith.constant 0 : i32
    %c0_i32_0 = arith.constant 0 : i32
    %c0_i32_1 = arith.constant 0 : i32
    return %c0_i32, %c0_i32_0 : i32, i32
  }
  func.func @transform_6(%arg0: i32) -> (i32, i32) {
    %c0_i32 = arith.constant 0 : i32
    %c0_i32_0 = arith.constant 0 : i32
    %c0_i32_1 = arith.constant 0 : i32
    return %c0_i32, %c0_i32_0 : i32, i32
  }
  func.func @transform_7(%arg0: i32) -> (i32, i32) {
    %c0_i32 = arith.constant 0 : i32
    %c0_i32_0 = arith.constant 0 : i32
    %c0_i32_1 = arith.constant 0 : i32
    return %c0_i32, %c0_i32_0 : i32, i32
  }
  func.func @transform_8(%arg0: i32) -> (i32, i32) {
    %c0_i32 = arith.constant 0 : i32
    %c0_i32_0 = arith.constant 0 : i32
    %c0_i32_1 = arith.constant 0 : i32
    return %c0_i32, %c0_i32_0 : i32, i32
  }
  func.func @transform_9(%arg0: i32) -> (i32, i32) {
    %c0_i32 = arith.constant 0 : i32
    %c0_i32_0 = arith.constant 0 : i32
    %c0_i32_1 = arith.constant 0 : i32
    return %c0_i32, %c0_i32_0 : i32, i32
  }
  func.func @transform_10(%arg0: i32) -> (i32, i32) {
    %c0_i32 = arith.constant 0 : i32
    %c0_i32_0 = arith.constant 0 : i32
    %c0_i32_1 = arith.constant 0 : i32
    return %c0_i32, %c0_i32_0 : i32, i32
  }
  func.func @transform_11(%arg0: i32) -> (i32, i32) {
    %c0_i32 = arith.constant 0 : i32
    %c0_i32_0 = arith.constant 0 : i32
    %c0_i32_1 = arith.constant 0 : i32
    return %c0_i32, %c0_i32_0 : i32, i32
  }
  func.func @transform_12(%arg0: i32) -> (i32, i32) {
    %c0_i32 = arith.constant 0 : i32
    %c0_i32_0 = arith.constant 0 : i32
    %c0_i32_1 = arith.constant 0 : i32
    return %c0_i32, %c0_i32_0 : i32, i32
  }
  func.func @transform_13(%arg0: i32) -> (i32, i32) {
    %c0_i32 = arith.constant 0 : i32
    %c0_i32_0 = arith.constant 0 : i32
    %c0_i32_1 = arith.constant 0 : i32
    return %c0_i32, %c0_i32_0 : i32, i32
  }
  func.func @transform_14(%arg0: i32) -> (i32, i32) {
    %c0_i32 = arith.constant 0 : i32
    %c0_i32_0 = arith.constant 0 : i32
    %c0_i32_1 = arith.constant 0 : i32
    return %c0_i32, %c0_i32_0 : i32, i32
  }
  func.func @transform_15(%arg0: i32) -> (i32, i32) {
    %c0_i32 = arith.constant 0 : i32
    %c0_i32_0 = arith.constant 0 : i32
    %c0_i32_1 = arith.constant 0 : i32
    return %c0_i32, %c0_i32_0 : i32, i32
  }
  func.func @transform_16(%arg0: i32) -> (i32, i32) {
    %c0_i32 = arith.constant 0 : i32
    %c0_i32_0 = arith.constant 0 : i32
    %c0_i32_1 = arith.constant 0 : i32
    return %c0_i32, %c0_i32_0 : i32, i32
  }
  func.func @transform_17(%arg0: i32) -> (i32, i32) {
    %c0_i32 = arith.constant 0 : i32
    %c0_i32_0 = arith.constant 0 : i32
    %c0_i32_1 = arith.constant 0 : i32
    return %c0_i32, %c0_i32_0 : i32, i32
  }
  func.func @transform_18(%arg0: i32) -> (i32, i32) {
    %c0_i32 = arith.constant 0 : i32
    %c0_i32_0 = arith.constant 0 : i32
    %c0_i32_1 = arith.constant 0 : i32
    return %c0_i32, %c0_i32_0 : i32, i32
  }
  func.func @transform_19(%arg0: i32) -> (i32, i32) {
    %c0_i32 = arith.constant 0 : i32
    %c0_i32_0 = arith.constant 0 : i32
    %c0_i32_1 = arith.constant 0 : i32
    return %c0_i32, %c0_i32_0 : i32, i32
  }
  func.func @transform_20(%arg0: i32) -> (i32, i32) {
    %c0_i32 = arith.constant 0 : i32
    %c0_i32_0 = arith.constant 0 : i32
    %c0_i32_1 = arith.constant 0 : i32
    return %c0_i32, %c0_i32_0 : i32, i32
  }
  func.func @transform_21(%arg0: i32) -> (i32, i32) {
    %c0_i32 = arith.constant 0 : i32
    %c0_i32_0 = arith.constant 0 : i32
    %c0_i32_1 = arith.constant 0 : i32
    return %c0_i32, %c0_i32_0 : i32, i32
  }
  func.func @transform_22(%arg0: i32) -> (i32, i32) {
    %c0_i32 = arith.constant 0 : i32
    %c0_i32_0 = arith.constant 0 : i32
    %c0_i32_1 = arith.constant 0 : i32
    return %c0_i32, %c0_i32_0 : i32, i32
  }
  func.func @transform_23(%arg0: i32) -> (i32, i32) {
    %c0_i32 = arith.constant 0 : i32
    %c0_i32_0 = arith.constant 0 : i32
    %c0_i32_1 = arith.constant 0 : i32
    return %c0_i32, %c0_i32_0 : i32, i32
  }
  func.func @transform_24(%arg0: i32) -> (i32, i32) {
    %c0_i32 = arith.constant 0 : i32
    %c0_i32_0 = arith.constant 0 : i32
    %c0_i32_1 = arith.constant 0 : i32
    return %c0_i32, %c0_i32_0 : i32, i32
  }
  func.func @transform_25(%arg0: i32) -> (i32, i32) {
    %c0_i32 = arith.constant 0 : i32
    %c0_i32_0 = arith.constant 0 : i32
    %c0_i32_1 = arith.constant 0 : i32
    return %c0_i32, %c0_i32_0 : i32, i32
  }
  func.func @transform_26(%arg0: i32) -> (i32, i32) {
    %c0_i32 = arith.constant 0 : i32
    %c0_i32_0 = arith.constant 0 : i32
    %c0_i32_1 = arith.constant 0 : i32
    return %c0_i32, %c0_i32_0 : i32, i32
  }
  func.func @transform_27(%arg0: i32) -> (i32, i32) {
    %c0_i32 = arith.constant 0 : i32
    %c0_i32_0 = arith.constant 0 : i32
    %c0_i32_1 = arith.constant 0 : i32
    return %c0_i32, %c0_i32_0 : i32, i32
  }
  func.func @transform_28(%arg0: i32) -> (i32, i32) {
    %c0_i32 = arith.constant 0 : i32
    %c0_i32_0 = arith.constant 0 : i32
    %c0_i32_1 = arith.constant 0 : i32
    return %c0_i32, %c0_i32_0 : i32, i32
  }
  func.func @transform_29(%arg0: i32) -> (i32, i32) {
    %c0_i32 = arith.constant 0 : i32
    %c0_i32_0 = arith.constant 0 : i32
    %c0_i32_1 = arith.constant 0 : i32
    return %c0_i32, %c0_i32_0 : i32, i32
  }
  func.func @transform_30(%arg0: i32) -> (i32, i32) {
    %c0_i32 = arith.constant 0 : i32
    %c0_i32_0 = arith.constant 0 : i32
    %c0_i32_1 = arith.constant 0 : i32
    return %c0_i32, %c0_i32_0 : i32, i32
  }
  func.func @transform_31(%arg0: i32) -> (i32, i32) {
    %c0_i32 = arith.constant 0 : i32
    %c0_i32_0 = arith.constant 0 : i32
    %c0_i32_1 = arith.constant 0 : i32
    return %c0_i32, %c0_i32_0 : i32, i32
  }
  func.func @transform_32(%arg0: i32) -> (i32, i32) {
    %c0_i32 = arith.constant 0 : i32
    %c0_i32_0 = arith.constant 0 : i32
    %c0_i32_1 = arith.constant 0 : i32
    return %c0_i32, %c0_i32_0 : i32, i32
  }
  func.func @transform_33(%arg0: i32) -> (i32, i32) {
    %c0_i32 = arith.constant 0 : i32
    %c0_i32_0 = arith.constant 0 : i32
    %c0_i32_1 = arith.constant 0 : i32
    return %c0_i32, %c0_i32_0 : i32, i32
  }
  func.func @transform_34(%arg0: i32) -> (i32, i32) {
    %c0_i32 = arith.constant 0 : i32
    %c0_i32_0 = arith.constant 0 : i32
    %c0_i32_1 = arith.constant 0 : i32
    return %c0_i32, %c0_i32_0 : i32, i32
  }
  func.func @transform_35(%arg0: i32) -> (i32, i32) {
    %c0_i32 = arith.constant 0 : i32
    %c0_i32_0 = arith.constant 0 : i32
    %c0_i32_1 = arith.constant 0 : i32
    return %c0_i32, %c0_i32_0 : i32, i32
  }
  func.func @transform_36(%arg0: i32) -> (i32, i32) {
    %c0_i32 = arith.constant 0 : i32
    %c0_i32_0 = arith.constant 0 : i32
    %c0_i32_1 = arith.constant 0 : i32
    return %c0_i32, %c0_i32_0 : i32, i32
  }
  func.func @transform_37(%arg0: i32) -> (i32, i32) {
    %c0_i32 = arith.constant 0 : i32
    %c0_i32_0 = arith.constant 0 : i32
    %c0_i32_1 = arith.constant 0 : i32
    return %c0_i32, %c0_i32_0 : i32, i32
  }
  func.func @transform_38(%arg0: i32) -> (i32, i32) {
    %c0_i32 = arith.constant 0 : i32
    %c0_i32_0 = arith.constant 0 : i32
    %c0_i32_1 = arith.constant 0 : i32
    return %c0_i32, %c0_i32_0 : i32, i32
  }
  func.func @transform_39(%arg0: i32) -> (i32, i32, i32) {
    %c0_i32 = arith.constant 0 : i32
    %c0_i32_0 = arith.constant 0 : i32
    %c0_i32_1 = arith.constant 0 : i32
    return %arg0, %c0_i32, %c0_i32_0 : i32, i32, i32
  }
}

</mosaic_0001>

<llo_original>
// kernel: tpu_custom_call.1
$region0: #{tpu_custom_call.1}
  #allocation0 [shape = 'u32[]', space=smem, size = 0x4, offset = 0x4, fixed_abs, tag = 'smem constant byte address 0x4 - core index']
  #allocation1 [shape = 'u32[72,128]{1,0:T(1,128)}', space=vmem, size = 0x9000, scoped, tag = 'internal scratch']
  %s0 = inlined_call_operand.smem [shape: u32[40], index: -1, kind: input, shape index: {}]
  %s1 = sld [smem:[%s0]]
  %s2 = scalar_lea.smem %s0, 1
  %s3 = sld [smem:[%s2]]
  %s4 = scalar_lea.smem %s0, 2
  %s5 = sld [smem:[%s4]]
  %s6 = scalar_lea.smem %s0, 3
  %s7 = sld [smem:[%s6]]
  %s8 = scalar_lea.smem %s0, 4
  %s9 = sld [smem:[%s8]]
  %s10 = scalar_lea.smem %s0, 5
  %s11 = sld [smem:[%s10]]
  %s12 = scalar_lea.smem %s0, 6
  %s13 = sld [smem:[%s12]]
  %s14 = scalar_lea.smem %s0, 7
  %s15 = sld [smem:[%s14]]
  %s16 = scalar_lea.smem %s0, 8
  %s17 = sld [smem:[%s16]]
  %s18 = scalar_lea.smem %s0, 9
  %s19 = sld [smem:[%s18]]
  %s20 = scalar_lea.smem %s0, 10
  %s21 = sld [smem:[%s20]]
  %s22 = scalar_lea.smem %s0, 11
  %s23 = sld [smem:[%s22]]
  %s24 = scalar_lea.smem %s0, 12
  %s25 = sld [smem:[%s24]]
  %s26 = scalar_lea.smem %s0, 13
  %s27 = sld [smem:[%s26]]
  %s28 = scalar_lea.smem %s0, 14
  %s29 = sld [smem:[%s28]]
  %s30 = scalar_lea.smem %s0, 15
  %s31 = sld [smem:[%s30]]
  %s32 = scalar_lea.smem %s0, 16
  %s33 = sld [smem:[%s32]]
  %s34 = scalar_lea.smem %s0, 17
  %s35 = sld [smem:[%s34]]
  %s36 = scalar_lea.smem %s0, 18
  %s37 = sld [smem:[%s36]]
  %s38 = scalar_lea.smem %s0, 19
  %s39 = sld [smem:[%s38]]
  %s40 = scalar_lea.smem %s0, 20
  %s41 = sld [smem:[%s40]]
  %s42 = scalar_lea.smem %s0, 21
  %s43 = sld [smem:[%s42]]
  %s44 = scalar_lea.smem %s0, 22
  %s45 = sld [smem:[%s44]]
  %s46 = scalar_lea.smem %s0, 23
  %s47 = sld [smem:[%s46]]
  %s48 = scalar_lea.smem %s0, 24
  %s49 = sld [smem:[%s48]]
  %s50 = scalar_lea.smem %s0, 25
  %s51 = sld [smem:[%s50]]
  %s52 = scalar_lea.smem %s0, 26
  %s53 = sld [smem:[%s52]]
  %s54 = scalar_lea.smem %s0, 27
  %s55 = sld [smem:[%s54]]
  %s56 = scalar_lea.smem %s0, 28
  %s57 = sld [smem:[%s56]]
  %s58 = scalar_lea.smem %s0, 29
  %s59 = sld [smem:[%s58]]
  %s60 = scalar_lea.smem %s0, 30
  %s61 = sld [smem:[%s60]]
  %s62 = scalar_lea.smem %s0, 31
  %s63 = sld [smem:[%s62]]
  %s64 = scalar_lea.smem %s0, 32
  %s65 = sld [smem:[%s64]]
  %s66 = scalar_lea.smem %s0, 33
  %s67 = sld [smem:[%s66]]
  %s68 = scalar_lea.smem %s0, 34
  %s69 = sld [smem:[%s68]]
  %s70 = scalar_lea.smem %s0, 35
  %s71 = sld [smem:[%s70]]
  %s72 = scalar_lea.smem %s0, 36
  %s73 = sld [smem:[%s72]]
  %s74 = scalar_lea.smem %s0, 37
  %s75 = sld [smem:[%s74]]
  %s76 = scalar_lea.smem %s0, 38
  %s77 = sld [smem:[%s76]]
  %s78 = scalar_lea.smem %s0, 39
  %s79 = sld [smem:[%s78]]
  %s80 = sld [smem:[#allocation0]]
  $region189: #{tpu_custom_call.1} parent=0
    _
  %s82 = ssub.s32 1, %s80
  %s83 = scalar_select 0, %s82, %s80
  $region1: #{tpu_custom_call.1} parent=0
    #allocation2 [shape = 'u8[8192]{0}', space=vmem, size = 0x2000, scoped, tag = 'output window, operand 0']
    #allocation3 [shape = 's32[2]{0}', space=sflag, size = 0x8, scoped, tag = 'scoped memory for tpu_custom_call.1']
    %84 = vsyncpa [#allocation3], 0
    %s85 = scalar_lea.sflag [#allocation3], 1
    %86 = vsyncpa %s85, 0
    loop: start=0, step=1, limit=4
    $region2: #{tpu_custom_call.1} parent=1 // loop_pre_header
      _
    $region3: #{tpu_custom_call.1} parent=1 // loop_header
      %s88 = sphi 0, %s92
      %p89 = scmp.ge.s32.totalorder %s88, 4
      %s98 = sphi 0, %s100
      %s101 = sphi 0, %s98
      %s102 = sphi 0, %s101
      %s118 = sphi 0, %s102
      %s124 = sphi 0, %s126
      %s127 = sphi 0, %s124
      %s128 = sphi 0, %s127
      %s144 = sphi 0, %s128
      %s150 = sphi 0, %s152
      %s153 = sphi 0, %s150
      %s154 = sphi 0, %s153
      %s170 = sphi 0, %s154
      %s176 = sphi 0, %s178
      %s179 = sphi 0, %s176
      %s180 = sphi 0, %s179
      %s196 = sphi 0, %s180
      %s202 = sphi 0, %s204
      %s205 = sphi 0, %s202
      %s206 = sphi 0, %s205
      %s222 = sphi 0, %s206
      %s226 = sphi 0, %s226
      %s228 = sphi 0, %s226
      %s229 = sphi 0, %s228
      %s243 = sphi 0, %s229
      %s247 = sphi 0, %s247
      %s249 = sphi 0, %s247
      %s250 = sphi 0, %s249
      %s264 = sphi 0, %s250
      %s268 = sphi 0, %s268
      %s270 = sphi 0, %s268
      %s271 = sphi 0, %s270
      %s285 = sphi 0, %s271
      %s289 = sphi 0, %s289
      %s291 = sphi 0, %s289
      %s292 = sphi 0, %s291
      %s306 = sphi 0, %s292
      %s310 = sphi 0, %s310
      %s312 = sphi 0, %s310
      %s313 = sphi 0, %s312
      %s327 = sphi 0, %s313
      %s331 = sphi 0, %s331
      %s333 = sphi 0, %s331
      %s334 = sphi 0, %s333
      %s348 = sphi 0, %s334
      %s352 = sphi 0, %s352
      %s354 = sphi 0, %s352
      %s355 = sphi 0, %s354
      %s369 = sphi 0, %s355
      %s373 = sphi 0, %s373
      %s375 = sphi 0, %s373
      %s376 = sphi 0, %s375
      %s390 = sphi 0, %s376
      %s394 = sphi 0, %s394
      %s396 = sphi 0, %s394
      %s397 = sphi 0, %s396
      %s411 = sphi 0, %s397
      %s415 = sphi 0, %s415
      %s417 = sphi 0, %s415
      %s418 = sphi 0, %s417
      %s432 = sphi 0, %s418
      %s436 = sphi 0, %s436
      %s438 = sphi 0, %s436
      %s439 = sphi 0, %s438
      %s453 = sphi 0, %s439
      %s457 = sphi 0, %s457
      %s459 = sphi 0, %s457
      %s460 = sphi 0, %s459
      %s474 = sphi 0, %s460
      %s478 = sphi 0, %s478
      %s480 = sphi 0, %s478
      %s481 = sphi 0, %s480
      %s495 = sphi 0, %s481
      %s499 = sphi 0, %s499
      %s501 = sphi 0, %s499
      %s502 = sphi 0, %s501
      %s516 = sphi 0, %s502
      %s520 = sphi 0, %s520
      %s522 = sphi 0, %s520
      %s523 = sphi 0, %s522
      %s537 = sphi 0, %s523
      %s541 = sphi 0, %s541
      %s543 = sphi 0, %s541
      %s544 = sphi 0, %s543
      %s558 = sphi 0, %s544
      %s562 = sphi 0, %s562
      %s564 = sphi 0, %s562
      %s565 = sphi 0, %s564
      %s579 = sphi 0, %s565
      %s583 = sphi 0, %s583
      %s585 = sphi 0, %s583
      %s586 = sphi 0, %s585
      %s600 = sphi 0, %s586
      %s604 = sphi 0, %s604
      %s606 = sphi 0, %s604
      %s607 = sphi 0, %s606
      %s621 = sphi 0, %s607
      %s625 = sphi 0, %s625
      %s627 = sphi 0, %s625
      %s628 = sphi 0, %s627
      %s642 = sphi 0, %s628
      %s646 = sphi 0, %s646
      %s648 = sphi 0, %s646
      %s649 = sphi 0, %s648
      %s663 = sphi 0, %s649
      %s667 = sphi 0, %s667
      %s669 = sphi 0, %s667
      %s670 = sphi 0, %s669
      %s684 = sphi 0, %s670
      %s688 = sphi 0, %s688
      %s690 = sphi 0, %s688
      %s691 = sphi 0, %s690
      %s705 = sphi 0, %s691
      %s709 = sphi 0, %s709
      %s711 = sphi 0, %s709
      %s712 = sphi 0, %s711
      %s726 = sphi 0, %s712
      %s730 = sphi 0, %s730
      %s732 = sphi 0, %s730
      %s733 = sphi 0, %s732
      %s747 = sphi 0, %s733
      %s751 = sphi 0, %s751
      %s753 = sphi 0, %s751
      %s754 = sphi 0, %s753
      %s768 = sphi 0, %s754
      %s772 = sphi 0, %s772
      %s774 = sphi 0, %s772
      %s775 = sphi 0, %s774
      %s789 = sphi 0, %s775
      %s793 = sphi 0, %s793
      %s795 = sphi 0, %s793
      %s796 = sphi 0, %s795
      %s810 = sphi 0, %s796
      %s814 = sphi 0, %s814
      %s816 = sphi 0, %s814
      %s817 = sphi 0, %s816
      %s831 = sphi 0, %s817
      %s835 = sphi 0, %s835
      %s837 = sphi 0, %s835
      %s838 = sphi 0, %s837
      %s852 = sphi 0, %s838
      %s856 = sphi 0, %s856
      %s858 = sphi 0, %s856
      %s859 = sphi 0, %s858
      %s873 = sphi 0, %s859
      %s877 = sphi 0, %s877
      %s879 = sphi 0, %s877
      %s880 = sphi 0, %s879
      %s894 = sphi 0, %s880
      %s898 = sphi 0, %s898
      %s900 = sphi 0, %s898
      %s901 = sphi 0, %s900
      %s915 = sphi 0, %s901
      %s919 = sphi 0, %s919
      %s921 = sphi 0, %s919
      %s922 = sphi 0, %s921
      %s936 = sphi 0, %s922
      %s942 = sphi 0, %s944
      %s945 = sphi 0, %s942
      %s946 = sphi 0, %s945
      %s962 = sphi 0, %s946
    $region4: #{tpu_custom_call.1} parent=1 // loop_header_branch
      %91 = sbr.rel (%p89) target = $region8
    $region5: #{tpu_custom_call.1} parent=1 // loop_body
      %s93 = ssub.s32 %s88, 1
      %s94 = ssub.s32 %s88, 2
      %s95 = sadd.s32 %s88, 1
      %s96 = ssub.s32 %s88, %s95
      %p97 = scmp.eq.s32.totalorder %s96, 0
      %s99 = sadd.s32 %s98, 1
      %s100 = scalar_select %p97, %s98, %s99
      %p103 = pneg %p97
      %p104 = scmp.eq.s32.totalorder %s88, 1
      %p105 = por %p103, %p104
      %p106 = scmp.ne.s32.totalorder %s98, %s101
      %p107 = scmp.eq.s32.totalorder %s88, 0
      %p108 = por %p106, %p107
      %p109 = scmp.ne.s32.totalorder %s98, %s101
      %p110 = scmp.eq.s32.totalorder %s93, 1
      %p111 = por %p109, %p110
      %p112 = scmp.ne.s32.totalorder %s101, %s102
      %p113 = scmp.eq.s32.totalorder %s93, 0
      %p114 = por %p112, %p113
      %p115 = scmp.ne.s32.totalorder %s101, %s102
      %p116 = scmp.eq.s32.totalorder %s94, 1
      %p117 = por %p115, %p116
      %p119 = scmp.ne.s32.totalorder %s102, %s118
      %p120 = scmp.eq.s32.totalorder %s94, 0
      %p121 = por %p119, %p120
      %s122 = ssub.s32 %s88, %s95
      %p123 = scmp.eq.s32.totalorder %s122, 0
      %s125 = sadd.s32 %s124, 1
      %s126 = scalar_select %p123, %s124, %s125
      %p129 = pneg %p123
      %p130 = scmp.eq.s32.totalorder %s88, 1
      %p131 = por %p129, %p130
      %p132 = scmp.ne.s32.totalorder %s124, %s127
      %p133 = scmp.eq.s32.totalorder %s88, 0
      %p134 = por %p132, %p133
      %p135 = scmp.ne.s32.totalorder %s124, %s127
      %p136 = scmp.eq.s32.totalorder %s93, 1
      %p137 = por %p135, %p136
      %p138 = scmp.ne.s32.totalorder %s127, %s128
      %p139 = scmp.eq.s32.totalorder %s93, 0
      %p140 = por %p138, %p139
      %p141 = scmp.ne.s32.totalorder %s127, %s128
      %p142 = scmp.eq.s32.totalorder %s94, 1
      %p143 = por %p141, %p142
      %p145 = scmp.ne.s32.totalorder %s128, %s144
      %p146 = scmp.eq.s32.totalorder %s94, 0
      %p147 = por %p145, %p146
      %s148 = ssub.s32 %s88, %s95
      %p149 = scmp.eq.s32.totalorder %s148, 0
      %s151 = sadd.s32 %s150, 1
      %s152 = scalar_select %p149, %s150, %s151
      %p155 = pneg %p149
      %p156 = scmp.eq.s32.totalorder %s88, 1
      %p157 = por %p155, %p156
      %p158 = scmp.ne.s32.totalorder %s150, %s153
      %p159 = scmp.eq.s32.totalorder %s88, 0
      %p160 = por %p158, %p159
      %p161 = scmp.ne.s32.totalorder %s150, %s153
      %p162 = scmp.eq.s32.totalorder %s93, 1
      %p163 = por %p161, %p162
      %p164 = scmp.ne.s32.totalorder %s153, %s154
      %p165 = scmp.eq.s32.totalorder %s93, 0
      %p166 = por %p164, %p165
      %p167 = scmp.ne.s32.totalorder %s153, %s154
      %p168 = scmp.eq.s32.totalorder %s94, 1
      %p169 = por %p167, %p168
      %p171 = scmp.ne.s32.totalorder %s154, %s170
      %p172 = scmp.eq.s32.totalorder %s94, 0
      %p173 = por %p171, %p172
      %s174 = ssub.s32 %s88, %s95
      %p175 = scmp.eq.s32.totalorder %s174, 0
      %s177 = sadd.s32 %s176, 1
      %s178 = scalar_select %p175, %s176, %s177
      %p181 = pneg %p175
      %p182 = scmp.eq.s32.totalorder %s88, 1
      %p183 = por %p181, %p182
      %p184 = scmp.ne.s32.totalorder %s176, %s179
      %p185 = scmp.eq.s32.totalorder %s88, 0
      %p186 = por %p184, %p185
      %p187 = scmp.ne.s32.totalorder %s176, %s179
      %p188 = scmp.eq.s32.totalorder %s93, 1
      %p189 = por %p187, %p188
      %p190 = scmp.ne.s32.totalorder %s179, %s180
      %p191 = scmp.eq.s32.totalorder %s93, 0
      %p192 = por %p190, %p191
      %p193 = scmp.ne.s32.totalorder %s179, %s180
      %p194 = scmp.eq.s32.totalorder %s94, 1
      %p195 = por %p193, %p194
      %p197 = scmp.ne.s32.totalorder %s180, %s196
      %p198 = scmp.eq.s32.totalorder %s94, 0
      %p199 = por %p197, %p198
      %s200 = ssub.s32 %s88, %s95
      %p201 = scmp.eq.s32.totalorder %s200, 0
      %s203 = sadd.s32 %s202, 1
      %s204 = scalar_select %p201, %s202, %s203
      %p207 = pneg %p201
      %p208 = scmp.eq.s32.totalorder %s88, 1
      %p209 = por %p207, %p208
      %p210 = scmp.ne.s32.totalorder %s202, %s205
      %p211 = scmp.eq.s32.totalorder %s88, 0
      %p212 = por %p210, %p211
      %p213 = scmp.ne.s32.totalorder %s202, %s205
      %p214 = scmp.eq.s32.totalorder %s93, 1
      %p215 = por %p213, %p214
      %p216 = scmp.ne.s32.totalorder %s205, %s206
      %p217 = scmp.eq.s32.totalorder %s93, 0
      %p218 = por %p216, %p217
      %p219 = scmp.ne.s32.totalorder %s205, %s206
      %p220 = scmp.eq.s32.totalorder %s94, 1
      %p221 = por %p219, %p220
      %p223 = scmp.ne.s32.totalorder %s206, %s222
      %p224 = scmp.eq.s32.totalorder %s94, 0
      %p225 = por %p223, %p224
      %s227 = sadd.s32 %s226, 1
      %p230 = scmp.eq.s32.totalorder %s88, 1
      %p231 = scmp.ne.s32.totalorder %s226, %s228
      %p232 = scmp.eq.s32.totalorder %s88, 0
      %p233 = por %p231, %p232
      %p234 = scmp.ne.s32.totalorder %s226, %s228
      %p235 = scmp.eq.s32.totalorder %s93, 1
      %p236 = por %p234, %p235
      %p237 = scmp.ne.s32.totalorder %s228, %s229
      %p238 = scmp.eq.s32.totalorder %s93, 0
      %p239 = por %p237, %p238
      %p240 = scmp.ne.s32.totalorder %s228, %s229
      %p241 = scmp.eq.s32.totalorder %s94, 1
      %p242 = por %p240, %p241
      %p244 = scmp.ne.s32.totalorder %s229, %s243
      %p245 = scmp.eq.s32.totalorder %s94, 0
      %p246 = por %p244, %p245
      %s248 = sadd.s32 %s247, 1
      %p251 = scmp.eq.s32.totalorder %s88, 1
      %p252 = scmp.ne.s32.totalorder %s247, %s249
      %p253 = scmp.eq.s32.totalorder %s88, 0
      %p254 = por %p252, %p253
      %p255 = scmp.ne.s32.totalorder %s247, %s249
      %p256 = scmp.eq.s32.totalorder %s93, 1
      %p257 = por %p255, %p256
      %p258 = scmp.ne.s32.totalorder %s249, %s250
      %p259 = scmp.eq.s32.totalorder %s93, 0
      %p260 = por %p258, %p259
      %p261 = scmp.ne.s32.totalorder %s249, %s250
      %p262 = scmp.eq.s32.totalorder %s94, 1
      %p263 = por %p261, %p262
      %p265 = scmp.ne.s32.totalorder %s250, %s264
      %p266 = scmp.eq.s32.totalorder %s94, 0
      %p267 = por %p265, %p266
      %s269 = sadd.s32 %s268, 1
      %p272 = scmp.eq.s32.totalorder %s88, 1
      %p273 = scmp.ne.s32.totalorder %s268, %s270
      %p274 = scmp.eq.s32.totalorder %s88, 0
      %p275 = por %p273, %p274
      %p276 = scmp.ne.s32.totalorder %s268, %s270
      %p277 = scmp.eq.s32.totalorder %s93, 1
      %p278 = por %p276, %p277
      %p279 = scmp.ne.s32.totalorder %s270, %s271
      %p280 = scmp.eq.s32.totalorder %s93, 0
      %p281 = por %p279, %p280
      %p282 = scmp.ne.s32.totalorder %s270, %s271
      %p283 = scmp.eq.s32.totalorder %s94, 1
      %p284 = por %p282, %p283
      %p286 = scmp.ne.s32.totalorder %s271, %s285
      %p287 = scmp.eq.s32.totalorder %s94, 0
      %p288 = por %p286, %p287
      %s290 = sadd.s32 %s289, 1
      %p293 = scmp.eq.s32.totalorder %s88, 1
      %p294 = scmp.ne.s32.totalorder %s289, %s291
      %p295 = scmp.eq.s32.totalorder %s88, 0
      %p296 = por %p294, %p295
      %p297 = scmp.ne.s32.totalorder %s289, %s291
      %p298 = scmp.eq.s32.totalorder %s93, 1
      %p299 = por %p297, %p298
      %p300 = scmp.ne.s32.totalorder %s291, %s292
      %p301 = scmp.eq.s32.totalorder %s93, 0
      %p302 = por %p300, %p301
      %p303 = scmp.ne.s32.totalorder %s291, %s292
      %p304 = scmp.eq.s32.totalorder %s94, 1
      %p305 = por %p303, %p304
      %p307 = scmp.ne.s32.totalorder %s292, %s306
      %p308 = scmp.eq.s32.totalorder %s94, 0
      %p309 = por %p307, %p308
      %s311 = sadd.s32 %s310, 1
      %p314 = scmp.eq.s32.totalorder %s88, 1
      %p315 = scmp.ne.s32.totalorder %s310, %s312
      %p316 = scmp.eq.s32.totalorder %s88, 0
      %p317 = por %p315, %p316
      %p318 = scmp.ne.s32.totalorder %s310, %s312
      %p319 = scmp.eq.s32.totalorder %s93, 1
      %p320 = por %p318, %p319
      %p321 = scmp.ne.s32.totalorder %s312, %s313
      %p322 = scmp.eq.s32.totalorder %s93, 0
      %p323 = por %p321, %p322
      %p324 = scmp.ne.s32.totalorder %s312, %s313
      %p325 = scmp.eq.s32.totalorder %s94, 1
      %p326 = por %p324, %p325
      %p328 = scmp.ne.s32.totalorder %s313, %s327
      %p329 = scmp.eq.s32.totalorder %s94, 0
      %p330 = por %p328, %p329
      %s332 = sadd.s32 %s331, 1
      %p335 = scmp.eq.s32.totalorder %s88, 1
      %p336 = scmp.ne.s32.totalorder %s331, %s333
      %p337 = scmp.eq.s32.totalorder %s88, 0
      %p338 = por %p336, %p337
      %p339 = scmp.ne.s32.totalorder %s331, %s333
      %p340 = scmp.eq.s32.totalorder %s93, 1
      %p341 = por %p339, %p340
      %p342 = scmp.ne.s32.totalorder %s333, %s334
      %p343 = scmp.eq.s32.totalorder %s93, 0
      %p344 = por %p342, %p343
      %p345 = scmp.ne.s32.totalorder %s333, %s334
      %p346 = scmp.eq.s32.totalorder %s94, 1
      %p347 = por %p345, %p346
      %p349 = scmp.ne.s32.totalorder %s334, %s348
      %p350 = scmp.eq.s32.totalorder %s94, 0
      %p351 = por %p349, %p350
      %s353 = sadd.s32 %s352, 1
      %p356 = scmp.eq.s32.totalorder %s88, 1
      %p357 = scmp.ne.s32.totalorder %s352, %s354
      %p358 = scmp.eq.s32.totalorder %s88, 0
      %p359 = por %p357, %p358
      %p360 = scmp.ne.s32.totalorder %s352, %s354
      %p361 = scmp.eq.s32.totalorder %s93, 1
      %p362 = por %p360, %p361
      %p363 = scmp.ne.s32.totalorder %s354, %s355
      %p364 = scmp.eq.s32.totalorder %s93, 0
      %p365 = por %p363, %p364
      %p366 = scmp.ne.s32.totalorder %s354, %s355
      %p367 = scmp.eq.s32.totalorder %s94, 1
      %p368 = por %p366, %p367
      %p370 = scmp.ne.s32.totalorder %s355, %s369
      %p371 = scmp.eq.s32.totalorder %s94, 0
      %p372 = por %p370, %p371
      %s374 = sadd.s32 %s373, 1
      %p377 = scmp.eq.s32.totalorder %s88, 1
      %p378 = scmp.ne.s32.totalorder %s373, %s375
      %p379 = scmp.eq.s32.totalorder %s88, 0
      %p380 = por %p378, %p379
      %p381 = scmp.ne.s32.totalorder %s373, %s375
      %p382 = scmp.eq.s32.totalorder %s93, 1
      %p383 = por %p381, %p382
      %p384 = scmp.ne.s32.totalorder %s375, %s376
      %p385 = scmp.eq.s32.totalorder %s93, 0
      %p386 = por %p384, %p385
      %p387 = scmp.ne.s32.totalorder %s375, %s376
      %p388 = scmp.eq.s32.totalorder %s94, 1
      %p389 = por %p387, %p388
      %p391 = scmp.ne.s32.totalorder %s376, %s390
      %p392 = scmp.eq.s32.totalorder %s94, 0
      %p393 = por %p391, %p392
      %s395 = sadd.s32 %s394, 1
      %p398 = scmp.eq.s32.totalorder %s88, 1
      %p399 = scmp.ne.s32.totalorder %s394, %s396
      %p400 = scmp.eq.s32.totalorder %s88, 0
      %p401 = por %p399, %p400
      %p402 = scmp.ne.s32.totalorder %s394, %s396
      %p403 = scmp.eq.s32.totalorder %s93, 1
      %p404 = por %p402, %p403
      %p405 = scmp.ne.s32.totalorder %s396, %s397
      %p406 = scmp.eq.s32.totalorder %s93, 0
      %p407 = por %p405, %p406
      %p408 = scmp.ne.s32.totalorder %s396, %s397
      %p409 = scmp.eq.s32.totalorder %s94, 1
      %p410 = por %p408, %p409
      %p412 = scmp.ne.s32.totalorder %s397, %s411
      %p413 = scmp.eq.s32.totalorder %s94, 0
      %p414 = por %p412, %p413
      %s416 = sadd.s32 %s415, 1
      %p419 = scmp.eq.s32.totalorder %s88, 1
      %p420 = scmp.ne.s32.totalorder %s415, %s417
      %p421 = scmp.eq.s32.totalorder %s88, 0
      %p422 = por %p420, %p421
      %p423 = scmp.ne.s32.totalorder %s415, %s417
      %p424 = scmp.eq.s32.totalorder %s93, 1
      %p425 = por %p423, %p424
      %p426 = scmp.ne.s32.totalorder %s417, %s418
      %p427 = scmp.eq.s32.totalorder %s93, 0
      %p428 = por %p426, %p427
      %p429 = scmp.ne.s32.totalorder %s417, %s418
      %p430 = scmp.eq.s32.totalorder %s94, 1
      %p431 = por %p429, %p430
      %p433 = scmp.ne.s32.totalorder %s418, %s432
      %p434 = scmp.eq.s32.totalorder %s94, 0
      %p435 = por %p433, %p434
      %s437 = sadd.s32 %s436, 1
      %p440 = scmp.eq.s32.totalorder %s88, 1
      %p441 = scmp.ne.s32.totalorder %s436, %s438
      %p442 = scmp.eq.s32.totalorder %s88, 0
      %p443 = por %p441, %p442
      %p444 = scmp.ne.s32.totalorder %s436, %s438
      %p445 = scmp.eq.s32.totalorder %s93, 1
      %p446 = por %p444, %p445
      %p447 = scmp.ne.s32.totalorder %s438, %s439
      %p448 = scmp.eq.s32.totalorder %s93, 0
      %p449 = por %p447, %p448
      %p450 = scmp.ne.s32.totalorder %s438, %s439
      %p451 = scmp.eq.s32.totalorder %s94, 1
      %p452 = por %p450, %p451
      %p454 = scmp.ne.s32.totalorder %s439, %s453
      %p455 = scmp.eq.s32.totalorder %s94, 0
      %p456 = por %p454, %p455
      %s458 = sadd.s32 %s457, 1
      %p461 = scmp.eq.s32.totalorder %s88, 1
      %p462 = scmp.ne.s32.totalorder %s457, %s459
      %p463 = scmp.eq.s32.totalorder %s88, 0
      %p464 = por %p462, %p463
      %p465 = scmp.ne.s32.totalorder %s457, %s459
      %p466 = scmp.eq.s32.totalorder %s93, 1
      %p467 = por %p465, %p466
      %p468 = scmp.ne.s32.totalorder %s459, %s460
      %p469 = scmp.eq.s32.totalorder %s93, 0
      %p470 = por %p468, %p469
      %p471 = scmp.ne.s32.totalorder %s459, %s460
      %p472 = scmp.eq.s32.totalorder %s94, 1
      %p473 = por %p471, %p472
      %p475 = scmp.ne.s32.totalorder %s460, %s474
      %p476 = scmp.eq.s32.totalorder %s94, 0
      %p477 = por %p475, %p476
      %s479 = sadd.s32 %s478, 1
      %p482 = scmp.eq.s32.totalorder %s88, 1
      %p483 = scmp.ne.s32.totalorder %s478, %s480
      %p484 = scmp.eq.s32.totalorder %s88, 0
      %p485 = por %p483, %p484
      %p486 = scmp.ne.s32.totalorder %s478, %s480
      %p487 = scmp.eq.s32.totalorder %s93, 1
      %p488 = por %p486, %p487
      %p489 = scmp.ne.s32.totalorder %s480, %s481
      %p490 = scmp.eq.s32.totalorder %s93, 0
      %p491 = por %p489, %p490
      %p492 = scmp.ne.s32.totalorder %s480, %s481
      %p493 = scmp.eq.s32.totalorder %s94, 1
      %p494 = por %p492, %p493
      %p496 = scmp.ne.s32.totalorder %s481, %s495
      %p497 = scmp.eq.s32.totalorder %s94, 0
      %p498 = por %p496, %p497
      %s500 = sadd.s32 %s499, 1
      %p503 = scmp.eq.s32.totalorder %s88, 1
      %p504 = scmp.ne.s32.totalorder %s499, %s501
      %p505 = scmp.eq.s32.totalorder %s88, 0
      %p506 = por %p504, %p505
      %p507 = scmp.ne.s32.totalorder %s499, %s501
      %p508 = scmp.eq.s32.totalorder %s93, 1
      %p509 = por %p507, %p508
      %p510 = scmp.ne.s32.totalorder %s501, %s502
      %p511 = scmp.eq.s32.totalorder %s93, 0
      %p512 = por %p510, %p511
      %p513 = scmp.ne.s32.totalorder %s501, %s502
      %p514 = scmp.eq.s32.totalorder %s94, 1
      %p515 = por %p513, %p514
      %p517 = scmp.ne.s32.totalorder %s502, %s516
      %p518 = scmp.eq.s32.totalorder %s94, 0
      %p519 = por %p517, %p518
      %s521 = sadd.s32 %s520, 1
      %p524 = scmp.eq.s32.totalorder %s88, 1
      %p525 = scmp.ne.s32.totalorder %s520, %s522
      %p526 = scmp.eq.s32.totalorder %s88, 0
      %p527 = por %p525, %p526
      %p528 = scmp.ne.s32.totalorder %s520, %s522
      %p529 = scmp.eq.s32.totalorder %s93, 1
      %p530 = por %p528, %p529
      %p531 = scmp.ne.s32.totalorder %s522, %s523
      %p532 = scmp.eq.s32.totalorder %s93, 0
      %p533 = por %p531, %p532
      %p534 = scmp.ne.s32.totalorder %s522, %s523
      %p535 = scmp.eq.s32.totalorder %s94, 1
      %p536 = por %p534, %p535
      %p538 = scmp.ne.s32.totalorder %s523, %s537
      %p539 = scmp.eq.s32.totalorder %s94, 0
      %p540 = por %p538, %p539
      %s542 = sadd.s32 %s541, 1
      %p545 = scmp.eq.s32.totalorder %s88, 1
      %p546 = scmp.ne.s32.totalorder %s541, %s543
      %p547 = scmp.eq.s32.totalorder %s88, 0
      %p548 = por %p546, %p547
      %p549 = scmp.ne.s32.totalorder %s541, %s543
      %p550 = scmp.eq.s32.totalorder %s93, 1
      %p551 = por %p549, %p550
      %p552 = scmp.ne.s32.totalorder %s543, %s544
      %p553 = scmp.eq.s32.totalorder %s93, 0
      %p554 = por %p552, %p553
      %p555 = scmp.ne.s32.totalorder %s543, %s544
      %p556 = scmp.eq.s32.totalorder %s94, 1
      %p557 = por %p555, %p556
      %p559 = scmp.ne.s32.totalorder %s544, %s558
      %p560 = scmp.eq.s32.totalorder %s94, 0
      %p561 = por %p559, %p560
      %s563 = sadd.s32 %s562, 1
      %p566 = scmp.eq.s32.totalorder %s88, 1
      %p567 = scmp.ne.s32.totalorder %s562, %s564
      %p568 = scmp.eq.s32.totalorder %s88, 0
      %p569 = por %p567, %p568
      %p570 = scmp.ne.s32.totalorder %s562, %s564
      %p571 = scmp.eq.s32.totalorder %s93, 1
      %p572 = por %p570, %p571
      %p573 = scmp.ne.s32.totalorder %s564, %s565
      %p574 = scmp.eq.s32.totalorder %s93, 0
      %p575 = por %p573, %p574
      %p576 = scmp.ne.s32.totalorder %s564, %s565
      %p577 = scmp.eq.s32.totalorder %s94, 1
      %p578 = por %p576, %p577
      %p580 = scmp.ne.s32.totalorder %s565, %s579
      %p581 = scmp.eq.s32.totalorder %s94, 0
      %p582 = por %p580, %p581
      %s584 = sadd.s32 %s583, 1
      %p587 = scmp.eq.s32.totalorder %s88, 1
      %p588 = scmp.ne.s32.totalorder %s583, %s585
      %p589 = scmp.eq.s32.totalorder %s88, 0
      %p590 = por %p588, %p589
      %p591 = scmp.ne.s32.totalorder %s583, %s585
      %p592 = scmp.eq.s32.totalorder %s93, 1
      %p593 = por %p591, %p592
      %p594 = scmp.ne.s32.totalorder %s585, %s586
      %p595 = scmp.eq.s32.totalorder %s93, 0
      %p596 = por %p594, %p595
      %p597 = scmp.ne.s32.totalorder %s585, %s586
      %p598 = scmp.eq.s32.totalorder %s94, 1
      %p599 = por %p597, %p598
      %p601 = scmp.ne.s32.totalorder %s586, %s600
      %p602 = scmp.eq.s32.totalorder %s94, 0
      %p603 = por %p601, %p602
      %s605 = sadd.s32 %s604, 1
      %p608 = scmp.eq.s32.totalorder %s88, 1
      %p609 = scmp.ne.s32.totalorder %s604, %s606
      %p610 = scmp.eq.s32.totalorder %s88, 0
      %p611 = por %p609, %p610
      %p612 = scmp.ne.s32.totalorder %s604, %s606
      %p613 = scmp.eq.s32.totalorder %s93, 1
      %p614 = por %p612, %p613
      %p615 = scmp.ne.s32.totalorder %s606, %s607
      %p616 = scmp.eq.s32.totalorder %s93, 0
      %p617 = por %p615, %p616
      %p618 = scmp.ne.s32.totalorder %s606, %s607
      %p619 = scmp.eq.s32.totalorder %s94, 1
      %p620 = por %p618, %p619
      %p622 = scmp.ne.s32.totalorder %s607, %s621
      %p623 = scmp.eq.s32.totalorder %s94, 0
      %p624 = por %p622, %p623
      %s626 = sadd.s32 %s625, 1
      %p629 = scmp.eq.s32.totalorder %s88, 1
      %p630 = scmp.ne.s32.totalorder %s625, %s627
      %p631 = scmp.eq.s32.totalorder %s88, 0
      %p632 = por %p630, %p631
      %p633 = scmp.ne.s32.totalorder %s625, %s627
      %p634 = scmp.eq.s32.totalorder %s93, 1
      %p635 = por %p633, %p634
      %p636 = scmp.ne.s32.totalorder %s627, %s628
      %p637 = scmp.eq.s32.totalorder %s93, 0
      %p638 = por %p636, %p637
      %p639 = scmp.ne.s32.totalorder %s627, %s628
      %p640 = scmp.eq.s32.totalorder %s94, 1
      %p641 = por %p639, %p640
      %p643 = scmp.ne.s32.totalorder %s628, %s642
      %p644 = scmp.eq.s32.totalorder %s94, 0
      %p645 = por %p643, %p644
      %s647 = sadd.s32 %s646, 1
      %p650 = scmp.eq.s32.totalorder %s88, 1
      %p651 = scmp.ne.s32.totalorder %s646, %s648
      %p652 = scmp.eq.s32.totalorder %s88, 0
      %p653 = por %p651, %p652
      %p654 = scmp.ne.s32.totalorder %s646, %s648
      %p655 = scmp.eq.s32.totalorder %s93, 1
      %p656 = por %p654, %p655
      %p657 = scmp.ne.s32.totalorder %s648, %s649
      %p658 = scmp.eq.s32.totalorder %s93, 0
      %p659 = por %p657, %p658
      %p660 = scmp.ne.s32.totalorder %s648, %s649
      %p661 = scmp.eq.s32.totalorder %s94, 1
      %p662 = por %p660, %p661
      %p664 = scmp.ne.s32.totalorder %s649, %s663
      %p665 = scmp.eq.s32.totalorder %s94, 0
      %p666 = por %p664, %p665
      %s668 = sadd.s32 %s667, 1
      %p671 = scmp.eq.s32.totalorder %s88, 1
      %p672 = scmp.ne.s32.totalorder %s667, %s669
      %p673 = scmp.eq.s32.totalorder %s88, 0
      %p674 = por %p672, %p673
      %p675 = scmp.ne.s32.totalorder %s667, %s669
      %p676 = scmp.eq.s32.totalorder %s93, 1
      %p677 = por %p675, %p676
      %p678 = scmp.ne.s32.totalorder %s669, %s670
      %p679 = scmp.eq.s32.totalorder %s93, 0
      %p680 = por %p678, %p679
      %p681 = scmp.ne.s32.totalorder %s669, %s670
      %p682 = scmp.eq.s32.totalorder %s94, 1
      %p683 = por %p681, %p682
      %p685 = scmp.ne.s32.totalorder %s670, %s684
      %p686 = scmp.eq.s32.totalorder %s94, 0
      %p687 = por %p685, %p686
      %s689 = sadd.s32 %s688, 1
      %p692 = scmp.eq.s32.totalorder %s88, 1
      %p693 = scmp.ne.s32.totalorder %s688, %s690
      %p694 = scmp.eq.s32.totalorder %s88, 0
      %p695 = por %p693, %p694
      %p696 = scmp.ne.s32.totalorder %s688, %s690
      %p697 = scmp.eq.s32.totalorder %s93, 1
      %p698 = por %p696, %p697
      %p699 = scmp.ne.s32.totalorder %s690, %s691
      %p700 = scmp.eq.s32.totalorder %s93, 0
      %p701 = por %p699, %p700
      %p702 = scmp.ne.s32.totalorder %s690, %s691
      %p703 = scmp.eq.s32.totalorder %s94, 1
      %p704 = por %p702, %p703
      %p706 = scmp.ne.s32.totalorder %s691, %s705
      %p707 = scmp.eq.s32.totalorder %s94, 0
      %p708 = por %p706, %p707
      %s710 = sadd.s32 %s709, 1
      %p713 = scmp.eq.s32.totalorder %s88, 1
      %p714 = scmp.ne.s32.totalorder %s709, %s711
      %p715 = scmp.eq.s32.totalorder %s88, 0
      %p716 = por %p714, %p715
      %p717 = scmp.ne.s32.totalorder %s709, %s711
      %p718 = scmp.eq.s32.totalorder %s93, 1
      %p719 = por %p717, %p718
      %p720 = scmp.ne.s32.totalorder %s711, %s712
      %p721 = scmp.eq.s32.totalorder %s93, 0
      %p722 = por %p720, %p721
      %p723 = scmp.ne.s32.totalorder %s711, %s712
      %p724 = scmp.eq.s32.totalorder %s94, 1
      %p725 = por %p723, %p724
      %p727 = scmp.ne.s32.totalorder %s712, %s726
      %p728 = scmp.eq.s32.totalorder %s94, 0
      %p729 = por %p727, %p728
      %s731 = sadd.s32 %s730, 1
      %p734 = scmp.eq.s32.totalorder %s88, 1
      %p735 = scmp.ne.s32.totalorder %s730, %s732
      %p736 = scmp.eq.s32.totalorder %s88, 0
      %p737 = por %p735, %p736
      %p738 = scmp.ne.s32.totalorder %s730, %s732
      %p739 = scmp.eq.s32.totalorder %s93, 1
      %p740 = por %p738, %p739
      %p741 = scmp.ne.s32.totalorder %s732, %s733
      %p742 = scmp.eq.s32.totalorder %s93, 0
      %p743 = por %p741, %p742
      %p744 = scmp.ne.s32.totalorder %s732, %s733
      %p745 = scmp.eq.s32.totalorder %s94, 1
      %p746 = por %p744, %p745
      %p748 = scmp.ne.s32.totalorder %s733, %s747
      %p749 = scmp.eq.s32.totalorder %s94, 0
      %p750 = por %p748, %p749
      %s752 = sadd.s32 %s751, 1
      %p755 = scmp.eq.s32.totalorder %s88, 1
      %p756 = scmp.ne.s32.totalorder %s751, %s753
      %p757 = scmp.eq.s32.totalorder %s88, 0
      %p758 = por %p756, %p757
      %p759 = scmp.ne.s32.totalorder %s751, %s753
      %p760 = scmp.eq.s32.totalorder %s93, 1
      %p761 = por %p759, %p760
      %p762 = scmp.ne.s32.totalorder %s753, %s754
      %p763 = scmp.eq.s32.totalorder %s93, 0
      %p764 = por %p762, %p763
      %p765 = scmp.ne.s32.totalorder %s753, %s754
      %p766 = scmp.eq.s32.totalorder %s94, 1
      %p767 = por %p765, %p766
      %p769 = scmp.ne.s32.totalorder %s754, %s768
      %p770 = scmp.eq.s32.totalorder %s94, 0
      %p771 = por %p769, %p770
      %s773 = sadd.s32 %s772, 1
      %p776 = scmp.eq.s32.totalorder %s88, 1
      %p777 = scmp.ne.s32.totalorder %s772, %s774
      %p778 = scmp.eq.s32.totalorder %s88, 0
      %p779 = por %p777, %p778
      %p780 = scmp.ne.s32.totalorder %s772, %s774
      %p781 = scmp.eq.s32.totalorder %s93, 1
      %p782 = por %p780, %p781
      %p783 = scmp.ne.s32.totalorder %s774, %s775
      %p784 = scmp.eq.s32.totalorder %s93, 0
      %p785 = por %p783, %p784
      %p786 = scmp.ne.s32.totalorder %s774, %s775
      %p787 = scmp.eq.s32.totalorder %s94, 1
      %p788 = por %p786, %p787
      %p790 = scmp.ne.s32.totalorder %s775, %s789
      %p791 = scmp.eq.s32.totalorder %s94, 0
      %p792 = por %p790, %p791
      %s794 = sadd.s32 %s793, 1
      %p797 = scmp.eq.s32.totalorder %s88, 1
      %p798 = scmp.ne.s32.totalorder %s793, %s795
      %p799 = scmp.eq.s32.totalorder %s88, 0
      %p800 = por %p798, %p799
      %p801 = scmp.ne.s32.totalorder %s793, %s795
      %p802 = scmp.eq.s32.totalorder %s93, 1
      %p803 = por %p801, %p802
      %p804 = scmp.ne.s32.totalorder %s795, %s796
      %p805 = scmp.eq.s32.totalorder %s93, 0
      %p806 = por %p804, %p805
      %p807 = scmp.ne.s32.totalorder %s795, %s796
      %p808 = scmp.eq.s32.totalorder %s94, 1
      %p809 = por %p807, %p808
      %p811 = scmp.ne.s32.totalorder %s796, %s810
      %p812 = scmp.eq.s32.totalorder %s94, 0
      %p813 = por %p811, %p812
      %s815 = sadd.s32 %s814, 1
      %p818 = scmp.eq.s32.totalorder %s88, 1
      %p819 = scmp.ne.s32.totalorder %s814, %s816
      %p820 = scmp.eq.s32.totalorder %s88, 0
      %p821 = por %p819, %p820
      %p822 = scmp.ne.s32.totalorder %s814, %s816
      %p823 = scmp.eq.s32.totalorder %s93, 1
      %p824 = por %p822, %p823
      %p825 = scmp.ne.s32.totalorder %s816, %s817
      %p826 = scmp.eq.s32.totalorder %s93, 0
      %p827 = por %p825, %p826
      %p828 = scmp.ne.s32.totalorder %s816, %s817
      %p829 = scmp.eq.s32.totalorder %s94, 1
      %p830 = por %p828, %p829
      %p832 = scmp.ne.s32.totalorder %s817, %s831
      %p833 = scmp.eq.s32.totalorder %s94, 0
      %p834 = por %p832, %p833
      %s836 = sadd.s32 %s835, 1
      %p839 = scmp.eq.s32.totalorder %s88, 1
      %p840 = scmp.ne.s32.totalorder %s835, %s837
      %p841 = scmp.eq.s32.totalorder %s88, 0
      %p842 = por %p840, %p841
      %p843 = scmp.ne.s32.totalorder %s835, %s837
      %p844 = scmp.eq.s32.totalorder %s93, 1
      %p845 = por %p843, %p844
      %p846 = scmp.ne.s32.totalorder %s837, %s838
      %p847 = scmp.eq.s32.totalorder %s93, 0
      %p848 = por %p846, %p847
      %p849 = scmp.ne.s32.totalorder %s837, %s838
      %p850 = scmp.eq.s32.totalorder %s94, 1
      %p851 = por %p849, %p850
      %p853 = scmp.ne.s32.totalorder %s838, %s852
      %p854 = scmp.eq.s32.totalorder %s94, 0
      %p855 = por %p853, %p854
      %s857 = sadd.s32 %s856, 1
      %p860 = scmp.eq.s32.totalorder %s88, 1
      %p861 = scmp.ne.s32.totalorder %s856, %s858
      %p862 = scmp.eq.s32.totalorder %s88, 0
      %p863 = por %p861, %p862
      %p864 = scmp.ne.s32.totalorder %s856, %s858
      %p865 = scmp.eq.s32.totalorder %s93, 1
      %p866 = por %p864, %p865
      %p867 = scmp.ne.s32.totalorder %s858, %s859
      %p868 = scmp.eq.s32.totalorder %s93, 0
      %p869 = por %p867, %p868
      %p870 = scmp.ne.s32.totalorder %s858, %s859
      %p871 = scmp.eq.s32.totalorder %s94, 1
      %p872 = por %p870, %p871
      %p874 = scmp.ne.s32.totalorder %s859, %s873
      %p875 = scmp.eq.s32.totalorder %s94, 0
      %p876 = por %p874, %p875
      %s878 = sadd.s32 %s877, 1
      %p881 = scmp.eq.s32.totalorder %s88, 1
      %p882 = scmp.ne.s32.totalorder %s877, %s879
      %p883 = scmp.eq.s32.totalorder %s88, 0
      %p884 = por %p882, %p883
      %p885 = scmp.ne.s32.totalorder %s877, %s879
      %p886 = scmp.eq.s32.totalorder %s93, 1
      %p887 = por %p885, %p886
      %p888 = scmp.ne.s32.totalorder %s879, %s880
      %p889 = scmp.eq.s32.totalorder %s93, 0
      %p890 = por %p888, %p889
      %p891 = scmp.ne.s32.totalorder %s879, %s880
      %p892 = scmp.eq.s32.totalorder %s94, 1
      %p893 = por %p891, %p892
      %p895 = scmp.ne.s32.totalorder %s880, %s894
      %p896 = scmp.eq.s32.totalorder %s94, 0
      %p897 = por %p895, %p896
      %s899 = sadd.s32 %s898, 1
      %p902 = scmp.eq.s32.totalorder %s88, 1
      %p903 = scmp.ne.s32.totalorder %s898, %s900
      %p904 = scmp.eq.s32.totalorder %s88, 0
      %p905 = por %p903, %p904
      %p906 = scmp.ne.s32.totalorder %s898, %s900
      %p907 = scmp.eq.s32.totalorder %s93, 1
      %p908 = por %p906, %p907
      %p909 = scmp.ne.s32.totalorder %s900, %s901
      %p910 = scmp.eq.s32.totalorder %s93, 0
      %p911 = por %p909, %p910
      %p912 = scmp.ne.s32.totalorder %s900, %s901
      %p913 = scmp.eq.s32.totalorder %s94, 1
      %p914 = por %p912, %p913
      %p916 = scmp.ne.s32.totalorder %s901, %s915
      %p917 = scmp.eq.s32.totalorder %s94, 0
      %p918 = por %p916, %p917
      %s920 = sadd.s32 %s919, 1
      %p923 = scmp.eq.s32.totalorder %s88, 1
      %p924 = scmp.ne.s32.totalorder %s919, %s921
      %p925 = scmp.eq.s32.totalorder %s88, 0
      %p926 = por %p924, %p925
      %p927 = scmp.ne.s32.totalorder %s919, %s921
      %p928 = scmp.eq.s32.totalorder %s93, 1
      %p929 = por %p927, %p928
      %p930 = scmp.ne.s32.totalorder %s921, %s922
      %p931 = scmp.eq.s32.totalorder %s93, 0
      %p932 = por %p930, %p931
      %p933 = scmp.ne.s32.totalorder %s921, %s922
      %p934 = scmp.eq.s32.totalorder %s94, 1
      %p935 = por %p933, %p934
      %p937 = scmp.ne.s32.totalorder %s922, %s936
      %p938 = scmp.eq.s32.totalorder %s94, 0
      %p939 = por %p937, %p938
      %s940 = ssub.s32 %s88, %s95
      %p941 = scmp.eq.s32.totalorder %s940, 0
      %s943 = sadd.s32 %s942, 1
      %s944 = scalar_select %p941, %s942, %s943
      %p947 = pneg %p941
      %p948 = scmp.eq.s32.totalorder %s88, 1
      %p949 = por %p947, %p948
      %p950 = scmp.ne.s32.totalorder %s942, %s945
      %p951 = scmp.eq.s32.totalorder %s88, 0
      %p952 = por %p950, %p951
      %p953 = scmp.ne.s32.totalorder %s942, %s945
      %p954 = scmp.eq.s32.totalorder %s93, 1
      %p955 = por %p953, %p954
      %p956 = scmp.ne.s32.totalorder %s945, %s946
      %p957 = scmp.eq.s32.totalorder %s93, 0
      %p958 = por %p956, %p957
      %p959 = scmp.ne.s32.totalorder %s945, %s946
      %p960 = scmp.eq.s32.totalorder %s94, 1
      %p961 = por %p959, %p960
      %p963 = scmp.ne.s32.totalorder %s946, %s962
      %p964 = scmp.eq.s32.totalorder %s94, 0
      %p965 = por %p963, %p964
      %p966 = scmp.le.s32.totalorder 1, %s88
      %p967 = scmp.lt.s32.totalorder %s88, 3
      %p968 = pnand %p966, %p967
      %p969 = pneg %p968
      // Predicated region
      $region9: #{tpu_custom_call.1} parent=5 // pred_check
        _
      $region10: #{tpu_custom_call.1} parent=5 // pred_check_branch
        %971 = sbr.rel (%p968) target = $region12
      $region11: #{tpu_custom_call.1} parent=5 // pred_region
        %s972 = ssub.s32 %s88, 1
        // Predicated region
        $region13: #{tpu_custom_call.1} parent=11 // pred_check
          %p973 = pneg %p239
        $region14: #{tpu_custom_call.1} parent=11 // pred_check_branch
          %975 = sbr.rel (%p973) target = $region16
        $region15: #{tpu_custom_call.1} parent=11 // pred_region
          _
        $region16: #{tpu_custom_call.1} parent=11 // pred_fallthru
          _
        // Predicated region
        $region17: #{tpu_custom_call.1} parent=11 // pred_check
          %p976 = pneg %p260
        $region18: #{tpu_custom_call.1} parent=11 // pred_check_branch
          %978 = sbr.rel (%p976) target = $region20
        $region19: #{tpu_custom_call.1} parent=11 // pred_region
          _
        $region20: #{tpu_custom_call.1} parent=11 // pred_fallthru
          _
        // Predicated region
        $region21: #{tpu_custom_call.1} parent=11 // pred_check
          %p979 = pneg %p281
        $region22: #{tpu_custom_call.1} parent=11 // pred_check_branch
          %981 = sbr.rel (%p979) target = $region24
        $region23: #{tpu_custom_call.1} parent=11 // pred_region
          _
        $region24: #{tpu_custom_call.1} parent=11 // pred_fallthru
          _
        // Predicated region
        $region25: #{tpu_custom_call.1} parent=11 // pred_check
          %p982 = pneg %p302
        $region26: #{tpu_custom_call.1} parent=11 // pred_check_branch
          %984 = sbr.rel (%p982) target = $region28
        $region27: #{tpu_custom_call.1} parent=11 // pred_region
          _
        $region28: #{tpu_custom_call.1} parent=11 // pred_fallthru
          _
        // Predicated region
        $region29: #{tpu_custom_call.1} parent=11 // pred_check
          %p985 = pneg %p323
        $region30: #{tpu_custom_call.1} parent=11 // pred_check_branch
          %987 = sbr.rel (%p985) target = $region32
        $region31: #{tpu_custom_call.1} parent=11 // pred_region
          _
        $region32: #{tpu_custom_call.1} parent=11 // pred_fallthru
          _
        // Predicated region
        $region33: #{tpu_custom_call.1} parent=11 // pred_check
          %p988 = pneg %p344
        $region34: #{tpu_custom_call.1} parent=11 // pred_check_branch
          %990 = sbr.rel (%p988) target = $region36
        $region35: #{tpu_custom_call.1} parent=11 // pred_region
          _
        $region36: #{tpu_custom_call.1} parent=11 // pred_fallthru
          _
        // Predicated region
        $region37: #{tpu_custom_call.1} parent=11 // pred_check
          %p991 = pneg %p365
        $region38: #{tpu_custom_call.1} parent=11 // pred_check_branch
          %993 = sbr.rel (%p991) target = $region40
        $region39: #{tpu_custom_call.1} parent=11 // pred_region
          _
        $region40: #{tpu_custom_call.1} parent=11 // pred_fallthru
          _
        // Predicated region
        $region41: #{tpu_custom_call.1} parent=11 // pred_check
          %p994 = pneg %p386
        $region42: #{tpu_custom_call.1} parent=11 // pred_check_branch
          %996 = sbr.rel (%p994) target = $region44
        $region43: #{tpu_custom_call.1} parent=11 // pred_region
          _
        $region44: #{tpu_custom_call.1} parent=11 // pred_fallthru
          _
        // Predicated region
        $region45: #{tpu_custom_call.1} parent=11 // pred_check
          %p997 = pneg %p407
        $region46: #{tpu_custom_call.1} parent=11 // pred_check_branch
          %999 = sbr.rel (%p997) target = $region48
        $region47: #{tpu_custom_call.1} parent=11 // pred_region
          _
        $region48: #{tpu_custom_call.1} parent=11 // pred_fallthru
          _
        // Predicated region
        $region49: #{tpu_custom_call.1} parent=11 // pred_check
          %p1000 = pneg %p428
        $region50: #{tpu_custom_call.1} parent=11 // pred_check_branch
          %1002 = sbr.rel (%p1000) target = $region52
        $region51: #{tpu_custom_call.1} parent=11 // pred_region
          _
        $region52: #{tpu_custom_call.1} parent=11 // pred_fallthru
          _
        // Predicated region
        $region53: #{tpu_custom_call.1} parent=11 // pred_check
          %p1003 = pneg %p449
        $region54: #{tpu_custom_call.1} parent=11 // pred_check_branch
          %1005 = sbr.rel (%p1003) target = $region56
        $region55: #{tpu_custom_call.1} parent=11 // pred_region
          _
        $region56: #{tpu_custom_call.1} parent=11 // pred_fallthru
          _
        // Predicated region
        $region57: #{tpu_custom_call.1} parent=11 // pred_check
          %p1006 = pneg %p470
        $region58: #{tpu_custom_call.1} parent=11 // pred_check_branch
          %1008 = sbr.rel (%p1006) target = $region60
        $region59: #{tpu_custom_call.1} parent=11 // pred_region
          _
        $region60: #{tpu_custom_call.1} parent=11 // pred_fallthru
          _
        // Predicated region
        $region61: #{tpu_custom_call.1} parent=11 // pred_check
          %p1009 = pneg %p491
        $region62: #{tpu_custom_call.1} parent=11 // pred_check_branch
          %1011 = sbr.rel (%p1009) target = $region64
        $region63: #{tpu_custom_call.1} parent=11 // pred_region
          _
        $region64: #{tpu_custom_call.1} parent=11 // pred_fallthru
          _
        // Predicated region
        $region65: #{tpu_custom_call.1} parent=11 // pred_check
          %p1012 = pneg %p512
        $region66: #{tpu_custom_call.1} parent=11 // pred_check_branch
          %1014 = sbr.rel (%p1012) target = $region68
        $region67: #{tpu_custom_call.1} parent=11 // pred_region
          _
        $region68: #{tpu_custom_call.1} parent=11 // pred_fallthru
          _
        // Predicated region
        $region69: #{tpu_custom_call.1} parent=11 // pred_check
          %p1015 = pneg %p533
        $region70: #{tpu_custom_call.1} parent=11 // pred_check_branch
          %1017 = sbr.rel (%p1015) target = $region72
        $region71: #{tpu_custom_call.1} parent=11 // pred_region
          _
        $region72: #{tpu_custom_call.1} parent=11 // pred_fallthru
          _
        // Predicated region
        $region73: #{tpu_custom_call.1} parent=11 // pred_check
          %p1018 = pneg %p554
        $region74: #{tpu_custom_call.1} parent=11 // pred_check_branch
          %1020 = sbr.rel (%p1018) target = $region76
        $region75: #{tpu_custom_call.1} parent=11 // pred_region
          _
        $region76: #{tpu_custom_call.1} parent=11 // pred_fallthru
          _
        // Predicated region
        $region77: #{tpu_custom_call.1} parent=11 // pred_check
          %p1021 = pneg %p575
        $region78: #{tpu_custom_call.1} parent=11 // pred_check_branch
          %1023 = sbr.rel (%p1021) target = $region80
        $region79: #{tpu_custom_call.1} parent=11 // pred_region
          _
        $region80: #{tpu_custom_call.1} parent=11 // pred_fallthru
          _
        // Predicated region
        $region81: #{tpu_custom_call.1} parent=11 // pred_check
          %p1024 = pneg %p596
        $region82: #{tpu_custom_call.1} parent=11 // pred_check_branch
          %1026 = sbr.rel (%p1024) target = $region84
        $region83: #{tpu_custom_call.1} parent=11 // pred_region
          _
        $region84: #{tpu_custom_call.1} parent=11 // pred_fallthru
          _
        // Predicated region
        $region85: #{tpu_custom_call.1} parent=11 // pred_check
          %p1027 = pneg %p617
        $region86: #{tpu_custom_call.1} parent=11 // pred_check_branch
          %1029 = sbr.rel (%p1027) target = $region88
        $region87: #{tpu_custom_call.1} parent=11 // pred_region
          _
        $region88: #{tpu_custom_call.1} parent=11 // pred_fallthru
          _
        // Predicated region
        $region89: #{tpu_custom_call.1} parent=11 // pred_check
          %p1030 = pneg %p638
        $region90: #{tpu_custom_call.1} parent=11 // pred_check_branch
          %1032 = sbr.rel (%p1030) target = $region92
        $region91: #{tpu_custom_call.1} parent=11 // pred_region
          _
        $region92: #{tpu_custom_call.1} parent=11 // pred_fallthru
          _
        // Predicated region
        $region93: #{tpu_custom_call.1} parent=11 // pred_check
          %p1033 = pneg %p659
        $region94: #{tpu_custom_call.1} parent=11 // pred_check_branch
          %1035 = sbr.rel (%p1033) target = $region96
        $region95: #{tpu_custom_call.1} parent=11 // pred_region
          _
        $region96: #{tpu_custom_call.1} parent=11 // pred_fallthru
          _
        // Predicated region
        $region97: #{tpu_custom_call.1} parent=11 // pred_check
          %p1036 = pneg %p680
        $region98: #{tpu_custom_call.1} parent=11 // pred_check_branch
          %1038 = sbr.rel (%p1036) target = $region100
        $region99: #{tpu_custom_call.1} parent=11 // pred_region
          _
        $region100: #{tpu_custom_call.1} parent=11 // pred_fallthru
          _
        // Predicated region
        $region101: #{tpu_custom_call.1} parent=11 // pred_check
          %p1039 = pneg %p701
        $region102: #{tpu_custom_call.1} parent=11 // pred_check_branch
          %1041 = sbr.rel (%p1039) target = $region104
        $region103: #{tpu_custom_call.1} parent=11 // pred_region
          _
        $region104: #{tpu_custom_call.1} parent=11 // pred_fallthru
          _
        // Predicated region
        $region105: #{tpu_custom_call.1} parent=11 // pred_check
          %p1042 = pneg %p722
        $region106: #{tpu_custom_call.1} parent=11 // pred_check_branch
          %1044 = sbr.rel (%p1042) target = $region108
        $region107: #{tpu_custom_call.1} parent=11 // pred_region
          _
        $region108: #{tpu_custom_call.1} parent=11 // pred_fallthru
          _
        // Predicated region
        $region109: #{tpu_custom_call.1} parent=11 // pred_check
          %p1045 = pneg %p743
        $region110: #{tpu_custom_call.1} parent=11 // pred_check_branch
          %1047 = sbr.rel (%p1045) target = $region112
        $region111: #{tpu_custom_call.1} parent=11 // pred_region
          _
        $region112: #{tpu_custom_call.1} parent=11 // pred_fallthru
          _
        // Predicated region
        $region113: #{tpu_custom_call.1} parent=11 // pred_check
          %p1048 = pneg %p764
        $region114: #{tpu_custom_call.1} parent=11 // pred_check_branch
          %1050 = sbr.rel (%p1048) target = $region116
        $region115: #{tpu_custom_call.1} parent=11 // pred_region
          _
        $region116: #{tpu_custom_call.1} parent=11 // pred_fallthru
          _
        // Predicated region
        $region117: #{tpu_custom_call.1} parent=11 // pred_check
          %p1051 = pneg %p785
        $region118: #{tpu_custom_call.1} parent=11 // pred_check_branch
          %1053 = sbr.rel (%p1051) target = $region120
        $region119: #{tpu_custom_call.1} parent=11 // pred_region
          _
        $region120: #{tpu_custom_call.1} parent=11 // pred_fallthru
          _
        // Predicated region
        $region121: #{tpu_custom_call.1} parent=11 // pred_check
          %p1054 = pneg %p806
        $region122: #{tpu_custom_call.1} parent=11 // pred_check_branch
          %1056 = sbr.rel (%p1054) target = $region124
        $region123: #{tpu_custom_call.1} parent=11 // pred_region
          _
        $region124: #{tpu_custom_call.1} parent=11 // pred_fallthru
          _
        // Predicated region
        $region125: #{tpu_custom_call.1} parent=11 // pred_check
          %p1057 = pneg %p827
        $region126: #{tpu_custom_call.1} parent=11 // pred_check_branch
          %1059 = sbr.rel (%p1057) target = $region128
        $region127: #{tpu_custom_call.1} parent=11 // pred_region
          _
        $region128: #{tpu_custom_call.1} parent=11 // pred_fallthru
          _
        // Predicated region
        $region129: #{tpu_custom_call.1} parent=11 // pred_check
          %p1060 = pneg %p848
        $region130: #{tpu_custom_call.1} parent=11 // pred_check_branch
          %1062 = sbr.rel (%p1060) target = $region132
        $region131: #{tpu_custom_call.1} parent=11 // pred_region
          _
        $region132: #{tpu_custom_call.1} parent=11 // pred_fallthru
          _
        // Predicated region
        $region133: #{tpu_custom_call.1} parent=11 // pred_check
          %p1063 = pneg %p869
        $region134: #{tpu_custom_call.1} parent=11 // pred_check_branch
          %1065 = sbr.rel (%p1063) target = $region136
        $region135: #{tpu_custom_call.1} parent=11 // pred_region
          _
        $region136: #{tpu_custom_call.1} parent=11 // pred_fallthru
          _
        // Predicated region
        $region137: #{tpu_custom_call.1} parent=11 // pred_check
          %p1066 = pneg %p890
        $region138: #{tpu_custom_call.1} parent=11 // pred_check_branch
          %1068 = sbr.rel (%p1066) target = $region140
        $region139: #{tpu_custom_call.1} parent=11 // pred_region
          _
        $region140: #{tpu_custom_call.1} parent=11 // pred_fallthru
          _
        // Predicated region
        $region141: #{tpu_custom_call.1} parent=11 // pred_check
          %p1069 = pneg %p911
        $region142: #{tpu_custom_call.1} parent=11 // pred_check_branch
          %1071 = sbr.rel (%p1069) target = $region144
        $region143: #{tpu_custom_call.1} parent=11 // pred_region
          _
        $region144: #{tpu_custom_call.1} parent=11 // pred_fallthru
          _
        // Predicated region
        $region145: #{tpu_custom_call.1} parent=11 // pred_check
          %p1072 = pneg %p932
        $region146: #{tpu_custom_call.1} parent=11 // pred_check_branch
          %1074 = sbr.rel (%p1072) target = $region148
        $region147: #{tpu_custom_call.1} parent=11 // pred_region
          _
        $region148: #{tpu_custom_call.1} parent=11 // pred_fallthru
          _
      $region12: #{tpu_custom_call.1} parent=5 // pred_fallthru
        _
      %p1075 = scmp.lt.s32.totalorder %s88, 2
      // Predicated region
      $region149: #{tpu_custom_call.1} parent=5 // pred_check
        %p1076 = pneg %p1075
      $region150: #{tpu_custom_call.1} parent=5 // pred_check_branch
        %1078 = sbr.rel (%p1076) target = $region152
      $region151: #{tpu_custom_call.1} parent=5 // pred_region
        // Predicated region
        $region153: #{tpu_custom_call.1} parent=151 // pred_check
          %p1079 = pneg %p108
        $region154: #{tpu_custom_call.1} parent=151 // pred_check_branch
          %1081 = sbr.rel (%p1079) target = $region156
        $region155: #{tpu_custom_call.1} parent=151 // pred_region
          %p1082 = scmp.lt.s32.totalorder %s88, 1
          %s1083 = scalar_select %p1082, %s88, 1
          %s1084 = smul.addr %s1083, 8
          %s1085 = scalar_lea.vmem %s1, %s1084
        $region156: #{tpu_custom_call.1} parent=151 // pred_fallthru
          _
        // Predicated region
        $region157: #{tpu_custom_call.1} parent=151 // pred_check
          %p1086 = pneg %p134
        $region158: #{tpu_custom_call.1} parent=151 // pred_check_branch
          %1088 = sbr.rel (%p1086) target = $region160
        $region159: #{tpu_custom_call.1} parent=151 // pred_region
          %p1089 = scmp.lt.s32.totalorder %s88, 1
          %s1090 = scalar_select %p1089, %s88, 1
          %s1091 = smul.addr %s1090, 8
          %s1092 = scalar_lea.vmem %s3, %s1091
        $region160: #{tpu_custom_call.1} parent=151 // pred_fallthru
          _
        // Predicated region
        $region161: #{tpu_custom_call.1} parent=151 // pred_check
          %p1093 = pneg %p160
        $region162: #{tpu_custom_call.1} parent=151 // pred_check_branch
          %1095 = sbr.rel (%p1093) target = $region164
        $region163: #{tpu_custom_call.1} parent=151 // pred_region
          %p1096 = scmp.lt.s32.totalorder %s88, 1
          %s1097 = scalar_select %p1096, %s88, 1
          %s1098 = smul.addr %s1097, 8
          %s1099 = scalar_lea.vmem %s5, %s1098
        $region164: #{tpu_custom_call.1} parent=151 // pred_fallthru
          _
        // Predicated region
        $region165: #{tpu_custom_call.1} parent=151 // pred_check
          %p1100 = pneg %p186
        $region166: #{tpu_custom_call.1} parent=151 // pred_check_branch
          %1102 = sbr.rel (%p1100) target = $region168
        $region167: #{tpu_custom_call.1} parent=151 // pred_region
          %p1103 = scmp.lt.s32.totalorder %s88, 1
          %s1104 = scalar_select %p1103, %s88, 1
          %s1105 = smul.addr %s1104, 10
          %s1106 = smul.addr %s1105, 8
          %s1107 = scalar_lea.vmem %s7, %s1106
        $region168: #{tpu_custom_call.1} parent=151 // pred_fallthru
          _
        // Predicated region
        $region169: #{tpu_custom_call.1} parent=151 // pred_check
          %p1108 = pneg %p212
        $region170: #{tpu_custom_call.1} parent=151 // pred_check_branch
          %1110 = sbr.rel (%p1108) target = $region172
        $region171: #{tpu_custom_call.1} parent=151 // pred_region
          %p1111 = scmp.lt.s32.totalorder %s88, 1
          %s1112 = scalar_select %p1111, %s88, 1
          %s1113 = smul.addr %s1112, 10
          %s1114 = smul.addr %s1113, 8
          %s1115 = scalar_lea.vmem %s9, %s1114
        $region172: #{tpu_custom_call.1} parent=151 // pred_fallthru
          _
      $region152: #{tpu_custom_call.1} parent=5 // pred_fallthru
        _
      %p1116 = scmp.le.s32.totalorder 1, %s88
      %p1117 = scmp.lt.s32.totalorder %s88, 3
      %p1118 = pnand %p1116, %p1117
      %p1119 = pneg %p1118
      // Predicated region
      $region173: #{tpu_custom_call.1} parent=5 // pred_check
        _
      $region174: #{tpu_custom_call.1} parent=5 // pred_check_branch
        %1121 = sbr.rel (%p1118) target = $region176
      $region175: #{tpu_custom_call.1} parent=5 // pred_region
        %s1122 = ssub.s32 %s88, 1
        %p1123 = scmp.lt.s32.totalorder %s93, 1
        %s1124 = scalar_select %p1123, %s93, 1
        %s1125 = smul.addr %s1124, 8
        %s1126 = scalar_lea.vmem %s1, %s1125
        %p1127 = pneg %p114
        %p1128 = pneg %p111
        %p1129 = scmp.lt.s32.totalorder %s93, 1
        %s1130 = scalar_select %p1129, %s93, 1
        %s1131 = smul.addr %s1130, 8
        %s1132 = scalar_lea.vmem %s3, %s1131
        %p1133 = pneg %p140
        %p1134 = pneg %p137
        %p1135 = scmp.lt.s32.totalorder %s93, 1
        %s1136 = scalar_select %p1135, %s93, 1
        %s1137 = smul.addr %s1136, 8
        %s1138 = scalar_lea.vmem %s5, %s1137
        %p1139 = pneg %p166
        %p1140 = pneg %p163
        %p1141 = scmp.lt.s32.totalorder %s93, 1
        %s1142 = scalar_select %p1141, %s93, 1
        %s1143 = smul.addr %s1142, 10
        %s1144 = smul.addr %s1143, 8
        %s1145 = scalar_lea.vmem %s7, %s1144
        %p1146 = pneg %p192
        %p1147 = pneg %p189
        %p1148 = scmp.lt.s32.totalorder %s93, 1
        %s1149 = scalar_select %p1148, %s93, 1
        %s1150 = smul.addr %s1149, 10
        %s1151 = smul.addr %s1150, 8
        %s1152 = scalar_lea.vmem %s9, %s1151
        %p1153 = pneg %p218
        %p1154 = pneg %p215
        %p1155 = pneg %p239
        %p1156 = pneg %p236
        %p1157 = pneg %p260
        %p1158 = pneg %p257
        %p1159 = pneg %p281
        %p1160 = pneg %p278
        %p1161 = pneg %p302
        %p1162 = pneg %p299
        %p1163 = pneg %p323
        %p1164 = pneg %p320
        %p1165 = pneg %p344
        %p1166 = pneg %p341
        %p1167 = pneg %p365
        %p1168 = pneg %p362
        %p1169 = pneg %p386
        %p1170 = pneg %p383
        %p1171 = pneg %p407
        %p1172 = pneg %p404
        %p1173 = pneg %p428
        %p1174 = pneg %p425
        %p1175 = pneg %p449
        %p1176 = pneg %p446
        %p1177 = pneg %p470
        %p1178 = pneg %p467
        %p1179 = pneg %p491
        %p1180 = pneg %p488
        %p1181 = pneg %p512
        %p1182 = pneg %p509
        %p1183 = pneg %p533
        %p1184 = pneg %p530
        %p1185 = pneg %p554
        %p1186 = pneg %p551
        %p1187 = pneg %p575
        %p1188 = pneg %p572
        %p1189 = pneg %p596
        %p1190 = pneg %p593
        %p1191 = pneg %p617
        %p1192 = pneg %p614
        %p1193 = pneg %p638
        %p1194 = pneg %p635
        %p1195 = pneg %p659
        %p1196 = pneg %p656
        %p1197 = pneg %p680
        %p1198 = pneg %p677
        %p1199 = pneg %p701
        %p1200 = pneg %p698
        %p1201 = pneg %p722
        %p1202 = pneg %p719
        %p1203 = pneg %p743
        %p1204 = pneg %p740
        %p1205 = pneg %p764
        %p1206 = pneg %p761
        %p1207 = pneg %p785
        %p1208 = pneg %p782
        %p1209 = pneg %p806
        %p1210 = pneg %p803
        %p1211 = pneg %p827
        %p1212 = pneg %p824
        %p1213 = pneg %p848
        %p1214 = pneg %p845
        %p1215 = pneg %p869
        %p1216 = pneg %p866
        %p1217 = pneg %p890
        %p1218 = pneg %p887
        %p1219 = pneg %p911
        %p1220 = pneg %p908
        %p1221 = pneg %p932
        %p1222 = pneg %p929
        %p1223 = pneg %p958
        %p1224 = pneg %p955
        %s1225 = sand.u32 %s945, 1
        %s1226 = scalar_lea.sflag [#allocation3], %s1225
        %s1227 = sand.u32 %s945, 1
        %s1228 = smul.addr %s1227, 8
        %s1229 = scalar_lea.vmem [#allocation2], %s1228
        %p1230 = scmp.lt.s32.totalorder %s93, 1
        %s1231 = scalar_select %p1230, %s93, 1
        %s1232 = smul.addr %s1231, 8
        %s1233 = scalar_lea.vmem %s1, %s1232
        %p1234 = scmp.lt.s32.totalorder %s93, 1
        %s1235 = scalar_select %p1234, %s93, 1
        %s1236 = smul.addr %s1235, 8
        %s1237 = scalar_lea.vmem %s3, %s1236
        %p1238 = scmp.lt.s32.totalorder %s93, 1
        %s1239 = scalar_select %p1238, %s93, 1
        %s1240 = smul.addr %s1239, 8
        %s1241 = scalar_lea.vmem %s5, %s1240
        %p1242 = scmp.lt.s32.totalorder %s93, 1
        %s1243 = scalar_select %p1242, %s93, 1
        %s1244 = smul.addr %s1243, 10
        %s1245 = smul.addr %s1244, 8
        %s1246 = scalar_lea.vmem %s7, %s1245
        %p1247 = scmp.lt.s32.totalorder %s93, 1
        %s1248 = scalar_select %p1247, %s93, 1
        %s1249 = smul.addr %s1248, 10
        %s1250 = smul.addr %s1249, 8
        %s1251 = scalar_lea.vmem %s9, %s1250
        %v1252 = vld [vmem:[%s1233] sm:$0xff]
        %v1253 = vld [vmem:[%s1237] sm:$0xff]
        %v1254 = vadd.f32 %v1252, %v1253
        %v1255 = vld [vmem:[%s11] sm:$0xff]
        %v1256 = vld [vmem:[%s11 + $0x8] sm:$0xff]
        %v1257 = vld [vmem:[%s11 + $0x10] sm:$0xff]
        %v1258 = vld [vmem:[%s11 + $0x18] sm:$0xff]
        %v1259 = vld [vmem:[%s13] sm:$0x1]
        %v1261 = vperm.slane %v1259, 0
        %vm1263 = vcmask 261120
        %v1265 = vsel %vm1263, %v1254, 0
        %1267 = vmatpush.msra.mxu0 0.0
        %1268 = vmatpush.msra.mxu0 0.0
        %1269 = vmatpush.msra.mxu0 0.0
        %1270 = vmatpush.msra.mxu0 0.0
        %1271 = vmatpush.msra.mxu0 0.0
        %1272 = vmatpush.msra.mxu0 0.0
        %1273 = vmatpush.msra.mxu0 0.0
        %1274 = vmatpush.msra.mxu0 0.0
        %1275 = vmatpush.msra.mxu0 0.0
        %1276 = vmatpush.msra.mxu0 0.0
        %1277 = vmatpush.msra.mxu0 0.0
        %1278 = vmatpush.msra.mxu0 0.0
        %1279 = vmatpush.msra.mxu0 %v1258
        %1280 = vmatpush.msra.mxu0 %v1257
        %1281 = vmatpush.msra.mxu0 %v1256
        %1282 = vmatpush.msra.mxu0 %v1255
        %1283 = vmatmul.f32.gmra.mxu0 %v1265
        %v1284 = vpop.f32.mrf.mxu0
        %v1285 = vadd.f32 %v1261, %v1284
        %1286 = vdwg.mxu0
        %v1287 = vmul.f32 %v1285, 0.35355338
        %v1288 = vld [vmem:[%s15] sm:$0xff]
        %v1289 = vld [vmem:[%s15 + $0x8] sm:$0xff]
        %v1290 = vld [vmem:[%s15 + $0x10] sm:$0xff]
        %v1291 = vld [vmem:[%s15 + $0x18] sm:$0xff]
        %v1292 = vld [vmem:[%s17] sm:$0x1]
        %v1294 = vperm.slane %v1292, 0
        %v1297 = vsel %vm1263, %v1252, 0
        %1299 = vmatpush.msra.mxu0 0.0
        %1300 = vmatpush.msra.mxu0 0.0
        %1301 = vmatpush.msra.mxu0 0.0
        %1302 = vmatpush.msra.mxu0 0.0
        %1303 = vmatpush.msra.mxu0 0.0
        %1304 = vmatpush.msra.mxu0 0.0
        %1305 = vmatpush.msra.mxu0 0.0
        %1306 = vmatpush.msra.mxu0 0.0
        %1307 = vmatpush.msra.mxu0 0.0
        %1308 = vmatpush.msra.mxu0 0.0
        %1309 = vmatpush.msra.mxu0 0.0
        %1310 = vmatpush.msra.mxu0 0.0
        %1311 = vmatpush.msra.mxu0 %v1291
        %1312 = vmatpush.msra.mxu0 %v1290
        %1313 = vmatpush.msra.mxu0 %v1289
        %1314 = vmatpush.msra.mxu0 %v1288
        %1315 = vmatmul.f32.gmra.mxu0 %v1297
        %v1316 = vpop.f32.mrf.mxu0
        %v1317 = vadd.f32 %v1294, %v1316
        %1318 = vdwg.mxu0
        %v1319 = vld [vmem:[%s55] sm:$0xff]
        %v1320 = vld [vmem:[%s55 + $0x8] sm:$0xff]
        %v1321 = vld [vmem:[%s55 + $0x10] sm:$0xff]
        %v1322 = vld [vmem:[%s55 + $0x18] sm:$0xff]
        %1327 = vrot.lane.b32.xlu0 %v1319, 32
        %v1328 = vpop.permute.xlu0 %1327
        %1329 = vrot.lane.b32.xlu0 %v1320, 32
        %v1330 = vpop.permute.xlu0 %1329
        %1331 = vrot.lane.b32.xlu0 %v1321, 32
        %v1332 = vpop.permute.xlu0 %1331
        %1333 = vrot.lane.b32.xlu0 %v1322, 32
        %v1334 = vpop.permute.xlu0 %1333
        %v1339 = vmul.f32 %v1285, %v1328
        %v1340 = vmul.f32 %v1285, %v1330
        %v1341 = vmul.f32 %v1285, %v1332
        %v1342 = vmul.f32 %v1285, %v1334
        %v1343 = vmul.f32 %v1317, %v1319
        %v1344 = vmul.f32 %v1317, %v1320
        %v1345 = vmul.f32 %v1317, %v1321
        %v1346 = vmul.f32 %v1317, %v1322
        %1351 = vrot.lane.b32.xlu0 %v1339, 96
        %v1352 = vpop.permute.xlu0 %1351
        %1353 = vrot.lane.b32.xlu0 %v1340, 96
        %v1354 = vpop.permute.xlu0 %1353
        %1355 = vrot.lane.b32.xlu0 %v1341, 96
        %v1356 = vpop.permute.xlu0 %1355
        %1357 = vrot.lane.b32.xlu0 %v1342, 96
        %v1358 = vpop.permute.xlu0 %1357
        %v1360 = vsel %vm1263, %v1287, 0
        %v1362 = vsel %vm1263, %v1352, 0
        %v1364 = vsel %vm1263, %v1354, 0
        %v1366 = vsel %vm1263, %v1356, 0
        %v1368 = vsel %vm1263, %v1358, 0
        %1370 = vmatpush.xpose.msra.mxu0 0.0
        %1371 = vmatpush.xpose.msra.mxu0 0.0
        %1372 = vmatpush.xpose.msra.mxu0 0.0
        %1373 = vmatpush.xpose.msra.mxu0 0.0
        %1374 = vmatpush.xpose.msra.mxu0 0.0
        %1375 = vmatpush.xpose.msra.mxu0 0.0
        %1376 = vmatpush.xpose.msra.mxu0 0.0
        %1377 = vmatpush.xpose.msra.mxu0 0.0
        %1378 = vmatpush.xpose.msra.mxu0 0.0
        %1379 = vmatpush.xpose.msra.mxu0 0.0
        %1380 = vmatpush.xpose.msra.mxu0 0.0
        %1381 = vmatpush.xpose.msra.mxu0 0.0
        %1382 = vmatpush.xpose.msra.mxu0 %v1368
        %1383 = vmatpush.xpose.msra.mxu0 %v1366
        %1384 = vmatpush.xpose.msra.mxu0 %v1364
        %1385 = vmatpush.xpose.msra.mxu0 %v1362
        %1386 = vmatmul.f32.gmra.mxu0 %v1360
        %v1387 = vpop.f32.mrf.mxu0
        %v1388 = vadd.f32 0.0, %v1387
        %1389 = vdwg.mxu0
        %v1390 = vld [vmem:[%s57] sm:$0xff]
        %v1391 = vld [vmem:[%s57 + $0x8] sm:$0xff]
        %v1392 = vld [vmem:[%s57 + $0x10] sm:$0xff]
        %v1393 = vld [vmem:[%s57 + $0x18] sm:$0xff]
        %v1394 = vsel %vm1263, %v1388, -inf
        %1395 = vmax.xlane.f32.xlu0 %v1394
        %v1396 = vpop.xlane.xlu0 %1395
        %v1397 = vsub.f32 %v1388, %v1396
        %v1398 = vmul.f32 %v1397, 1.442695
        %v1399 = vpow.pop %v1398
        %v1401 = vsel %vm1263, %v1399, 0
        %1403 = vmatpush.msra.mxu0 0.0
        %1404 = vmatpush.msra.mxu0 0.0
        %1405 = vmatpush.msra.mxu0 0.0
        %1406 = vmatpush.msra.mxu0 0.0
        %1407 = vmatpush.msra.mxu0 0.0
        %1408 = vmatpush.msra.mxu0 0.0
        %1409 = vmatpush.msra.mxu0 0.0
        %1410 = vmatpush.msra.mxu0 0.0
        %1411 = vmatpush.msra.mxu0 0.0
        %1412 = vmatpush.msra.mxu0 0.0
        %1413 = vmatpush.msra.mxu0 0.0
        %1414 = vmatpush.msra.mxu0 0.0
        %1415 = vmatpush.msra.mxu0 %v1393
        %1416 = vmatpush.msra.mxu0 %v1392
        %1417 = vmatpush.msra.mxu0 %v1391
        %1418 = vmatpush.msra.mxu0 %v1390
        %1419 = vmatmul.f32.gmra.mxu0 %v1401
        %v1420 = vpop.f32.mrf.mxu0
        %v1421 = vadd.f32 0.0, %v1420
        %1422 = vdwg.mxu0
        %v1423 = vrcp.pop %v1421
        %v1424 = vmul.f32 %v1399, %v1423
        %v1426 = vsel %vm1263, %v1424, 0
        %1428 = vmatpush.msra.mxu0 0.0
        %1429 = vmatpush.msra.mxu0 0.0
        %1430 = vmatpush.msra.mxu0 0.0
        %1431 = vmatpush.msra.mxu0 0.0
        %1432 = vmatpush.msra.mxu0 0.0
        %1433 = vmatpush.msra.mxu0 0.0
        %1434 = vmatpush.msra.mxu0 0.0
        %1435 = vmatpush.msra.mxu0 0.0
        %1436 = vmatpush.msra.mxu0 0.0
        %1437 = vmatpush.msra.mxu0 0.0
        %1438 = vmatpush.msra.mxu0 0.0
        %1439 = vmatpush.msra.mxu0 0.0
        %1440 = vmatpush.msra.mxu0 %v1346
        %1441 = vmatpush.msra.mxu0 %v1345
        %1442 = vmatpush.msra.mxu0 %v1344
        %1443 = vmatpush.msra.mxu0 %v1343
        %1444 = vmatmul.f32.gmra.mxu0 %v1426
        %v1445 = vpop.f32.mrf.mxu0
        %v1446 = vadd.f32 0.0, %v1445
        %1447 = vdwg.mxu0
        %v1448 = vld [vmem:[%s19] sm:$0xff]
        %v1449 = vld [vmem:[%s19 + $0x8] sm:$0xff]
        %v1450 = vld [vmem:[%s19 + $0x10] sm:$0xff]
        %v1451 = vld [vmem:[%s19 + $0x18] sm:$0xff]
        %v1452 = vld [vmem:[%s21] sm:$0x1]
        %v1454 = vperm.slane %v1452, 0
        %v1457 = vsel %vm1263, %v1446, 0
        %1459 = vmatpush.msra.mxu0 0.0
        %1460 = vmatpush.msra.mxu0 0.0
        %1461 = vmatpush.msra.mxu0 0.0
        %1462 = vmatpush.msra.mxu0 0.0
        %1463 = vmatpush.msra.mxu0 0.0
        %1464 = vmatpush.msra.mxu0 0.0
        %1465 = vmatpush.msra.mxu0 0.0
        %1466 = vmatpush.msra.mxu0 0.0
        %1467 = vmatpush.msra.mxu0 0.0
        %1468 = vmatpush.msra.mxu0 0.0
        %1469 = vmatpush.msra.mxu0 0.0
        %1470 = vmatpush.msra.mxu0 0.0
        %1471 = vmatpush.msra.mxu0 %v1451
        %1472 = vmatpush.msra.mxu0 %v1450
        %1473 = vmatpush.msra.mxu0 %v1449
        %1474 = vmatpush.msra.mxu0 %v1448
        %1475 = vmatmul.f32.gmra.mxu0 %v1457
        %v1476 = vpop.f32.mrf.mxu0
        %v1477 = vadd.f32 %v1454, %v1476
        %1478 = vdwg.mxu0
        %v1479 = vadd.f32 %v1252, %v1477
        %v1480 = vsel %vm1263, %v1479, 0.0
        %1481 = vadd.xlane.f32.xlu0 %v1480
        %v1482 = vpop.xlane.xlu0 %1481
        %v1483 = vrcp.pop 32.0
        %v1484 = vmul.f32 32.0, %v1483
        %v1485 = vsub.f32 1.0, %v1484
        %v1486 = vmul.f32 %v1483, %v1485
        %v1487 = vadd.f32 %v1483, %v1486
        %vm1488 = vweird.f32 %v1483
        %v1489 = vsel %vm1488, %v1483, %v1487
        %v1490 = vmul.f32 %v1482, %v1489
        %v1491 = vsub.f32 %v1479, %v1490
        %v1492 = vmul.f32 %v1491, %v1491
        %v1493 = vsel %vm1263, %v1492, 0.0
        %1494 = vadd.xlane.f32.xlu0 %v1493
        %v1495 = vpop.xlane.xlu0 %1494
        %v1496 = vmul.f32 %v1495, %v1489
        %v1497 = vadd.f32 %v1496, 1e-05
        %v1498 = vrsqrt.pop %v1497
        %v1499 = vmul.f32 %v1498, %v1497
        %v1500 = vmul.f32 %v1499, %v1498
        %v1501 = vmul.f32 0.5, %v1500
        %v1502 = vsub.f32 1.5, %v1501
        %v1503 = vmul.f32 %v1498, %v1502
        %vm1504 = vweird.f32 %v1497
        %vm1505 = vweird.f32 %v1498
        %vm1506 = vmor %vm1504, %vm1505
        %v1507 = vsel %vm1506, %v1498, %v1503
        %v1508 = vmul.f32 %v1491, %v1507
        %v1509 = vld [vmem:[%s23] sm:$0x1]
        %v1511 = vperm.slane %v1509, 0
        %v1513 = vmul.f32 %v1508, %v1511
        %v1514 = vld [vmem:[%s25] sm:$0x1]
        %v1516 = vperm.slane %v1514, 0
        %v1518 = vadd.f32 %v1513, %v1516
        %v1519 = vadd.f32 %v1518, %v1253
        %v1520 = vld [vmem:[%s1246] sm:$0xff]
        %v1521 = vld [vmem:[%s1246 + $0x8] sm:$0xff]
        %v1522 = vld [vmem:[%s1246 + $0x10] sm:$0xff]
        %v1523 = vld [vmem:[%s1246 + $0x18] sm:$0xff]
        %v1524 = vld [vmem:[%s1246 + $0x20] sm:$0xff]
        %v1525 = vld [vmem:[%s1246 + $0x28] sm:$0xff]
        %v1526 = vld [vmem:[%s1246 + $0x30] sm:$0xff]
        %v1527 = vld [vmem:[%s1246 + $0x38] sm:$0xff]
        %v1528 = vld [vmem:[%s1246 + $0x40] sm:$0xff]
        %v1529 = vld [vmem:[%s1246 + $0x48] sm:$0xff]
        %v1530 = vld [vmem:[%s27] sm:$0xff]
        %v1531 = vld [vmem:[%s27 + $0x8] sm:$0xff]
        %v1532 = vld [vmem:[%s27 + $0x10] sm:$0xff]
        %v1533 = vld [vmem:[%s27 + $0x18] sm:$0xff]
        %v1534 = vld [vmem:[%s29] sm:$0x1]
        %v1536 = vperm.slane %v1534, 0
        %v1539 = vsel %vm1263, %v1520, 0
        %v1542 = vsel %vm1263, %v1521, 0
        %v1545 = vsel %vm1263, %v1522, 0
        %v1548 = vsel %vm1263, %v1523, 0
        %v1551 = vsel %vm1263, %v1524, 0
        %v1554 = vsel %vm1263, %v1525, 0
        %v1557 = vsel %vm1263, %v1526, 0
        %v1560 = vsel %vm1263, %v1527, 0
        %v1563 = vsel %vm1263, %v1528, 0
        %v1566 = vsel %vm1263, %v1529, 0
        %1568 = vmatpush.msra.mxu0 0.0
        %1569 = vmatpush.msra.mxu0 0.0
        %1570 = vmatpush.msra.mxu0 0.0
        %1571 = vmatpush.msra.mxu0 0.0
        %1572 = vmatpush.msra.mxu0 0.0
        %1573 = vmatpush.msra.mxu0 0.0
        %1574 = vmatpush.msra.mxu0 0.0
        %1575 = vmatpush.msra.mxu0 0.0
        %1576 = vmatpush.msra.mxu0 0.0
        %1577 = vmatpush.msra.mxu0 0.0
        %1578 = vmatpush.msra.mxu0 0.0
        %1579 = vmatpush.msra.mxu0 0.0
        %1580 = vmatpush.msra.mxu0 %v1533
        %1581 = vmatpush.msra.mxu0 %v1532
        %1582 = vmatpush.msra.mxu0 %v1531
        %1583 = vmatpush.msra.mxu0 %v1530
        %1584 = vmatmul.f32.gmra.mxu0 %v1539
        %v1585 = vpop.f32.mrf.mxu0
        %v1586 = vadd.f32 %v1536, %v1585
        %1587 = vmatmul.f32.gmra.mxu0 %v1542
        %v1588 = vpop.f32.mrf.mxu0
        %v1589 = vadd.f32 %v1536, %v1588
        %1590 = vmatmul.f32.gmra.mxu0 %v1545
        %v1591 = vpop.f32.mrf.mxu0
        %v1592 = vadd.f32 %v1536, %v1591
        %1593 = vmatmul.f32.gmra.mxu0 %v1548
        %v1594 = vpop.f32.mrf.mxu0
        %v1595 = vadd.f32 %v1536, %v1594
        %1596 = vmatmul.f32.gmra.mxu0 %v1551
        %v1597 = vpop.f32.mrf.mxu0
        %v1598 = vadd.f32 %v1536, %v1597
        %1599 = vmatmul.f32.gmra.mxu0 %v1554
        %v1600 = vpop.f32.mrf.mxu0
        %v1601 = vadd.f32 %v1536, %v1600
        %1602 = vmatmul.f32.gmra.mxu0 %v1557
        %v1603 = vpop.f32.mrf.mxu0
        %v1604 = vadd.f32 %v1536, %v1603
        %1605 = vmatmul.f32.gmra.mxu0 %v1560
        %v1606 = vpop.f32.mrf.mxu0
        %v1607 = vadd.f32 %v1536, %v1606
        %1608 = vmatmul.f32.gmra.mxu0 %v1563
        %v1609 = vpop.f32.mrf.mxu0
        %v1610 = vadd.f32 %v1536, %v1609
        %1611 = vmatmul.f32.gmra.mxu0 %v1566
        %v1612 = vpop.f32.mrf.mxu0
        %v1613 = vadd.f32 %v1536, %v1612
        %1614 = vdwg.mxu0
        %v1615 = vld [vmem:[%s1251] sm:$0xff]
        %v1616 = vld [vmem:[%s1251 + $0x8] sm:$0xff]
        %v1617 = vld [vmem:[%s1251 + $0x10] sm:$0xff]
        %v1618 = vld [vmem:[%s1251 + $0x18] sm:$0xff]
        %v1619 = vld [vmem:[%s1251 + $0x20] sm:$0xff]
        %v1620 = vld [vmem:[%s1251 + $0x28] sm:$0xff]
        %v1621 = vld [vmem:[%s1251 + $0x30] sm:$0xff]
        %v1622 = vld [vmem:[%s1251 + $0x38] sm:$0xff]
        %v1623 = vld [vmem:[%s1251 + $0x40] sm:$0xff]
        %v1624 = vld [vmem:[%s1251 + $0x48] sm:$0xff]
        %1626 = vset.pattern.permute.xlu0 0
        %1627 = vperm.xlu0 %1626, %v1615
        %v1628 = vpop.permute.xlu0 %1627
        %1631 = vset.pattern.permute.xlu0 0
        %1632 = vperm.xlu0 %1631, %v1616
        %v1633 = vpop.permute.xlu0 %1632
        %1636 = vset.pattern.permute.xlu0 0
        %1637 = vperm.xlu0 %1636, %v1617
        %v1638 = vpop.permute.xlu0 %1637
        %1641 = vset.pattern.permute.xlu0 0
        %1642 = vperm.xlu0 %1641, %v1618
        %v1643 = vpop.permute.xlu0 %1642
        %1646 = vset.pattern.permute.xlu0 0
        %1647 = vperm.xlu0 %1646, %v1619
        %v1648 = vpop.permute.xlu0 %1647
        %1651 = vset.pattern.permute.xlu0 0
        %1652 = vperm.xlu0 %1651, %v1620
        %v1653 = vpop.permute.xlu0 %1652
        %1656 = vset.pattern.permute.xlu0 0
        %1657 = vperm.xlu0 %1656, %v1621
        %v1658 = vpop.permute.xlu0 %1657
        %1661 = vset.pattern.permute.xlu0 0
        %1662 = vperm.xlu0 %1661, %v1622
        %v1663 = vpop.permute.xlu0 %1662
        %1666 = vset.pattern.permute.xlu0 0
        %1667 = vperm.xlu0 %1666, %v1623
        %v1668 = vpop.permute.xlu0 %1667
        %1671 = vset.pattern.permute.xlu0 0
        %1672 = vperm.xlu0 %1671, %v1624
        %v1673 = vpop.permute.xlu0 %1672
        %v1675 = vmul.f32 %v1586, %v1628
        %v1676 = vmul.f32 %v1589, %v1633
        %v1677 = vmul.f32 %v1592, %v1638
        %v1678 = vmul.f32 %v1595, %v1643
        %v1679 = vmul.f32 %v1598, %v1648
        %v1680 = vmul.f32 %v1601, %v1653
        %v1681 = vmul.f32 %v1604, %v1658
        %v1682 = vmul.f32 %v1607, %v1663
        %v1683 = vmul.f32 %v1610, %v1668
        %v1684 = vmul.f32 %v1613, %v1673
        %v1685 = vld [vmem:[%s31] sm:$0xff]
        %v1686 = vld [vmem:[%s31 + $0x8] sm:$0xff]
        %v1687 = vld [vmem:[%s31 + $0x10] sm:$0xff]
        %v1688 = vld [vmem:[%s31 + $0x18] sm:$0xff]
        %v1689 = vld [vmem:[%s33] sm:$0x1]
        %v1691 = vperm.slane %v1689, 0
        %v1694 = vsel %vm1263, %v1519, 0
        %1696 = vmatpush.msra.mxu0 0.0
        %1697 = vmatpush.msra.mxu0 0.0
        %1698 = vmatpush.msra.mxu0 0.0
        %1699 = vmatpush.msra.mxu0 0.0
        %1700 = vmatpush.msra.mxu0 0.0
        %1701 = vmatpush.msra.mxu0 0.0
        %1702 = vmatpush.msra.mxu0 0.0
        %1703 = vmatpush.msra.mxu0 0.0
        %1704 = vmatpush.msra.mxu0 0.0
        %1705 = vmatpush.msra.mxu0 0.0
        %1706 = vmatpush.msra.mxu0 0.0
        %1707 = vmatpush.msra.mxu0 0.0
        %1708 = vmatpush.msra.mxu0 %v1688
        %1709 = vmatpush.msra.mxu0 %v1687
        %1710 = vmatpush.msra.mxu0 %v1686
        %1711 = vmatpush.msra.mxu0 %v1685
        %1712 = vmatmul.f32.gmra.mxu0 %v1694
        %v1713 = vpop.f32.mrf.mxu0
        %v1714 = vadd.f32 %v1691, %v1713
        %1715 = vdwg.mxu0
        %v1716 = vld [vmem:[%s59] sm:$0xff]
        %v1717 = vld [vmem:[%s59 + $0x8] sm:$0xff]
        %vm1718 = vcmask 392448
        %v1719 = vsel %vm1718, %v1714, -inf
        %1720 = vmax.xlane.f32.xlu0 %v1719
        %v1721 = vpop.xlane.xlu0 %1720
        %v1722 = vsub.f32 %v1714, %v1721
        %v1723 = vmul.f32 %v1722, 1.442695
        %v1724 = vpow.pop %v1723
        %1726 = vrot.lane.b32.xlu0 %v1724, 96
        %v1727 = vpop.permute.xlu0 %1726
        %vm1728 = vcmask 130048
        %v1729 = vsel %vm1728, %v1727, 0
        %1731 = vmatpush.msra.mxu0 0.0
        %1732 = vmatpush.msra.mxu0 0.0
        %1733 = vmatpush.msra.mxu0 0.0
        %1734 = vmatpush.msra.mxu0 0.0
        %1735 = vmatpush.msra.mxu0 0.0
        %1736 = vmatpush.msra.mxu0 0.0
        %1737 = vmatpush.msra.mxu0 0.0
        %1738 = vmatpush.msra.mxu0 0.0
        %1739 = vmatpush.msra.mxu0 0.0
        %1740 = vmatpush.msra.mxu0 0.0
        %1741 = vmatpush.msra.mxu0 0.0
        %1742 = vmatpush.msra.mxu0 0.0
        %1743 = vmatpush.msra.mxu0 0.0
        %1744 = vmatpush.msra.mxu0 0.0
        %1745 = vmatpush.msra.mxu0 %v1717
        %1746 = vmatpush.msra.mxu0 %v1716
        %1747 = vmatmul.f32.gmra.mxu0 %v1729
        %v1748 = vpop.f32.mrf.mxu0
        %v1749 = vadd.f32 0.0, %v1748
        %1750 = vdwg.mxu0
        %v1751 = vrcp.pop %v1749
        %1753 = vrot.lane.b32.xlu0 %v1751, 32
        %v1754 = vpop.permute.xlu0 %1753
        %v1756 = vmul.f32 %v1724, %v1754
        %v1757 = vld [vmem:[%s61] sm:$0xff]
        %v1758 = vld [vmem:[%s61 + $0x8] sm:$0xff]
        %v1759 = vld [vmem:[%s61 + $0x10] sm:$0xff]
        %v1760 = vld [vmem:[%s61 + $0x18] sm:$0xff]
        %v1761 = vld [vmem:[%s61 + $0x20] sm:$0xff]
        %v1762 = vld [vmem:[%s61 + $0x28] sm:$0xff]
        %v1763 = vld [vmem:[%s61 + $0x30] sm:$0xff]
        %v1764 = vld [vmem:[%s61 + $0x38] sm:$0xff]
        %vm1765 = vcmask 64512
        %v1767 = vsel %vm1765, %v1757, 0
        %v1770 = vsel %vm1765, %v1758, 0
        %v1773 = vsel %vm1765, %v1759, 0
        %v1776 = vsel %vm1765, %v1760, 0
        %v1779 = vsel %vm1765, %v1761, 0
        %v1782 = vsel %vm1765, %v1762, 0
        %v1785 = vsel %vm1765, %v1763, 0
        %v1788 = vsel %vm1765, %v1764, 0
        %1790 = vmatpush.msra.mxu0 0.0
        %1791 = vmatpush.msra.mxu0 0.0
        %1792 = vmatpush.msra.mxu0 0.0
        %1793 = vmatpush.msra.mxu0 0.0
        %1794 = vmatpush.msra.mxu0 0.0
        %1795 = vmatpush.msra.mxu0 0.0
        %1796 = vmatpush.msra.mxu0 0.0
        %1797 = vmatpush.msra.mxu0 0.0
        %1798 = vmatpush.msra.mxu0 0.0
        %1799 = vmatpush.msra.mxu0 0.0
        %1800 = vmatpush.msra.mxu0 0.0
        %1801 = vmatpush.msra.mxu0 0.0
        %1802 = vmatpush.msra.mxu0 0.0
        %1803 = vmatpush.msra.mxu0 0.0
        %1804 = vmatpush.msra.mxu0 0.0
        %1805 = vmatpush.msra.mxu0 %v1714
        %1806 = vmatmul.f32.gmra.mxu0 %v1767
        %v1807 = vpop.f32.mrf.mxu0
        %v1808 = vadd.f32 0.0, %v1807
        %1809 = vmatmul.f32.gmra.mxu0 %v1770
        %v1810 = vpop.f32.mrf.mxu0
        %v1811 = vadd.f32 0.0, %v1810
        %1812 = vmatmul.f32.gmra.mxu0 %v1773
        %v1813 = vpop.f32.mrf.mxu0
        %v1814 = vadd.f32 0.0, %v1813
        %1815 = vmatmul.f32.gmra.mxu0 %v1776
        %v1816 = vpop.f32.mrf.mxu0
        %v1817 = vadd.f32 0.0, %v1816
        %1818 = vmatmul.f32.gmra.mxu0 %v1779
        %v1819 = vpop.f32.mrf.mxu0
        %v1820 = vadd.f32 0.0, %v1819
        %1821 = vmatmul.f32.gmra.mxu0 %v1782
        %v1822 = vpop.f32.mrf.mxu0
        %v1823 = vadd.f32 0.0, %v1822
        %1824 = vmatmul.f32.gmra.mxu0 %v1785
        %v1825 = vpop.f32.mrf.mxu0
        %v1826 = vadd.f32 0.0, %v1825
        %1827 = vmatmul.f32.gmra.mxu0 %v1788
        %v1828 = vpop.f32.mrf.mxu0
        %v1829 = vadd.f32 0.0, %v1828
        %1830 = vdwg.mxu0
        %1832 = vrot.lane.b32.xlu0 %v1756, 96
        %v1833 = vpop.permute.xlu0 %1832
        %1835 = vmatpush.msra.mxu0 0.0
        %1836 = vmatpush.msra.mxu0 0.0
        %1837 = vmatpush.msra.mxu0 0.0
        %1838 = vmatpush.msra.mxu0 0.0
        %1839 = vmatpush.msra.mxu0 0.0
        %1840 = vmatpush.msra.mxu0 0.0
        %1841 = vmatpush.msra.mxu0 0.0
        %1842 = vmatpush.msra.mxu0 0.0
        %1843 = vmatpush.msra.mxu0 0.0
        %1844 = vmatpush.msra.mxu0 0.0
        %1845 = vmatpush.msra.mxu0 0.0
        %1846 = vmatpush.msra.mxu0 0.0
        %1847 = vmatpush.msra.mxu0 0.0
        %1848 = vmatpush.msra.mxu0 0.0
        %1849 = vmatpush.msra.mxu0 0.0
        %1850 = vmatpush.msra.mxu0 %v1833
        %1851 = vmatmul.f32.gmra.mxu0 %v1767
        %v1852 = vpop.f32.mrf.mxu0
        %v1853 = vadd.f32 0.0, %v1852
        %1854 = vmatmul.f32.gmra.mxu0 %v1770
        %v1855 = vpop.f32.mrf.mxu0
        %v1856 = vadd.f32 0.0, %v1855
        %1857 = vmatmul.f32.gmra.mxu0 %v1773
        %v1858 = vpop.f32.mrf.mxu0
        %v1859 = vadd.f32 0.0, %v1858
        %1860 = vmatmul.f32.gmra.mxu0 %v1776
        %v1861 = vpop.f32.mrf.mxu0
        %v1862 = vadd.f32 0.0, %v1861
        %1863 = vmatmul.f32.gmra.mxu0 %v1779
        %v1864 = vpop.f32.mrf.mxu0
        %v1865 = vadd.f32 0.0, %v1864
        %1866 = vmatmul.f32.gmra.mxu0 %v1782
        %v1867 = vpop.f32.mrf.mxu0
        %v1868 = vadd.f32 0.0, %v1867
        %1869 = vmatmul.f32.gmra.mxu0 %v1785
        %v1870 = vpop.f32.mrf.mxu0
        %v1871 = vadd.f32 0.0, %v1870
        %1872 = vmatmul.f32.gmra.mxu0 %v1788
        %v1873 = vpop.f32.mrf.mxu0
        %v1874 = vadd.f32 0.0, %v1873
        %1875 = vdwg.mxu0
        %v1876 = vld [vmem:[%s1241] sm:$0xff]
        %1877 = vmatpush.msra.mxu0 0.0
        %1878 = vmatpush.msra.mxu0 0.0
        %1879 = vmatpush.msra.mxu0 0.0
        %1880 = vmatpush.msra.mxu0 0.0
        %1881 = vmatpush.msra.mxu0 0.0
        %1882 = vmatpush.msra.mxu0 0.0
        %1883 = vmatpush.msra.mxu0 0.0
        %1884 = vmatpush.msra.mxu0 0.0
        %1885 = vmatpush.msra.mxu0 0.0
        %1886 = vmatpush.msra.mxu0 0.0
        %1887 = vmatpush.msra.mxu0 0.0
        %1888 = vmatpush.msra.mxu0 0.0
        %1889 = vmatpush.msra.mxu0 0.0
        %1890 = vmatpush.msra.mxu0 0.0
        %1891 = vmatpush.msra.mxu0 0.0
        %1892 = vmatpush.msra.mxu0 %v1876
        %1893 = vmatmul.f32.gmra.mxu0 %v1767
        %v1894 = vpop.f32.mrf.mxu0
        %v1895 = vadd.f32 0.0, %v1894
        %1896 = vmatmul.f32.gmra.mxu0 %v1770
        %v1897 = vpop.f32.mrf.mxu0
        %v1898 = vadd.f32 0.0, %v1897
        %1899 = vmatmul.f32.gmra.mxu0 %v1773
        %v1900 = vpop.f32.mrf.mxu0
        %v1901 = vadd.f32 0.0, %v1900
        %1902 = vmatmul.f32.gmra.mxu0 %v1776
        %v1903 = vpop.f32.mrf.mxu0
        %v1904 = vadd.f32 0.0, %v1903
        %1905 = vmatmul.f32.gmra.mxu0 %v1779
        %v1906 = vpop.f32.mrf.mxu0
        %v1907 = vadd.f32 0.0, %v1906
        %1908 = vmatmul.f32.gmra.mxu0 %v1782
        %v1909 = vpop.f32.mrf.mxu0
        %v1910 = vadd.f32 0.0, %v1909
        %1911 = vmatmul.f32.gmra.mxu0 %v1785
        %v1912 = vpop.f32.mrf.mxu0
        %v1913 = vadd.f32 0.0, %v1912
        %1914 = vmatmul.f32.gmra.mxu0 %v1788
        %v1915 = vpop.f32.mrf.mxu0
        %v1916 = vadd.f32 0.0, %v1915
        %1917 = vdwg.mxu0
        %v1918 = vld [vmem:[%s67] sm:$0xff]
        %v1919 = vld [vmem:[%s67 + $0x8] sm:$0xff]
        %v1920 = vld [vmem:[%s67 + $0x10] sm:$0xff]
        %v1921 = vld [vmem:[%s67 + $0x18] sm:$0xff]
        %v1922 = vld [vmem:[%s67 + $0x20] sm:$0xff]
        %v1923 = vld [vmem:[%s67 + $0x28] sm:$0xff]
        %v1924 = vld [vmem:[%s67 + $0x30] sm:$0xff]
        %v1925 = vld [vmem:[%s67 + $0x38] sm:$0xff]
        %v1926 = vld [vmem:[%s69] sm:$0xff]
        %v1927 = vld [vmem:[%s69 + $0x8] sm:$0xff]
        %v1928 = vld [vmem:[%s69 + $0x10] sm:$0xff]
        %v1929 = vld [vmem:[%s69 + $0x18] sm:$0xff]
        %v1930 = vld [vmem:[%s69 + $0x20] sm:$0xff]
        %v1931 = vld [vmem:[%s69 + $0x28] sm:$0xff]
        %v1932 = vld [vmem:[%s69 + $0x30] sm:$0xff]
        %v1933 = vld [vmem:[%s69 + $0x38] sm:$0xff]
        %v1934 = vld [vmem:[%s71] sm:$0xff]
        %v1935 = vld [vmem:[%s71 + $0x8] sm:$0xff]
        %v1936 = vld [vmem:[%s71 + $0x10] sm:$0xff]
        %v1937 = vld [vmem:[%s71 + $0x18] sm:$0xff]
        %v1938 = vld [vmem:[%s71 + $0x20] sm:$0xff]
        %v1939 = vld [vmem:[%s71 + $0x28] sm:$0xff]
        %v1940 = vld [vmem:[%s71 + $0x30] sm:$0xff]
        %v1941 = vld [vmem:[%s71 + $0x38] sm:$0xff]
        %v1942 = vmul.f32 %v1808, %v1918
        %v1943 = vmul.f32 %v1811, %v1919
        %v1944 = vmul.f32 %v1814, %v1920
        %v1945 = vmul.f32 %v1817, %v1921
        %v1946 = vmul.f32 %v1820, %v1922
        %v1947 = vmul.f32 %v1823, %v1923
        %v1948 = vmul.f32 %v1826, %v1924
        %v1949 = vmul.f32 %v1829, %v1925
        %v1950 = vsel %vm1263, %v1942, 0.0
        %1951 = vadd.xlane.f32.xlu0 %v1950
        %v1952 = vpop.xlane.xlu0 %1951
        %v1953 = vsel %vm1263, %v1943, 0.0
        %1954 = vadd.xlane.f32.xlu0 %v1953
        %v1955 = vpop.xlane.xlu0 %1954
        %v1956 = vsel %vm1263, %v1944, 0.0
        %1957 = vadd.xlane.f32.xlu0 %v1956
        %v1958 = vpop.xlane.xlu0 %1957
        %v1959 = vsel %vm1263, %v1945, 0.0
        %1960 = vadd.xlane.f32.xlu0 %v1959
        %v1961 = vpop.xlane.xlu0 %1960
        %v1962 = vsel %vm1263, %v1946, 0.0
        %1963 = vadd.xlane.f32.xlu0 %v1962
        %v1964 = vpop.xlane.xlu0 %1963
        %v1965 = vsel %vm1263, %v1947, 0.0
        %1966 = vadd.xlane.f32.xlu0 %v1965
        %v1967 = vpop.xlane.xlu0 %1966
        %v1968 = vsel %vm1263, %v1948, 0.0
        %1969 = vadd.xlane.f32.xlu0 %v1968
        %v1970 = vpop.xlane.xlu0 %1969
        %v1971 = vsel %vm1263, %v1949, 0.0
        %1972 = vadd.xlane.f32.xlu0 %v1971
        %v1973 = vpop.xlane.xlu0 %1972
        %v1974 = vmul.f32 %v1808, %v1926
        %v1975 = vmul.f32 %v1811, %v1927
        %v1976 = vmul.f32 %v1814, %v1928
        %v1977 = vmul.f32 %v1817, %v1929
        %v1978 = vmul.f32 %v1820, %v1930
        %v1979 = vmul.f32 %v1823, %v1931
        %v1980 = vmul.f32 %v1826, %v1932
        %v1981 = vmul.f32 %v1829, %v1933
        %v1982 = vsel %vm1263, %v1974, 0.0
        %1983 = vadd.xlane.f32.xlu0 %v1982
        %v1984 = vpop.xlane.xlu0 %1983
        %v1985 = vsel %vm1263, %v1975, 0.0
        %1986 = vadd.xlane.f32.xlu0 %v1985
        %v1987 = vpop.xlane.xlu0 %1986
        %v1988 = vsel %vm1263, %v1976, 0.0
        %1989 = vadd.xlane.f32.xlu0 %v1988
        %v1990 = vpop.xlane.xlu0 %1989
        %v1991 = vsel %vm1263, %v1977, 0.0
        %1992 = vadd.xlane.f32.xlu0 %v1991
        %v1993 = vpop.xlane.xlu0 %1992
        %v1994 = vsel %vm1263, %v1978, 0.0
        %1995 = vadd.xlane.f32.xlu0 %v1994
        %v1996 = vpop.xlane.xlu0 %1995
        %v1997 = vsel %vm1263, %v1979, 0.0
        %1998 = vadd.xlane.f32.xlu0 %v1997
        %v1999 = vpop.xlane.xlu0 %1998
        %v2000 = vsel %vm1263, %v1980, 0.0
        %2001 = vadd.xlane.f32.xlu0 %v2000
        %v2002 = vpop.xlane.xlu0 %2001
        %v2003 = vsel %vm1263, %v1981, 0.0
        %2004 = vadd.xlane.f32.xlu0 %v2003
        %v2005 = vpop.xlane.xlu0 %2004
        %v2006 = vmul.f32 %v1853, %v1934
        %v2007 = vmul.f32 %v1856, %v1935
        %v2008 = vmul.f32 %v1859, %v1936
        %v2009 = vmul.f32 %v1862, %v1937
        %v2010 = vmul.f32 %v1865, %v1938
        %v2011 = vmul.f32 %v1868, %v1939
        %v2012 = vmul.f32 %v1871, %v1940
        %v2013 = vmul.f32 %v1874, %v1941
        %v2014 = vsel %vm1728, %v2006, 0.0
        %2015 = vadd.xlane.f32.xlu0 %v2014
        %v2016 = vpop.xlane.xlu0 %2015
        %v2017 = vsel %vm1728, %v2007, 0.0
        %2018 = vadd.xlane.f32.xlu0 %v2017
        %v2019 = vpop.xlane.xlu0 %2018
        %v2020 = vsel %vm1728, %v2008, 0.0
        %2021 = vadd.xlane.f32.xlu0 %v2020
        %v2022 = vpop.xlane.xlu0 %2021
        %v2023 = vsel %vm1728, %v2009, 0.0
        %2024 = vadd.xlane.f32.xlu0 %v2023
        %v2025 = vpop.xlane.xlu0 %2024
        %v2026 = vsel %vm1728, %v2010, 0.0
        %2027 = vadd.xlane.f32.xlu0 %v2026
        %v2028 = vpop.xlane.xlu0 %2027
        %v2029 = vsel %vm1728, %v2011, 0.0
        %2030 = vadd.xlane.f32.xlu0 %v2029
        %v2031 = vpop.xlane.xlu0 %2030
        %v2032 = vsel %vm1728, %v2012, 0.0
        %2033 = vadd.xlane.f32.xlu0 %v2032
        %v2034 = vpop.xlane.xlu0 %2033
        %v2035 = vsel %vm1728, %v2013, 0.0
        %2036 = vadd.xlane.f32.xlu0 %v2035
        %v2037 = vpop.xlane.xlu0 %2036
        %v2038 = vmul.f32 %v1952, 0.125
        %v2039 = vmul.f32 %v1955, 0.125
        %v2040 = vmul.f32 %v1958, 0.125
        %v2041 = vmul.f32 %v1961, 0.125
        %v2042 = vmul.f32 %v1964, 0.125
        %v2043 = vmul.f32 %v1967, 0.125
        %v2044 = vmul.f32 %v1970, 0.125
        %v2045 = vmul.f32 %v1973, 0.125
        %v2046 = vadd.f32 %v1895, %v2038
        %v2047 = vadd.f32 %v1898, %v2039
        %v2048 = vadd.f32 %v1901, %v2040
        %v2049 = vadd.f32 %v1904, %v2041
        %v2050 = vadd.f32 %v1907, %v2042
        %v2051 = vadd.f32 %v1910, %v2043
        %v2052 = vadd.f32 %v1913, %v2044
        %v2053 = vadd.f32 %v1916, %v2045
        %v2054 = vmul.f32 %v1984, 0.125
        %v2055 = vmul.f32 %v1987, 0.125
        %v2056 = vmul.f32 %v1990, 0.125
        %v2057 = vmul.f32 %v1993, 0.125
        %v2058 = vmul.f32 %v1996, 0.125
        %v2059 = vmul.f32 %v1999, 0.125
        %v2060 = vmul.f32 %v2002, 0.125
        %v2061 = vmul.f32 %v2005, 0.125
        %v2062 = vadd.f32 %v1895, %v2054
        %v2063 = vadd.f32 %v1898, %v2055
        %v2064 = vadd.f32 %v1901, %v2056
        %v2065 = vadd.f32 %v1904, %v2057
        %v2066 = vadd.f32 %v1907, %v2058
        %v2067 = vadd.f32 %v1910, %v2059
        %v2068 = vadd.f32 %v1913, %v2060
        %v2069 = vadd.f32 %v1916, %v2061
        %v2070 = vmul.f32 %v2046, 8.0
        %v2071 = vmul.f32 %v2047, 8.0
        %v2072 = vmul.f32 %v2048, 8.0
        %v2073 = vmul.f32 %v2049, 8.0
        %v2074 = vmul.f32 %v2050, 8.0
        %v2075 = vmul.f32 %v2051, 8.0
        %v2076 = vmul.f32 %v2052, 8.0
        %v2077 = vmul.f32 %v2053, 8.0
        %v2078 = vsub.f32 %v2070, 0.5
        %v2079 = vsub.f32 %v2071, 0.5
        %v2080 = vsub.f32 %v2072, 0.5
        %v2081 = vsub.f32 %v2073, 0.5
        %v2082 = vsub.f32 %v2074, 0.5
        %v2083 = vsub.f32 %v2075, 0.5
        %v2084 = vsub.f32 %v2076, 0.5
        %v2085 = vsub.f32 %v2077, 0.5
        %v2086 = vmul.f32 %v2062, 8.0
        %v2087 = vmul.f32 %v2063, 8.0
        %v2088 = vmul.f32 %v2064, 8.0
        %v2089 = vmul.f32 %v2065, 8.0
        %v2090 = vmul.f32 %v2066, 8.0
        %v2091 = vmul.f32 %v2067, 8.0
        %v2092 = vmul.f32 %v2068, 8.0
        %v2093 = vmul.f32 %v2069, 8.0
        %v2094 = vsub.f32 %v2086, 0.5
        %v2095 = vsub.f32 %v2087, 0.5
        %v2096 = vsub.f32 %v2088, 0.5
        %v2097 = vsub.f32 %v2089, 0.5
        %v2098 = vsub.f32 %v2090, 0.5
        %v2099 = vsub.f32 %v2091, 0.5
        %v2100 = vsub.f32 %v2092, 0.5
        %v2101 = vsub.f32 %v2093, 0.5
        %v2102 = vfloor.f32 %v2078
        %v2103 = vfloor.f32 %v2079
        %v2104 = vfloor.f32 %v2080
        %v2105 = vfloor.f32 %v2081
        %v2106 = vfloor.f32 %v2082
        %v2107 = vfloor.f32 %v2083
        %v2108 = vfloor.f32 %v2084
        %v2109 = vfloor.f32 %v2085
        %v2110 = vfloor.f32 %v2094
        %v2111 = vfloor.f32 %v2095
        %v2112 = vfloor.f32 %v2096
        %v2113 = vfloor.f32 %v2097
        %v2114 = vfloor.f32 %v2098
        %v2115 = vfloor.f32 %v2099
        %v2116 = vfloor.f32 %v2100
        %v2117 = vfloor.f32 %v2101
        %v2118 = vsub.f32 %v2078, %v2102
        %v2119 = vsub.f32 %v2079, %v2103
        %v2120 = vsub.f32 %v2080, %v2104
        %v2121 = vsub.f32 %v2081, %v2105
        %v2122 = vsub.f32 %v2082, %v2106
        %v2123 = vsub.f32 %v2083, %v2107
        %v2124 = vsub.f32 %v2084, %v2108
        %v2125 = vsub.f32 %v2085, %v2109
        %v2126 = vsub.f32 %v2094, %v2110
        %v2127 = vsub.f32 %v2095, %v2111
        %v2128 = vsub.f32 %v2096, %v2112
        %v2129 = vsub.f32 %v2097, %v2113
        %v2130 = vsub.f32 %v2098, %v2114
        %v2131 = vsub.f32 %v2099, %v2115
        %v2132 = vsub.f32 %v2100, %v2116
        %v2133 = vsub.f32 %v2101, %v2117
        %v2134 = vlaneseq
        %v2135 = vand.u32 %v2134, 127
        %v2136 = vcvt.s32.f32 %v2135
        %v2137 = vsub.f32 1.0, %v2118
        %v2138 = vsub.f32 1.0, %v2119
        %v2139 = vsub.f32 1.0, %v2120
        %v2140 = vsub.f32 1.0, %v2121
        %v2141 = vsub.f32 1.0, %v2122
        %v2142 = vsub.f32 1.0, %v2123
        %v2143 = vsub.f32 1.0, %v2124
        %v2144 = vsub.f32 1.0, %v2125
        %v2145 = vsub.f32 1.0, %v2126
        %v2146 = vsub.f32 1.0, %v2127
        %v2147 = vsub.f32 1.0, %v2128
        %v2148 = vsub.f32 1.0, %v2129
        %v2149 = vsub.f32 1.0, %v2130
        %v2150 = vsub.f32 1.0, %v2131
        %v2151 = vsub.f32 1.0, %v2132
        %v2152 = vsub.f32 1.0, %v2133
        %2161 = vrot.lane.b32.xlu0 %v2145, 127
        %v2162 = vpop.permute.xlu0 %2161
        %2163 = vrot.lane.b32.xlu0 %v2146, 127
        %v2164 = vpop.permute.xlu0 %2163
        %2165 = vrot.lane.b32.xlu0 %v2147, 127
        %v2166 = vpop.permute.xlu0 %2165
        %2167 = vrot.lane.b32.xlu0 %v2148, 127
        %v2168 = vpop.permute.xlu0 %2167
        %2169 = vrot.lane.b32.xlu0 %v2149, 127
        %v2170 = vpop.permute.xlu0 %2169
        %2171 = vrot.lane.b32.xlu0 %v2150, 127
        %v2172 = vpop.permute.xlu0 %2171
        %2173 = vrot.lane.b32.xlu0 %v2151, 127
        %v2174 = vpop.permute.xlu0 %2173
        %2175 = vrot.lane.b32.xlu0 %v2152, 127
        %v2176 = vpop.permute.xlu0 %2175
        %v2185 = vmul.f32 %v2137, %v2162
        %v2186 = vmul.f32 %v2138, %v2164
        %v2187 = vmul.f32 %v2139, %v2166
        %v2188 = vmul.f32 %v2140, %v2168
        %v2189 = vmul.f32 %v2141, %v2170
        %v2190 = vmul.f32 %v2142, %v2172
        %v2191 = vmul.f32 %v2143, %v2174
        %v2192 = vmul.f32 %v2144, %v2176
        %v2193 = vmul.f32 %v2118, %v2162
        %v2194 = vmul.f32 %v2119, %v2164
        %v2195 = vmul.f32 %v2120, %v2166
        %v2196 = vmul.f32 %v2121, %v2168
        %v2197 = vmul.f32 %v2122, %v2170
        %v2198 = vmul.f32 %v2123, %v2172
        %v2199 = vmul.f32 %v2124, %v2174
        %v2200 = vmul.f32 %v2125, %v2176
        %2209 = vrot.lane.b32.xlu0 %v2126, 127
        %v2210 = vpop.permute.xlu0 %2209
        %2211 = vrot.lane.b32.xlu0 %v2127, 127
        %v2212 = vpop.permute.xlu0 %2211
        %2213 = vrot.lane.b32.xlu0 %v2128, 127
        %v2214 = vpop.permute.xlu0 %2213
        %2215 = vrot.lane.b32.xlu0 %v2129, 127
        %v2216 = vpop.permute.xlu0 %2215
        %2217 = vrot.lane.b32.xlu0 %v2130, 127
        %v2218 = vpop.permute.xlu0 %2217
        %2219 = vrot.lane.b32.xlu0 %v2131, 127
        %v2220 = vpop.permute.xlu0 %2219
        %2221 = vrot.lane.b32.xlu0 %v2132, 127
        %v2222 = vpop.permute.xlu0 %2221
        %2223 = vrot.lane.b32.xlu0 %v2133, 127
        %v2224 = vpop.permute.xlu0 %2223
        %v2233 = vmul.f32 %v2137, %v2210
        %v2234 = vmul.f32 %v2138, %v2212
        %v2235 = vmul.f32 %v2139, %v2214
        %v2236 = vmul.f32 %v2140, %v2216
        %v2237 = vmul.f32 %v2141, %v2218
        %v2238 = vmul.f32 %v2142, %v2220
        %v2239 = vmul.f32 %v2143, %v2222
        %v2240 = vmul.f32 %v2144, %v2224
        %v2241 = vmul.f32 %v2118, %v2210
        %v2242 = vmul.f32 %v2119, %v2212
        %v2243 = vmul.f32 %v2120, %v2214
        %v2244 = vmul.f32 %v2121, %v2216
        %v2245 = vmul.f32 %v2122, %v2218
        %v2246 = vmul.f32 %v2123, %v2220
        %v2247 = vmul.f32 %v2124, %v2222
        %v2248 = vmul.f32 %v2125, %v2224
        %v2249 = vadd.f32 %v2102, 0.0
        %v2250 = vadd.f32 %v2103, 0.0
        %v2251 = vadd.f32 %v2104, 0.0
        %v2252 = vadd.f32 %v2105, 0.0
        %v2253 = vadd.f32 %v2106, 0.0
        %v2254 = vadd.f32 %v2107, 0.0
        %v2255 = vadd.f32 %v2108, 0.0
        %v2256 = vadd.f32 %v2109, 0.0
        %v2257 = vadd.f32 %v2110, 0.0
        %v2258 = vadd.f32 %v2111, 0.0
        %v2259 = vadd.f32 %v2112, 0.0
        %v2260 = vadd.f32 %v2113, 0.0
        %v2261 = vadd.f32 %v2114, 0.0
        %v2262 = vadd.f32 %v2115, 0.0
        %v2263 = vadd.f32 %v2116, 0.0
        %v2264 = vadd.f32 %v2117, 0.0
        %vm2265 = vcmp.ge.f32.partialorder %v2249, 0.0
        %vm2266 = vcmp.ge.f32.partialorder %v2250, 0.0
        %vm2267 = vcmp.ge.f32.partialorder %v2251, 0.0
        %vm2268 = vcmp.ge.f32.partialorder %v2252, 0.0
        %vm2269 = vcmp.ge.f32.partialorder %v2253, 0.0
        %vm2270 = vcmp.ge.f32.partialorder %v2254, 0.0
        %vm2271 = vcmp.ge.f32.partialorder %v2255, 0.0
        %vm2272 = vcmp.ge.f32.partialorder %v2256, 0.0
        %vm2273 = vcmp.le.f32.partialorder %v2249, 7.0
        %vm2274 = vcmp.le.f32.partialorder %v2250, 7.0
        %vm2275 = vcmp.le.f32.partialorder %v2251, 7.0
        %vm2276 = vcmp.le.f32.partialorder %v2252, 7.0
        %vm2277 = vcmp.le.f32.partialorder %v2253, 7.0
        %vm2278 = vcmp.le.f32.partialorder %v2254, 7.0
        %vm2279 = vcmp.le.f32.partialorder %v2255, 7.0
        %vm2280 = vcmp.le.f32.partialorder %v2256, 7.0
        %vm2281 = vmand %vm2265, %vm2273
        %vm2282 = vmand %vm2266, %vm2274
        %vm2283 = vmand %vm2267, %vm2275
        %vm2284 = vmand %vm2268, %vm2276
        %vm2285 = vmand %vm2269, %vm2277
        %vm2286 = vmand %vm2270, %vm2278
        %vm2287 = vmand %vm2271, %vm2279
        %vm2288 = vmand %vm2272, %vm2280
        %vm2289 = vcmp.ge.f32.partialorder %v2257, 0.0
        %vm2290 = vcmp.ge.f32.partialorder %v2258, 0.0
        %vm2291 = vcmp.ge.f32.partialorder %v2259, 0.0
        %vm2292 = vcmp.ge.f32.partialorder %v2260, 0.0
        %vm2293 = vcmp.ge.f32.partialorder %v2261, 0.0
        %vm2294 = vcmp.ge.f32.partialorder %v2262, 0.0
        %vm2295 = vcmp.ge.f32.partialorder %v2263, 0.0
        %vm2296 = vcmp.ge.f32.partialorder %v2264, 0.0
        %v2297 = vsel %vm2289, 1, 0
        %v2298 = vsel %vm2290, 1, 0
        %v2299 = vsel %vm2291, 1, 0
        %v2300 = vsel %vm2292, 1, 0
        %v2301 = vsel %vm2293, 1, 0
        %v2302 = vsel %vm2294, 1, 0
        %v2303 = vsel %vm2295, 1, 0
        %v2304 = vsel %vm2296, 1, 0
        %2305 = vrot.lane.b32.xlu0 %v2297, 127
        %v2306 = vpop.permute.xlu0 %2305
        %2307 = vrot.lane.b32.xlu0 %v2298, 127
        %v2308 = vpop.permute.xlu0 %2307
        %2309 = vrot.lane.b32.xlu0 %v2299, 127
        %v2310 = vpop.permute.xlu0 %2309
        %2311 = vrot.lane.b32.xlu0 %v2300, 127
        %v2312 = vpop.permute.xlu0 %2311
        %2313 = vrot.lane.b32.xlu0 %v2301, 127
        %v2314 = vpop.permute.xlu0 %2313
        %2315 = vrot.lane.b32.xlu0 %v2302, 127
        %v2316 = vpop.permute.xlu0 %2315
        %2317 = vrot.lane.b32.xlu0 %v2303, 127
        %v2318 = vpop.permute.xlu0 %2317
        %2319 = vrot.lane.b32.xlu0 %v2304, 127
        %v2320 = vpop.permute.xlu0 %2319
        %vm2321 = vcmp.ne.s32.totalorder %v2306, 0
        %vm2322 = vcmp.ne.s32.totalorder %v2308, 0
        %vm2323 = vcmp.ne.s32.totalorder %v2310, 0
        %vm2324 = vcmp.ne.s32.totalorder %v2312, 0
        %vm2325 = vcmp.ne.s32.totalorder %v2314, 0
        %vm2326 = vcmp.ne.s32.totalorder %v2316, 0
        %vm2327 = vcmp.ne.s32.totalorder %v2318, 0
        %vm2328 = vcmp.ne.s32.totalorder %v2320, 0
        %vm2329 = vmand %vm2281, %vm2321
        %vm2330 = vmand %vm2282, %vm2322
        %vm2331 = vmand %vm2283, %vm2323
        %vm2332 = vmand %vm2284, %vm2324
        %vm2333 = vmand %vm2285, %vm2325
        %vm2334 = vmand %vm2286, %vm2326
        %vm2335 = vmand %vm2287, %vm2327
        %vm2336 = vmand %vm2288, %vm2328
        %vm2337 = vcmp.le.f32.partialorder %v2257, 7.0
        %vm2338 = vcmp.le.f32.partialorder %v2258, 7.0
        %vm2339 = vcmp.le.f32.partialorder %v2259, 7.0
        %vm2340 = vcmp.le.f32.partialorder %v2260, 7.0
        %vm2341 = vcmp.le.f32.partialorder %v2261, 7.0
        %vm2342 = vcmp.le.f32.partialorder %v2262, 7.0
        %vm2343 = vcmp.le.f32.partialorder %v2263, 7.0
        %vm2344 = vcmp.le.f32.partialorder %v2264, 7.0
        %v2345 = vsel %vm2337, 1, 0
        %v2346 = vsel %vm2338, 1, 0
        %v2347 = vsel %vm2339, 1, 0
        %v2348 = vsel %vm2340, 1, 0
        %v2349 = vsel %vm2341, 1, 0
        %v2350 = vsel %vm2342, 1, 0
        %v2351 = vsel %vm2343, 1, 0
        %v2352 = vsel %vm2344, 1, 0
        %2353 = vrot.lane.b32.xlu0 %v2345, 127
        %v2354 = vpop.permute.xlu0 %2353
        %2355 = vrot.lane.b32.xlu0 %v2346, 127
        %v2356 = vpop.permute.xlu0 %2355
        %2357 = vrot.lane.b32.xlu0 %v2347, 127
        %v2358 = vpop.permute.xlu0 %2357
        %2359 = vrot.lane.b32.xlu0 %v2348, 127
        %v2360 = vpop.permute.xlu0 %2359
        %2361 = vrot.lane.b32.xlu0 %v2349, 127
        %v2362 = vpop.permute.xlu0 %2361
        %2363 = vrot.lane.b32.xlu0 %v2350, 127
        %v2364 = vpop.permute.xlu0 %2363
        %2365 = vrot.lane.b32.xlu0 %v2351, 127
        %v2366 = vpop.permute.xlu0 %2365
        %2367 = vrot.lane.b32.xlu0 %v2352, 127
        %v2368 = vpop.permute.xlu0 %2367
        %vm2369 = vcmp.ne.s32.totalorder %v2354, 0
        %vm2370 = vcmp.ne.s32.totalorder %v2356, 0
        %vm2371 = vcmp.ne.s32.totalorder %v2358, 0
        %vm2372 = vcmp.ne.s32.totalorder %v2360, 0
        %vm2373 = vcmp.ne.s32.totalorder %v2362, 0
        %vm2374 = vcmp.ne.s32.totalorder %v2364, 0
        %vm2375 = vcmp.ne.s32.totalorder %v2366, 0
        %vm2376 = vcmp.ne.s32.totalorder %v2368, 0
        %vm2377 = vmand %vm2329, %vm2369
        %vm2378 = vmand %vm2330, %vm2370
        %vm2379 = vmand %vm2331, %vm2371
        %vm2380 = vmand %vm2332, %vm2372
        %vm2381 = vmand %vm2333, %vm2373
        %vm2382 = vmand %vm2334, %vm2374
        %vm2383 = vmand %vm2335, %vm2375
        %vm2384 = vmand %vm2336, %vm2376
        %v2385 = vsel %vm2377, 1, 0
        %v2386 = vsel %vm2378, 1, 0
        %v2387 = vsel %vm2379, 1, 0
        %v2388 = vsel %vm2380, 1, 0
        %v2389 = vsel %vm2381, 1, 0
        %v2390 = vsel %vm2382, 1, 0
        %v2391 = vsel %vm2383, 1, 0
        %v2392 = vsel %vm2384, 1, 0
        %v2393 = vcvt.s32.f32 %v2385
        %v2394 = vcvt.s32.f32 %v2386
        %v2395 = vcvt.s32.f32 %v2387
        %v2396 = vcvt.s32.f32 %v2388
        %v2397 = vcvt.s32.f32 %v2389
        %v2398 = vcvt.s32.f32 %v2390
        %v2399 = vcvt.s32.f32 %v2391
        %v2400 = vcvt.s32.f32 %v2392
        %v2401 = vmax.f32 %v2249, 0.0
        %v2402 = vmax.f32 %v2250, 0.0
        %v2403 = vmax.f32 %v2251, 0.0
        %v2404 = vmax.f32 %v2252, 0.0
        %v2405 = vmax.f32 %v2253, 0.0
        %v2406 = vmax.f32 %v2254, 0.0
        %v2407 = vmax.f32 %v2255, 0.0
        %v2408 = vmax.f32 %v2256, 0.0
        %v2409 = vmin.f32 %v2401, 7.0
        %v2410 = vmin.f32 %v2402, 7.0
        %v2411 = vmin.f32 %v2403, 7.0
        %v2412 = vmin.f32 %v2404, 7.0
        %v2413 = vmin.f32 %v2405, 7.0
        %v2414 = vmin.f32 %v2406, 7.0
        %v2415 = vmin.f32 %v2407, 7.0
        %v2416 = vmin.f32 %v2408, 7.0
        %v2417 = vmax.f32 %v2257, 0.0
        %v2418 = vmax.f32 %v2258, 0.0
        %v2419 = vmax.f32 %v2259, 0.0
        %v2420 = vmax.f32 %v2260, 0.0
        %v2421 = vmax.f32 %v2261, 0.0
        %v2422 = vmax.f32 %v2262, 0.0
        %v2423 = vmax.f32 %v2263, 0.0
        %v2424 = vmax.f32 %v2264, 0.0
        %v2425 = vmin.f32 %v2417, 7.0
        %v2426 = vmin.f32 %v2418, 7.0
        %v2427 = vmin.f32 %v2419, 7.0
        %v2428 = vmin.f32 %v2420, 7.0
        %v2429 = vmin.f32 %v2421, 7.0
        %v2430 = vmin.f32 %v2422, 7.0
        %v2431 = vmin.f32 %v2423, 7.0
        %v2432 = vmin.f32 %v2424, 7.0
        %v2433 = vmul.f32 %v2425, 8.0
        %v2434 = vmul.f32 %v2426, 8.0
        %v2435 = vmul.f32 %v2427, 8.0
        %v2436 = vmul.f32 %v2428, 8.0
        %v2437 = vmul.f32 %v2429, 8.0
        %v2438 = vmul.f32 %v2430, 8.0
        %v2439 = vmul.f32 %v2431, 8.0
        %v2440 = vmul.f32 %v2432, 8.0
        %2449 = vrot.lane.b32.xlu0 %v2409, 1
        %v2450 = vpop.permute.xlu0 %2449
        %2451 = vrot.lane.b32.xlu0 %v2410, 1
        %v2452 = vpop.permute.xlu0 %2451
        %2453 = vrot.lane.b32.xlu0 %v2411, 1
        %v2454 = vpop.permute.xlu0 %2453
        %2455 = vrot.lane.b32.xlu0 %v2412, 1
        %v2456 = vpop.permute.xlu0 %2455
        %2457 = vrot.lane.b32.xlu0 %v2413, 1
        %v2458 = vpop.permute.xlu0 %2457
        %2459 = vrot.lane.b32.xlu0 %v2414, 1
        %v2460 = vpop.permute.xlu0 %2459
        %2461 = vrot.lane.b32.xlu0 %v2415, 1
        %v2462 = vpop.permute.xlu0 %2461
        %2463 = vrot.lane.b32.xlu0 %v2416, 1
        %v2464 = vpop.permute.xlu0 %2463
        %v2473 = vadd.f32 %v2433, %v2450
        %v2474 = vadd.f32 %v2434, %v2452
        %v2475 = vadd.f32 %v2435, %v2454
        %v2476 = vadd.f32 %v2436, %v2456
        %v2477 = vadd.f32 %v2437, %v2458
        %v2478 = vadd.f32 %v2438, %v2460
        %v2479 = vadd.f32 %v2439, %v2462
        %v2480 = vadd.f32 %v2440, %v2464
        %2482 = vset.pattern.permute.xlu0 1
        %2483 = vperm.xlu0 %2482, %v2473
        %v2484 = vpop.permute.xlu0 %2483
        %2487 = vset.pattern.permute.xlu0 1
        %2488 = vperm.xlu0 %2487, %v2474
        %v2489 = vpop.permute.xlu0 %2488
        %2492 = vset.pattern.permute.xlu0 1
        %2493 = vperm.xlu0 %2492, %v2475
        %v2494 = vpop.permute.xlu0 %2493
        %2497 = vset.pattern.permute.xlu0 1
        %2498 = vperm.xlu0 %2497, %v2476
        %v2499 = vpop.permute.xlu0 %2498
        %2502 = vset.pattern.permute.xlu0 1
        %2503 = vperm.xlu0 %2502, %v2477
        %v2504 = vpop.permute.xlu0 %2503
        %2507 = vset.pattern.permute.xlu0 1
        %2508 = vperm.xlu0 %2507, %v2478
        %v2509 = vpop.permute.xlu0 %2508
        %2512 = vset.pattern.permute.xlu0 1
        %2513 = vperm.xlu0 %2512, %v2479
        %v2514 = vpop.permute.xlu0 %2513
        %2517 = vset.pattern.permute.xlu0 1
        %2518 = vperm.xlu0 %2517, %v2480
        %v2519 = vpop.permute.xlu0 %2518
        %vm2521 = vcmp.eq.f32.partialorder %v2136, %v2484
        %vm2522 = vcmp.eq.f32.partialorder %v2136, %v2489
        %vm2523 = vcmp.eq.f32.partialorder %v2136, %v2494
        %vm2524 = vcmp.eq.f32.partialorder %v2136, %v2499
        %vm2525 = vcmp.eq.f32.partialorder %v2136, %v2504
        %vm2526 = vcmp.eq.f32.partialorder %v2136, %v2509
        %vm2527 = vcmp.eq.f32.partialorder %v2136, %v2514
        %vm2528 = vcmp.eq.f32.partialorder %v2136, %v2519
        %v2529 = vsel %vm2521, 1, 0
        %v2530 = vsel %vm2522, 1, 0
        %v2531 = vsel %vm2523, 1, 0
        %v2532 = vsel %vm2524, 1, 0
        %v2533 = vsel %vm2525, 1, 0
        %v2534 = vsel %vm2526, 1, 0
        %v2535 = vsel %vm2527, 1, 0
        %v2536 = vsel %vm2528, 1, 0
        %v2537 = vcvt.s32.f32 %v2529
        %v2538 = vcvt.s32.f32 %v2530
        %v2539 = vcvt.s32.f32 %v2531
        %v2540 = vcvt.s32.f32 %v2532
        %v2541 = vcvt.s32.f32 %v2533
        %v2542 = vcvt.s32.f32 %v2534
        %v2543 = vcvt.s32.f32 %v2535
        %v2544 = vcvt.s32.f32 %v2536
        %v2545 = vmul.f32 %v2185, %v2393
        %v2546 = vmul.f32 %v2186, %v2394
        %v2547 = vmul.f32 %v2187, %v2395
        %v2548 = vmul.f32 %v2188, %v2396
        %v2549 = vmul.f32 %v2189, %v2397
        %v2550 = vmul.f32 %v2190, %v2398
        %v2551 = vmul.f32 %v2191, %v2399
        %v2552 = vmul.f32 %v2192, %v2400
        %2554 = vset.pattern.permute.xlu0 0
        %2555 = vperm.xlu0 %2554, %v2545
        %v2556 = vpop.permute.xlu0 %2555
        %2559 = vset.pattern.permute.xlu0 0
        %2560 = vperm.xlu0 %2559, %v2546
        %v2561 = vpop.permute.xlu0 %2560
        %2564 = vset.pattern.permute.xlu0 0
        %2565 = vperm.xlu0 %2564, %v2547
        %v2566 = vpop.permute.xlu0 %2565
        %2569 = vset.pattern.permute.xlu0 0
        %2570 = vperm.xlu0 %2569, %v2548
        %v2571 = vpop.permute.xlu0 %2570
        %2574 = vset.pattern.permute.xlu0 0
        %2575 = vperm.xlu0 %2574, %v2549
        %v2576 = vpop.permute.xlu0 %2575
        %2579 = vset.pattern.permute.xlu0 0
        %2580 = vperm.xlu0 %2579, %v2550
        %v2581 = vpop.permute.xlu0 %2580
        %2584 = vset.pattern.permute.xlu0 0
        %2585 = vperm.xlu0 %2584, %v2551
        %v2586 = vpop.permute.xlu0 %2585
        %2589 = vset.pattern.permute.xlu0 0
        %2590 = vperm.xlu0 %2589, %v2552
        %v2591 = vpop.permute.xlu0 %2590
        %v2593 = vmul.f32 %v2537, %v2556
        %v2594 = vmul.f32 %v2538, %v2561
        %v2595 = vmul.f32 %v2539, %v2566
        %v2596 = vmul.f32 %v2540, %v2571
        %v2597 = vmul.f32 %v2541, %v2576
        %v2598 = vmul.f32 %v2542, %v2581
        %v2599 = vmul.f32 %v2543, %v2586
        %v2600 = vmul.f32 %v2544, %v2591
        %v2601 = vadd.f32 %v2593, 0.0
        %v2602 = vadd.f32 %v2594, 0.0
        %v2603 = vadd.f32 %v2595, 0.0
        %v2604 = vadd.f32 %v2596, 0.0
        %v2605 = vadd.f32 %v2597, 0.0
        %v2606 = vadd.f32 %v2598, 0.0
        %v2607 = vadd.f32 %v2599, 0.0
        %v2608 = vadd.f32 %v2600, 0.0
        %v2609 = vadd.f32 %v2102, 1.0
        %v2610 = vadd.f32 %v2103, 1.0
        %v2611 = vadd.f32 %v2104, 1.0
        %v2612 = vadd.f32 %v2105, 1.0
        %v2613 = vadd.f32 %v2106, 1.0
        %v2614 = vadd.f32 %v2107, 1.0
        %v2615 = vadd.f32 %v2108, 1.0
        %v2616 = vadd.f32 %v2109, 1.0
        %vm2617 = vcmp.ge.f32.partialorder %v2609, 0.0
        %vm2618 = vcmp.ge.f32.partialorder %v2610, 0.0
        %vm2619 = vcmp.ge.f32.partialorder %v2611, 0.0
        %vm2620 = vcmp.ge.f32.partialorder %v2612, 0.0
        %vm2621 = vcmp.ge.f32.partialorder %v2613, 0.0
        %vm2622 = vcmp.ge.f32.partialorder %v2614, 0.0
        %vm2623 = vcmp.ge.f32.partialorder %v2615, 0.0
        %vm2624 = vcmp.ge.f32.partialorder %v2616, 0.0
        %vm2625 = vcmp.le.f32.partialorder %v2609, 7.0
        %vm2626 = vcmp.le.f32.partialorder %v2610, 7.0
        %vm2627 = vcmp.le.f32.partialorder %v2611, 7.0
        %vm2628 = vcmp.le.f32.partialorder %v2612, 7.0
        %vm2629 = vcmp.le.f32.partialorder %v2613, 7.0
        %vm2630 = vcmp.le.f32.partialorder %v2614, 7.0
        %vm2631 = vcmp.le.f32.partialorder %v2615, 7.0
        %vm2632 = vcmp.le.f32.partialorder %v2616, 7.0
        %vm2633 = vmand %vm2617, %vm2625
        %vm2634 = vmand %vm2618, %vm2626
        %vm2635 = vmand %vm2619, %vm2627
        %vm2636 = vmand %vm2620, %vm2628
        %vm2637 = vmand %vm2621, %vm2629
        %vm2638 = vmand %vm2622, %vm2630
        %vm2639 = vmand %vm2623, %vm2631
        %vm2640 = vmand %vm2624, %vm2632
        %vm2641 = vmand %vm2633, %vm2321
        %vm2642 = vmand %vm2634, %vm2322
        %vm2643 = vmand %vm2635, %vm2323
        %vm2644 = vmand %vm2636, %vm2324
        %vm2645 = vmand %vm2637, %vm2325
        %vm2646 = vmand %vm2638, %vm2326
        %vm2647 = vmand %vm2639, %vm2327
        %vm2648 = vmand %vm2640, %vm2328
        %vm2649 = vmand %vm2641, %vm2369
        %vm2650 = vmand %vm2642, %vm2370
        %vm2651 = vmand %vm2643, %vm2371
        %vm2652 = vmand %vm2644, %vm2372
        %vm2653 = vmand %vm2645, %vm2373
        %vm2654 = vmand %vm2646, %vm2374
        %vm2655 = vmand %vm2647, %vm2375
        %vm2656 = vmand %vm2648, %vm2376
        %v2657 = vsel %vm2649, 1, 0
        %v2658 = vsel %vm2650, 1, 0
        %v2659 = vsel %vm2651, 1, 0
        %v2660 = vsel %vm2652, 1, 0
        %v2661 = vsel %vm2653, 1, 0
        %v2662 = vsel %vm2654, 1, 0
        %v2663 = vsel %vm2655, 1, 0
        %v2664 = vsel %vm2656, 1, 0
        %v2665 = vcvt.s32.f32 %v2657
        %v2666 = vcvt.s32.f32 %v2658
        %v2667 = vcvt.s32.f32 %v2659
        %v2668 = vcvt.s32.f32 %v2660
        %v2669 = vcvt.s32.f32 %v2661
        %v2670 = vcvt.s32.f32 %v2662
        %v2671 = vcvt.s32.f32 %v2663
        %v2672 = vcvt.s32.f32 %v2664
        %v2673 = vmax.f32 %v2609, 0.0
        %v2674 = vmax.f32 %v2610, 0.0
        %v2675 = vmax.f32 %v2611, 0.0
        %v2676 = vmax.f32 %v2612, 0.0
        %v2677 = vmax.f32 %v2613, 0.0
        %v2678 = vmax.f32 %v2614, 0.0
        %v2679 = vmax.f32 %v2615, 0.0
        %v2680 = vmax.f32 %v2616, 0.0
        %v2681 = vmin.f32 %v2673, 7.0
        %v2682 = vmin.f32 %v2674, 7.0
        %v2683 = vmin.f32 %v2675, 7.0
        %v2684 = vmin.f32 %v2676, 7.0
        %v2685 = vmin.f32 %v2677, 7.0
        %v2686 = vmin.f32 %v2678, 7.0
        %v2687 = vmin.f32 %v2679, 7.0
        %v2688 = vmin.f32 %v2680, 7.0
        %2697 = vrot.lane.b32.xlu0 %v2681, 1
        %v2698 = vpop.permute.xlu0 %2697
        %2699 = vrot.lane.b32.xlu0 %v2682, 1
        %v2700 = vpop.permute.xlu0 %2699
        %2701 = vrot.lane.b32.xlu0 %v2683, 1
        %v2702 = vpop.permute.xlu0 %2701
        %2703 = vrot.lane.b32.xlu0 %v2684, 1
        %v2704 = vpop.permute.xlu0 %2703
        %2705 = vrot.lane.b32.xlu0 %v2685, 1
        %v2706 = vpop.permute.xlu0 %2705
        %2707 = vrot.lane.b32.xlu0 %v2686, 1
        %v2708 = vpop.permute.xlu0 %2707
        %2709 = vrot.lane.b32.xlu0 %v2687, 1
        %v2710 = vpop.permute.xlu0 %2709
        %2711 = vrot.lane.b32.xlu0 %v2688, 1
        %v2712 = vpop.permute.xlu0 %2711
        %v2721 = vadd.f32 %v2433, %v2698
        %v2722 = vadd.f32 %v2434, %v2700
        %v2723 = vadd.f32 %v2435, %v2702
        %v2724 = vadd.f32 %v2436, %v2704
        %v2725 = vadd.f32 %v2437, %v2706
        %v2726 = vadd.f32 %v2438, %v2708
        %v2727 = vadd.f32 %v2439, %v2710
        %v2728 = vadd.f32 %v2440, %v2712
        %2730 = vset.pattern.permute.xlu0 1
        %2731 = vperm.xlu0 %2730, %v2721
        %v2732 = vpop.permute.xlu0 %2731
        %2735 = vset.pattern.permute.xlu0 1
        %2736 = vperm.xlu0 %2735, %v2722
        %v2737 = vpop.permute.xlu0 %2736
        %2740 = vset.pattern.permute.xlu0 1
        %2741 = vperm.xlu0 %2740, %v2723
        %v2742 = vpop.permute.xlu0 %2741
        %2745 = vset.pattern.permute.xlu0 1
        %2746 = vperm.xlu0 %2745, %v2724
        %v2747 = vpop.permute.xlu0 %2746
        %2750 = vset.pattern.permute.xlu0 1
        %2751 = vperm.xlu0 %2750, %v2725
        %v2752 = vpop.permute.xlu0 %2751
        %2755 = vset.pattern.permute.xlu0 1
        %2756 = vperm.xlu0 %2755, %v2726
        %v2757 = vpop.permute.xlu0 %2756
        %2760 = vset.pattern.permute.xlu0 1
        %2761 = vperm.xlu0 %2760, %v2727
        %v2762 = vpop.permute.xlu0 %2761
        %2765 = vset.pattern.permute.xlu0 1
        %2766 = vperm.xlu0 %2765, %v2728
        %v2767 = vpop.permute.xlu0 %2766
        %vm2769 = vcmp.eq.f32.partialorder %v2136, %v2732
        %vm2770 = vcmp.eq.f32.partialorder %v2136, %v2737
        %vm2771 = vcmp.eq.f32.partialorder %v2136, %v2742
        %vm2772 = vcmp.eq.f32.partialorder %v2136, %v2747
        %vm2773 = vcmp.eq.f32.partialorder %v2136, %v2752
        %vm2774 = vcmp.eq.f32.partialorder %v2136, %v2757
        %vm2775 = vcmp.eq.f32.partialorder %v2136, %v2762
        %vm2776 = vcmp.eq.f32.partialorder %v2136, %v2767
        %v2777 = vsel %vm2769, 1, 0
        %v2778 = vsel %vm2770, 1, 0
        %v2779 = vsel %vm2771, 1, 0
        %v2780 = vsel %vm2772, 1, 0
        %v2781 = vsel %vm2773, 1, 0
        %v2782 = vsel %vm2774, 1, 0
        %v2783 = vsel %vm2775, 1, 0
        %v2784 = vsel %vm2776, 1, 0
        %v2785 = vcvt.s32.f32 %v2777
        %v2786 = vcvt.s32.f32 %v2778
        %v2787 = vcvt.s32.f32 %v2779
        %v2788 = vcvt.s32.f32 %v2780
        %v2789 = vcvt.s32.f32 %v2781
        %v2790 = vcvt.s32.f32 %v2782
        %v2791 = vcvt.s32.f32 %v2783
        %v2792 = vcvt.s32.f32 %v2784
        %v2793 = vmul.f32 %v2193, %v2665
        %v2794 = vmul.f32 %v2194, %v2666
        %v2795 = vmul.f32 %v2195, %v2667
        %v2796 = vmul.f32 %v2196, %v2668
        %v2797 = vmul.f32 %v2197, %v2669
        %v2798 = vmul.f32 %v2198, %v2670
        %v2799 = vmul.f32 %v2199, %v2671
        %v2800 = vmul.f32 %v2200, %v2672
        %2802 = vset.pattern.permute.xlu0 0
        %2803 = vperm.xlu0 %2802, %v2793
        %v2804 = vpop.permute.xlu0 %2803
        %2807 = vset.pattern.permute.xlu0 0
        %2808 = vperm.xlu0 %2807, %v2794
        %v2809 = vpop.permute.xlu0 %2808
        %2812 = vset.pattern.permute.xlu0 0
        %2813 = vperm.xlu0 %2812, %v2795
        %v2814 = vpop.permute.xlu0 %2813
        %2817 = vset.pattern.permute.xlu0 0
        %2818 = vperm.xlu0 %2817, %v2796
        %v2819 = vpop.permute.xlu0 %2818
        %2822 = vset.pattern.permute.xlu0 0
        %2823 = vperm.xlu0 %2822, %v2797
        %v2824 = vpop.permute.xlu0 %2823
        %2827 = vset.pattern.permute.xlu0 0
        %2828 = vperm.xlu0 %2827, %v2798
        %v2829 = vpop.permute.xlu0 %2828
        %2832 = vset.pattern.permute.xlu0 0
        %2833 = vperm.xlu0 %2832, %v2799
        %v2834 = vpop.permute.xlu0 %2833
        %2837 = vset.pattern.permute.xlu0 0
        %2838 = vperm.xlu0 %2837, %v2800
        %v2839 = vpop.permute.xlu0 %2838
        %v2841 = vmul.f32 %v2785, %v2804
        %v2842 = vmul.f32 %v2786, %v2809
        %v2843 = vmul.f32 %v2787, %v2814
        %v2844 = vmul.f32 %v2788, %v2819
        %v2845 = vmul.f32 %v2789, %v2824
        %v2846 = vmul.f32 %v2790, %v2829
        %v2847 = vmul.f32 %v2791, %v2834
        %v2848 = vmul.f32 %v2792, %v2839
        %v2849 = vadd.f32 %v2601, %v2841
        %v2850 = vadd.f32 %v2602, %v2842
        %v2851 = vadd.f32 %v2603, %v2843
        %v2852 = vadd.f32 %v2604, %v2844
        %v2853 = vadd.f32 %v2605, %v2845
        %v2854 = vadd.f32 %v2606, %v2846
        %v2855 = vadd.f32 %v2607, %v2847
        %v2856 = vadd.f32 %v2608, %v2848
        %v2857 = vadd.f32 %v2110, 1.0
        %v2858 = vadd.f32 %v2111, 1.0
        %v2859 = vadd.f32 %v2112, 1.0
        %v2860 = vadd.f32 %v2113, 1.0
        %v2861 = vadd.f32 %v2114, 1.0
        %v2862 = vadd.f32 %v2115, 1.0
        %v2863 = vadd.f32 %v2116, 1.0
        %v2864 = vadd.f32 %v2117, 1.0
        %vm2865 = vcmp.ge.f32.partialorder %v2857, 0.0
        %vm2866 = vcmp.ge.f32.partialorder %v2858, 0.0
        %vm2867 = vcmp.ge.f32.partialorder %v2859, 0.0
        %vm2868 = vcmp.ge.f32.partialorder %v2860, 0.0
        %vm2869 = vcmp.ge.f32.partialorder %v2861, 0.0
        %vm2870 = vcmp.ge.f32.partialorder %v2862, 0.0
        %vm2871 = vcmp.ge.f32.partialorder %v2863, 0.0
        %vm2872 = vcmp.ge.f32.partialorder %v2864, 0.0
        %v2873 = vsel %vm2865, 1, 0
        %v2874 = vsel %vm2866, 1, 0
        %v2875 = vsel %vm2867, 1, 0
        %v2876 = vsel %vm2868, 1, 0
        %v2877 = vsel %vm2869, 1, 0
        %v2878 = vsel %vm2870, 1, 0
        %v2879 = vsel %vm2871, 1, 0
        %v2880 = vsel %vm2872, 1, 0
        %2881 = vrot.lane.b32.xlu0 %v2873, 127
        %v2882 = vpop.permute.xlu0 %2881
        %2883 = vrot.lane.b32.xlu0 %v2874, 127
        %v2884 = vpop.permute.xlu0 %2883
        %2885 = vrot.lane.b32.xlu0 %v2875, 127
        %v2886 = vpop.permute.xlu0 %2885
        %2887 = vrot.lane.b32.xlu0 %v2876, 127
        %v2888 = vpop.permute.xlu0 %2887
        %2889 = vrot.lane.b32.xlu0 %v2877, 127
        %v2890 = vpop.permute.xlu0 %2889
        %2891 = vrot.lane.b32.xlu0 %v2878, 127
        %v2892 = vpop.permute.xlu0 %2891
        %2893 = vrot.lane.b32.xlu0 %v2879, 127
        %v2894 = vpop.permute.xlu0 %2893
        %2895 = vrot.lane.b32.xlu0 %v2880, 127
        %v2896 = vpop.permute.xlu0 %2895
        %vm2897 = vcmp.ne.s32.totalorder %v2882, 0
        %vm2898 = vcmp.ne.s32.totalorder %v2884, 0
        %vm2899 = vcmp.ne.s32.totalorder %v2886, 0
        %vm2900 = vcmp.ne.s32.totalorder %v2888, 0
        %vm2901 = vcmp.ne.s32.totalorder %v2890, 0
        %vm2902 = vcmp.ne.s32.totalorder %v2892, 0
        %vm2903 = vcmp.ne.s32.totalorder %v2894, 0
        %vm2904 = vcmp.ne.s32.totalorder %v2896, 0
        %vm2905 = vmand %vm2281, %vm2897
        %vm2906 = vmand %vm2282, %vm2898
        %vm2907 = vmand %vm2283, %vm2899
        %vm2908 = vmand %vm2284, %vm2900
        %vm2909 = vmand %vm2285, %vm2901
        %vm2910 = vmand %vm2286, %vm2902
        %vm2911 = vmand %vm2287, %vm2903
        %vm2912 = vmand %vm2288, %vm2904
        %vm2913 = vcmp.le.f32.partialorder %v2857, 7.0
        %vm2914 = vcmp.le.f32.partialorder %v2858, 7.0
        %vm2915 = vcmp.le.f32.partialorder %v2859, 7.0
        %vm2916 = vcmp.le.f32.partialorder %v2860, 7.0
        %vm2917 = vcmp.le.f32.partialorder %v2861, 7.0
        %vm2918 = vcmp.le.f32.partialorder %v2862, 7.0
        %vm2919 = vcmp.le.f32.partialorder %v2863, 7.0
        %vm2920 = vcmp.le.f32.partialorder %v2864, 7.0
        %v2921 = vsel %vm2913, 1, 0
        %v2922 = vsel %vm2914, 1, 0
        %v2923 = vsel %vm2915, 1, 0
        %v2924 = vsel %vm2916, 1, 0
        %v2925 = vsel %vm2917, 1, 0
        %v2926 = vsel %vm2918, 1, 0
        %v2927 = vsel %vm2919, 1, 0
        %v2928 = vsel %vm2920, 1, 0
        %2929 = vrot.lane.b32.xlu0 %v2921, 127
        %v2930 = vpop.permute.xlu0 %2929
        %2931 = vrot.lane.b32.xlu0 %v2922, 127
        %v2932 = vpop.permute.xlu0 %2931
        %2933 = vrot.lane.b32.xlu0 %v2923, 127
        %v2934 = vpop.permute.xlu0 %2933
        %2935 = vrot.lane.b32.xlu0 %v2924, 127
        %v2936 = vpop.permute.xlu0 %2935
        %2937 = vrot.lane.b32.xlu0 %v2925, 127
        %v2938 = vpop.permute.xlu0 %2937
        %2939 = vrot.lane.b32.xlu0 %v2926, 127
        %v2940 = vpop.permute.xlu0 %2939
        %2941 = vrot.lane.b32.xlu0 %v2927, 127
        %v2942 = vpop.permute.xlu0 %2941
        %2943 = vrot.lane.b32.xlu0 %v2928, 127
        %v2944 = vpop.permute.xlu0 %2943
        %vm2945 = vcmp.ne.s32.totalorder %v2930, 0
        %vm2946 = vcmp.ne.s32.totalorder %v2932, 0
        %vm2947 = vcmp.ne.s32.totalorder %v2934, 0
        %vm2948 = vcmp.ne.s32.totalorder %v2936, 0
        %vm2949 = vcmp.ne.s32.totalorder %v2938, 0
        %vm2950 = vcmp.ne.s32.totalorder %v2940, 0
        %vm2951 = vcmp.ne.s32.totalorder %v2942, 0
        %vm2952 = vcmp.ne.s32.totalorder %v2944, 0
        %vm2953 = vmand %vm2905, %vm2945
        %vm2954 = vmand %vm2906, %vm2946
        %vm2955 = vmand %vm2907, %vm2947
        %vm2956 = vmand %vm2908, %vm2948
        %vm2957 = vmand %vm2909, %vm2949
        %vm2958 = vmand %vm2910, %vm2950
        %vm2959 = vmand %vm2911, %vm2951
        %vm2960 = vmand %vm2912, %vm2952
        %v2961 = vsel %vm2953, 1, 0
        %v2962 = vsel %vm2954, 1, 0
        %v2963 = vsel %vm2955, 1, 0
        %v2964 = vsel %vm2956, 1, 0
        %v2965 = vsel %vm2957, 1, 0
        %v2966 = vsel %vm2958, 1, 0
        %v2967 = vsel %vm2959, 1, 0
        %v2968 = vsel %vm2960, 1, 0
        %v2969 = vcvt.s32.f32 %v2961
        %v2970 = vcvt.s32.f32 %v2962
        %v2971 = vcvt.s32.f32 %v2963
        %v2972 = vcvt.s32.f32 %v2964
        %v2973 = vcvt.s32.f32 %v2965
        %v2974 = vcvt.s32.f32 %v2966
        %v2975 = vcvt.s32.f32 %v2967
        %v2976 = vcvt.s32.f32 %v2968
        %v2977 = vmax.f32 %v2857, 0.0
        %v2978 = vmax.f32 %v2858, 0.0
        %v2979 = vmax.f32 %v2859, 0.0
        %v2980 = vmax.f32 %v2860, 0.0
        %v2981 = vmax.f32 %v2861, 0.0
        %v2982 = vmax.f32 %v2862, 0.0
        %v2983 = vmax.f32 %v2863, 0.0
        %v2984 = vmax.f32 %v2864, 0.0
        %v2985 = vmin.f32 %v2977, 7.0
        %v2986 = vmin.f32 %v2978, 7.0
        %v2987 = vmin.f32 %v2979, 7.0
        %v2988 = vmin.f32 %v2980, 7.0
        %v2989 = vmin.f32 %v2981, 7.0
        %v2990 = vmin.f32 %v2982, 7.0
        %v2991 = vmin.f32 %v2983, 7.0
        %v2992 = vmin.f32 %v2984, 7.0
        %v2993 = vmul.f32 %v2985, 8.0
        %v2994 = vmul.f32 %v2986, 8.0
        %v2995 = vmul.f32 %v2987, 8.0
        %v2996 = vmul.f32 %v2988, 8.0
        %v2997 = vmul.f32 %v2989, 8.0
        %v2998 = vmul.f32 %v2990, 8.0
        %v2999 = vmul.f32 %v2991, 8.0
        %v3000 = vmul.f32 %v2992, 8.0
        %v3001 = vadd.f32 %v2993, %v2450
        %v3002 = vadd.f32 %v2994, %v2452
        %v3003 = vadd.f32 %v2995, %v2454
        %v3004 = vadd.f32 %v2996, %v2456
        %v3005 = vadd.f32 %v2997, %v2458
        %v3006 = vadd.f32 %v2998, %v2460
        %v3007 = vadd.f32 %v2999, %v2462
        %v3008 = vadd.f32 %v3000, %v2464
        %3010 = vset.pattern.permute.xlu0 1
        %3011 = vperm.xlu0 %3010, %v3001
        %v3012 = vpop.permute.xlu0 %3011
        %3015 = vset.pattern.permute.xlu0 1
        %3016 = vperm.xlu0 %3015, %v3002
        %v3017 = vpop.permute.xlu0 %3016
        %3020 = vset.pattern.permute.xlu0 1
        %3021 = vperm.xlu0 %3020, %v3003
        %v3022 = vpop.permute.xlu0 %3021
        %3025 = vset.pattern.permute.xlu0 1
        %3026 = vperm.xlu0 %3025, %v3004
        %v3027 = vpop.permute.xlu0 %3026
        %3030 = vset.pattern.permute.xlu0 1
        %3031 = vperm.xlu0 %3030, %v3005
        %v3032 = vpop.permute.xlu0 %3031
        %3035 = vset.pattern.permute.xlu0 1
        %3036 = vperm.xlu0 %3035, %v3006
        %v3037 = vpop.permute.xlu0 %3036
        %3040 = vset.pattern.permute.xlu0 1
        %3041 = vperm.xlu0 %3040, %v3007
        %v3042 = vpop.permute.xlu0 %3041
        %3045 = vset.pattern.permute.xlu0 1
        %3046 = vperm.xlu0 %3045, %v3008
        %v3047 = vpop.permute.xlu0 %3046
        %vm3049 = vcmp.eq.f32.partialorder %v2136, %v3012
        %vm3050 = vcmp.eq.f32.partialorder %v2136, %v3017
        %vm3051 = vcmp.eq.f32.partialorder %v2136, %v3022
        %vm3052 = vcmp.eq.f32.partialorder %v2136, %v3027
        %vm3053 = vcmp.eq.f32.partialorder %v2136, %v3032
        %vm3054 = vcmp.eq.f32.partialorder %v2136, %v3037
        %vm3055 = vcmp.eq.f32.partialorder %v2136, %v3042
        %vm3056 = vcmp.eq.f32.partialorder %v2136, %v3047
        %v3057 = vsel %vm3049, 1, 0
        %v3058 = vsel %vm3050, 1, 0
        %v3059 = vsel %vm3051, 1, 0
        %v3060 = vsel %vm3052, 1, 0
        %v3061 = vsel %vm3053, 1, 0
        %v3062 = vsel %vm3054, 1, 0
        %v3063 = vsel %vm3055, 1, 0
        %v3064 = vsel %vm3056, 1, 0
        %v3065 = vcvt.s32.f32 %v3057
        %v3066 = vcvt.s32.f32 %v3058
        %v3067 = vcvt.s32.f32 %v3059
        %v3068 = vcvt.s32.f32 %v3060
        %v3069 = vcvt.s32.f32 %v3061
        %v3070 = vcvt.s32.f32 %v3062
        %v3071 = vcvt.s32.f32 %v3063
        %v3072 = vcvt.s32.f32 %v3064
        %v3073 = vmul.f32 %v2233, %v2969
        %v3074 = vmul.f32 %v2234, %v2970
        %v3075 = vmul.f32 %v2235, %v2971
        %v3076 = vmul.f32 %v2236, %v2972
        %v3077 = vmul.f32 %v2237, %v2973
        %v3078 = vmul.f32 %v2238, %v2974
        %v3079 = vmul.f32 %v2239, %v2975
        %v3080 = vmul.f32 %v2240, %v2976
        %3082 = vset.pattern.permute.xlu0 0
        %3083 = vperm.xlu0 %3082, %v3073
        %v3084 = vpop.permute.xlu0 %3083
        %3087 = vset.pattern.permute.xlu0 0
        %3088 = vperm.xlu0 %3087, %v3074
        %v3089 = vpop.permute.xlu0 %3088
        %3092 = vset.pattern.permute.xlu0 0
        %3093 = vperm.xlu0 %3092, %v3075
        %v3094 = vpop.permute.xlu0 %3093
        %3097 = vset.pattern.permute.xlu0 0
        %3098 = vperm.xlu0 %3097, %v3076
        %v3099 = vpop.permute.xlu0 %3098
        %3102 = vset.pattern.permute.xlu0 0
        %3103 = vperm.xlu0 %3102, %v3077
        %v3104 = vpop.permute.xlu0 %3103
        %3107 = vset.pattern.permute.xlu0 0
        %3108 = vperm.xlu0 %3107, %v3078
        %v3109 = vpop.permute.xlu0 %3108
        %3112 = vset.pattern.permute.xlu0 0
        %3113 = vperm.xlu0 %3112, %v3079
        %v3114 = vpop.permute.xlu0 %3113
        %3117 = vset.pattern.permute.xlu0 0
        %3118 = vperm.xlu0 %3117, %v3080
        %v3119 = vpop.permute.xlu0 %3118
        %v3121 = vmul.f32 %v3065, %v3084
        %v3122 = vmul.f32 %v3066, %v3089
        %v3123 = vmul.f32 %v3067, %v3094
        %v3124 = vmul.f32 %v3068, %v3099
        %v3125 = vmul.f32 %v3069, %v3104
        %v3126 = vmul.f32 %v3070, %v3109
        %v3127 = vmul.f32 %v3071, %v3114
        %v3128 = vmul.f32 %v3072, %v3119
        %v3129 = vadd.f32 %v2849, %v3121
        %v3130 = vadd.f32 %v2850, %v3122
        %v3131 = vadd.f32 %v2851, %v3123
        %v3132 = vadd.f32 %v2852, %v3124
        %v3133 = vadd.f32 %v2853, %v3125
        %v3134 = vadd.f32 %v2854, %v3126
        %v3135 = vadd.f32 %v2855, %v3127
        %v3136 = vadd.f32 %v2856, %v3128
        %vm3137 = vmand %vm2633, %vm2897
        %vm3138 = vmand %vm2634, %vm2898
        %vm3139 = vmand %vm2635, %vm2899
        %vm3140 = vmand %vm2636, %vm2900
        %vm3141 = vmand %vm2637, %vm2901
        %vm3142 = vmand %vm2638, %vm2902
        %vm3143 = vmand %vm2639, %vm2903
        %vm3144 = vmand %vm2640, %vm2904
        %vm3145 = vmand %vm3137, %vm2945
        %vm3146 = vmand %vm3138, %vm2946
        %vm3147 = vmand %vm3139, %vm2947
        %vm3148 = vmand %vm3140, %vm2948
        %vm3149 = vmand %vm3141, %vm2949
        %vm3150 = vmand %vm3142, %vm2950
        %vm3151 = vmand %vm3143, %vm2951
        %vm3152 = vmand %vm3144, %vm2952
        %v3153 = vsel %vm3145, 1, 0
        %v3154 = vsel %vm3146, 1, 0
        %v3155 = vsel %vm3147, 1, 0
        %v3156 = vsel %vm3148, 1, 0
        %v3157 = vsel %vm3149, 1, 0
        %v3158 = vsel %vm3150, 1, 0
        %v3159 = vsel %vm3151, 1, 0
        %v3160 = vsel %vm3152, 1, 0
        %v3161 = vcvt.s32.f32 %v3153
        %v3162 = vcvt.s32.f32 %v3154
        %v3163 = vcvt.s32.f32 %v3155
        %v3164 = vcvt.s32.f32 %v3156
        %v3165 = vcvt.s32.f32 %v3157
        %v3166 = vcvt.s32.f32 %v3158
        %v3167 = vcvt.s32.f32 %v3159
        %v3168 = vcvt.s32.f32 %v3160
        %v3169 = vadd.f32 %v2993, %v2698
        %v3170 = vadd.f32 %v2994, %v2700
        %v3171 = vadd.f32 %v2995, %v2702
        %v3172 = vadd.f32 %v2996, %v2704
        %v3173 = vadd.f32 %v2997, %v2706
        %v3174 = vadd.f32 %v2998, %v2708
        %v3175 = vadd.f32 %v2999, %v2710
        %v3176 = vadd.f32 %v3000, %v2712
        %3178 = vset.pattern.permute.xlu0 1
        %3179 = vperm.xlu0 %3178, %v3169
        %v3180 = vpop.permute.xlu0 %3179
        %3183 = vset.pattern.permute.xlu0 1
        %3184 = vperm.xlu0 %3183, %v3170
        %v3185 = vpop.permute.xlu0 %3184
        %3188 = vset.pattern.permute.xlu0 1
        %3189 = vperm.xlu0 %3188, %v3171
        %v3190 = vpop.permute.xlu0 %3189
        %3193 = vset.pattern.permute.xlu0 1
        %3194 = vperm.xlu0 %3193, %v3172
        %v3195 = vpop.permute.xlu0 %3194
        %3198 = vset.pattern.permute.xlu0 1
        %3199 = vperm.xlu0 %3198, %v3173
        %v3200 = vpop.permute.xlu0 %3199
        %3203 = vset.pattern.permute.xlu0 1
        %3204 = vperm.xlu0 %3203, %v3174
        %v3205 = vpop.permute.xlu0 %3204
        %3208 = vset.pattern.permute.xlu0 1
        %3209 = vperm.xlu0 %3208, %v3175
        %v3210 = vpop.permute.xlu0 %3209
        %3213 = vset.pattern.permute.xlu0 1
        %3214 = vperm.xlu0 %3213, %v3176
        %v3215 = vpop.permute.xlu0 %3214
        %vm3217 = vcmp.eq.f32.partialorder %v2136, %v3180
        %vm3218 = vcmp.eq.f32.partialorder %v2136, %v3185
        %vm3219 = vcmp.eq.f32.partialorder %v2136, %v3190
        %vm3220 = vcmp.eq.f32.partialorder %v2136, %v3195
        %vm3221 = vcmp.eq.f32.partialorder %v2136, %v3200
        %vm3222 = vcmp.eq.f32.partialorder %v2136, %v3205
        %vm3223 = vcmp.eq.f32.partialorder %v2136, %v3210
        %vm3224 = vcmp.eq.f32.partialorder %v2136, %v3215
        %v3225 = vsel %vm3217, 1, 0
        %v3226 = vsel %vm3218, 1, 0
        %v3227 = vsel %vm3219, 1, 0
        %v3228 = vsel %vm3220, 1, 0
        %v3229 = vsel %vm3221, 1, 0
        %v3230 = vsel %vm3222, 1, 0
        %v3231 = vsel %vm3223, 1, 0
        %v3232 = vsel %vm3224, 1, 0
        %v3233 = vcvt.s32.f32 %v3225
        %v3234 = vcvt.s32.f32 %v3226
        %v3235 = vcvt.s32.f32 %v3227
        %v3236 = vcvt.s32.f32 %v3228
        %v3237 = vcvt.s32.f32 %v3229
        %v3238 = vcvt.s32.f32 %v3230
        %v3239 = vcvt.s32.f32 %v3231
        %v3240 = vcvt.s32.f32 %v3232
        %v3241 = vmul.f32 %v2241, %v3161
        %v3242 = vmul.f32 %v2242, %v3162
        %v3243 = vmul.f32 %v2243, %v3163
        %v3244 = vmul.f32 %v2244, %v3164
        %v3245 = vmul.f32 %v2245, %v3165
        %v3246 = vmul.f32 %v2246, %v3166
        %v3247 = vmul.f32 %v2247, %v3167
        %v3248 = vmul.f32 %v2248, %v3168
        %3250 = vset.pattern.permute.xlu0 0
        %3251 = vperm.xlu0 %3250, %v3241
        %v3252 = vpop.permute.xlu0 %3251
        %3255 = vset.pattern.permute.xlu0 0
        %3256 = vperm.xlu0 %3255, %v3242
        %v3257 = vpop.permute.xlu0 %3256
        %3260 = vset.pattern.permute.xlu0 0
        %3261 = vperm.xlu0 %3260, %v3243
        %v3262 = vpop.permute.xlu0 %3261
        %3265 = vset.pattern.permute.xlu0 0
        %3266 = vperm.xlu0 %3265, %v3244
        %v3267 = vpop.permute.xlu0 %3266
        %3270 = vset.pattern.permute.xlu0 0
        %3271 = vperm.xlu0 %3270, %v3245
        %v3272 = vpop.permute.xlu0 %3271
        %3275 = vset.pattern.permute.xlu0 0
        %3276 = vperm.xlu0 %3275, %v3246
        %v3277 = vpop.permute.xlu0 %3276
        %3280 = vset.pattern.permute.xlu0 0
        %3281 = vperm.xlu0 %3280, %v3247
        %v3282 = vpop.permute.xlu0 %3281
        %3285 = vset.pattern.permute.xlu0 0
        %3286 = vperm.xlu0 %3285, %v3248
        %v3287 = vpop.permute.xlu0 %3286
        %v3289 = vmul.f32 %v3233, %v3252
        %v3290 = vmul.f32 %v3234, %v3257
        %v3291 = vmul.f32 %v3235, %v3262
        %v3292 = vmul.f32 %v3236, %v3267
        %v3293 = vmul.f32 %v3237, %v3272
        %v3294 = vmul.f32 %v3238, %v3277
        %v3295 = vmul.f32 %v3239, %v3282
        %v3296 = vmul.f32 %v3240, %v3287
        %v3297 = vadd.f32 %v3129, %v3289
        %v3298 = vadd.f32 %v3130, %v3290
        %v3299 = vadd.f32 %v3131, %v3291
        %v3300 = vadd.f32 %v3132, %v3292
        %v3301 = vadd.f32 %v3133, %v3293
        %v3302 = vadd.f32 %v3134, %v3294
        %v3303 = vadd.f32 %v3135, %v3295
        %v3304 = vadd.f32 %v3136, %v3296
        %v3305 = vmul.f32 %v3297, %v2016
        %v3306 = vmul.f32 %v3298, %v2019
        %v3307 = vmul.f32 %v3299, %v2022
        %v3308 = vmul.f32 %v3300, %v2025
        %v3309 = vmul.f32 %v3301, %v2028
        %v3310 = vmul.f32 %v3302, %v2031
        %v3311 = vmul.f32 %v3303, %v2034
        %v3312 = vmul.f32 %v3304, %v2037
        %v3313 = vld [vmem:[%s73] sm:$0xff]
        %v3314 = vld [vmem:[%s73 + $0x8] sm:$0xff]
        %v3315 = vld [vmem:[%s73 + $0x10] sm:$0xff]
        %v3316 = vld [vmem:[%s73 + $0x18] sm:$0xff]
        %v3317 = vld [vmem:[%s73 + $0x20] sm:$0xff]
        %v3318 = vld [vmem:[%s73 + $0x28] sm:$0xff]
        %v3319 = vld [vmem:[%s73 + $0x30] sm:$0xff]
        %v3320 = vld [vmem:[%s73 + $0x38] sm:$0xff]
        %v3321 = vld [vmem:[%s75] sm:$0xff]
        %v3322 = vld [vmem:[%s75 + $0x8] sm:$0xff]
        %v3323 = vld [vmem:[%s75 + $0x10] sm:$0xff]
        %v3324 = vld [vmem:[%s75 + $0x18] sm:$0xff]
        %v3325 = vld [vmem:[%s75 + $0x20] sm:$0xff]
        %v3326 = vld [vmem:[%s75 + $0x28] sm:$0xff]
        %v3327 = vld [vmem:[%s75 + $0x30] sm:$0xff]
        %v3328 = vld [vmem:[%s75 + $0x38] sm:$0xff]
        %v3329 = vld [vmem:[%s77] sm:$0xff]
        %v3330 = vld [vmem:[%s77 + $0x8] sm:$0xff]
        %v3331 = vld [vmem:[%s77 + $0x10] sm:$0xff]
        %v3332 = vld [vmem:[%s77 + $0x18] sm:$0xff]
        %v3333 = vld [vmem:[%s77 + $0x20] sm:$0xff]
        %v3334 = vld [vmem:[%s77 + $0x28] sm:$0xff]
        %v3335 = vld [vmem:[%s77 + $0x30] sm:$0xff]
        %v3336 = vld [vmem:[%s77 + $0x38] sm:$0xff]
        %v3337 = vmul.f32 %v1808, %v3313
        %v3338 = vmul.f32 %v1811, %v3314
        %v3339 = vmul.f32 %v1814, %v3315
        %v3340 = vmul.f32 %v1817, %v3316
        %v3341 = vmul.f32 %v1820, %v3317
        %v3342 = vmul.f32 %v1823, %v3318
        %v3343 = vmul.f32 %v1826, %v3319
        %v3344 = vmul.f32 %v1829, %v3320
        %v3345 = vsel %vm1263, %v3337, 0.0
        %3346 = vadd.xlane.f32.xlu0 %v3345
        %v3347 = vpop.xlane.xlu0 %3346
        %v3348 = vsel %vm1263, %v3338, 0.0
        %3349 = vadd.xlane.f32.xlu0 %v3348
        %v3350 = vpop.xlane.xlu0 %3349
        %v3351 = vsel %vm1263, %v3339, 0.0
        %3352 = vadd.xlane.f32.xlu0 %v3351
        %v3353 = vpop.xlane.xlu0 %3352
        %v3354 = vsel %vm1263, %v3340, 0.0
        %3355 = vadd.xlane.f32.xlu0 %v3354
        %v3356 = vpop.xlane.xlu0 %3355
        %v3357 = vsel %vm1263, %v3341, 0.0
        %3358 = vadd.xlane.f32.xlu0 %v3357
        %v3359 = vpop.xlane.xlu0 %3358
        %v3360 = vsel %vm1263, %v3342, 0.0
        %3361 = vadd.xlane.f32.xlu0 %v3360
        %v3362 = vpop.xlane.xlu0 %3361
        %v3363 = vsel %vm1263, %v3343, 0.0
        %3364 = vadd.xlane.f32.xlu0 %v3363
        %v3365 = vpop.xlane.xlu0 %3364
        %v3366 = vsel %vm1263, %v3344, 0.0
        %3367 = vadd.xlane.f32.xlu0 %v3366
        %v3368 = vpop.xlane.xlu0 %3367
        %v3369 = vmul.f32 %v1808, %v3321
        %v3370 = vmul.f32 %v1811, %v3322
        %v3371 = vmul.f32 %v1814, %v3323
        %v3372 = vmul.f32 %v1817, %v3324
        %v3373 = vmul.f32 %v1820, %v3325
        %v3374 = vmul.f32 %v1823, %v3326
        %v3375 = vmul.f32 %v1826, %v3327
        %v3376 = vmul.f32 %v1829, %v3328
        %v3377 = vsel %vm1263, %v3369, 0.0
        %3378 = vadd.xlane.f32.xlu0 %v3377
        %v3379 = vpop.xlane.xlu0 %3378
        %v3380 = vsel %vm1263, %v3370, 0.0
        %3381 = vadd.xlane.f32.xlu0 %v3380
        %v3382 = vpop.xlane.xlu0 %3381
        %v3383 = vsel %vm1263, %v3371, 0.0
        %3384 = vadd.xlane.f32.xlu0 %v3383
        %v3385 = vpop.xlane.xlu0 %3384
        %v3386 = vsel %vm1263, %v3372, 0.0
        %3387 = vadd.xlane.f32.xlu0 %v3386
        %v3388 = vpop.xlane.xlu0 %3387
        %v3389 = vsel %vm1263, %v3373, 0.0
        %3390 = vadd.xlane.f32.xlu0 %v3389
        %v3391 = vpop.xlane.xlu0 %3390
        %v3392 = vsel %vm1263, %v3374, 0.0
        %3393 = vadd.xlane.f32.xlu0 %v3392
        %v3394 = vpop.xlane.xlu0 %3393
        %v3395 = vsel %vm1263, %v3375, 0.0
        %3396 = vadd.xlane.f32.xlu0 %v3395
        %v3397 = vpop.xlane.xlu0 %3396
        %v3398 = vsel %vm1263, %v3376, 0.0
        %3399 = vadd.xlane.f32.xlu0 %v3398
        %v3400 = vpop.xlane.xlu0 %3399
        %v3401 = vmul.f32 %v1853, %v3329
        %v3402 = vmul.f32 %v1856, %v3330
        %v3403 = vmul.f32 %v1859, %v3331
        %v3404 = vmul.f32 %v1862, %v3332
        %v3405 = vmul.f32 %v1865, %v3333
        %v3406 = vmul.f32 %v1868, %v3334
        %v3407 = vmul.f32 %v1871, %v3335
        %v3408 = vmul.f32 %v1874, %v3336
        %v3409 = vsel %vm1728, %v3401, 0.0
        %3410 = vadd.xlane.f32.xlu0 %v3409
        %v3411 = vpop.xlane.xlu0 %3410
        %v3412 = vsel %vm1728, %v3402, 0.0
        %3413 = vadd.xlane.f32.xlu0 %v3412
        %v3414 = vpop.xlane.xlu0 %3413
        %v3415 = vsel %vm1728, %v3403, 0.0
        %3416 = vadd.xlane.f32.xlu0 %v3415
        %v3417 = vpop.xlane.xlu0 %3416
        %v3418 = vsel %vm1728, %v3404, 0.0
        %3419 = vadd.xlane.f32.xlu0 %v3418
        %v3420 = vpop.xlane.xlu0 %3419
        %v3421 = vsel %vm1728, %v3405, 0.0
        %3422 = vadd.xlane.f32.xlu0 %v3421
        %v3423 = vpop.xlane.xlu0 %3422
        %v3424 = vsel %vm1728, %v3406, 0.0
        %3425 = vadd.xlane.f32.xlu0 %v3424
        %v3426 = vpop.xlane.xlu0 %3425
        %v3427 = vsel %vm1728, %v3407, 0.0
        %3428 = vadd.xlane.f32.xlu0 %v3427
        %v3429 = vpop.xlane.xlu0 %3428
        %v3430 = vsel %vm1728, %v3408, 0.0
        %3431 = vadd.xlane.f32.xlu0 %v3430
        %v3432 = vpop.xlane.xlu0 %3431
        %v3433 = vmul.f32 %v3347, 0.25
        %v3434 = vmul.f32 %v3350, 0.25
        %v3435 = vmul.f32 %v3353, 0.25
        %v3436 = vmul.f32 %v3356, 0.25
        %v3437 = vmul.f32 %v3359, 0.25
        %v3438 = vmul.f32 %v3362, 0.25
        %v3439 = vmul.f32 %v3365, 0.25
        %v3440 = vmul.f32 %v3368, 0.25
        %v3441 = vadd.f32 %v1895, %v3433
        %v3442 = vadd.f32 %v1898, %v3434
        %v3443 = vadd.f32 %v1901, %v3435
        %v3444 = vadd.f32 %v1904, %v3436
        %v3445 = vadd.f32 %v1907, %v3437
        %v3446 = vadd.f32 %v1910, %v3438
        %v3447 = vadd.f32 %v1913, %v3439
        %v3448 = vadd.f32 %v1916, %v3440
        %v3449 = vmul.f32 %v3379, 0.25
        %v3450 = vmul.f32 %v3382, 0.25
        %v3451 = vmul.f32 %v3385, 0.25
        %v3452 = vmul.f32 %v3388, 0.25
        %v3453 = vmul.f32 %v3391, 0.25
        %v3454 = vmul.f32 %v3394, 0.25
        %v3455 = vmul.f32 %v3397, 0.25
        %v3456 = vmul.f32 %v3400, 0.25
        %v3457 = vadd.f32 %v1895, %v3449
        %v3458 = vadd.f32 %v1898, %v3450
        %v3459 = vadd.f32 %v1901, %v3451
        %v3460 = vadd.f32 %v1904, %v3452
        %v3461 = vadd.f32 %v1907, %v3453
        %v3462 = vadd.f32 %v1910, %v3454
        %v3463 = vadd.f32 %v1913, %v3455
        %v3464 = vadd.f32 %v1916, %v3456
        %v3465 = vmul.f32 %v3441, 4.0
        %v3466 = vmul.f32 %v3442, 4.0
        %v3467 = vmul.f32 %v3443, 4.0
        %v3468 = vmul.f32 %v3444, 4.0
        %v3469 = vmul.f32 %v3445, 4.0
        %v3470 = vmul.f32 %v3446, 4.0
        %v3471 = vmul.f32 %v3447, 4.0
        %v3472 = vmul.f32 %v3448, 4.0
        %v3473 = vsub.f32 %v3465, 0.5
        %v3474 = vsub.f32 %v3466, 0.5
        %v3475 = vsub.f32 %v3467, 0.5
        %v3476 = vsub.f32 %v3468, 0.5
        %v3477 = vsub.f32 %v3469, 0.5
        %v3478 = vsub.f32 %v3470, 0.5
        %v3479 = vsub.f32 %v3471, 0.5
        %v3480 = vsub.f32 %v3472, 0.5
        %v3481 = vmul.f32 %v3457, 4.0
        %v3482 = vmul.f32 %v3458, 4.0
        %v3483 = vmul.f32 %v3459, 4.0
        %v3484 = vmul.f32 %v3460, 4.0
        %v3485 = vmul.f32 %v3461, 4.0
        %v3486 = vmul.f32 %v3462, 4.0
        %v3487 = vmul.f32 %v3463, 4.0
        %v3488 = vmul.f32 %v3464, 4.0
        %v3489 = vsub.f32 %v3481, 0.5
        %v3490 = vsub.f32 %v3482, 0.5
        %v3491 = vsub.f32 %v3483, 0.5
        %v3492 = vsub.f32 %v3484, 0.5
        %v3493 = vsub.f32 %v3485, 0.5
        %v3494 = vsub.f32 %v3486, 0.5
        %v3495 = vsub.f32 %v3487, 0.5
        %v3496 = vsub.f32 %v3488, 0.5
        %v3497 = vfloor.f32 %v3473
        %v3498 = vfloor.f32 %v3474
        %v3499 = vfloor.f32 %v3475
        %v3500 = vfloor.f32 %v3476
        %v3501 = vfloor.f32 %v3477
        %v3502 = vfloor.f32 %v3478
        %v3503 = vfloor.f32 %v3479
        %v3504 = vfloor.f32 %v3480
        %v3505 = vfloor.f32 %v3489
        %v3506 = vfloor.f32 %v3490
        %v3507 = vfloor.f32 %v3491
        %v3508 = vfloor.f32 %v3492
        %v3509 = vfloor.f32 %v3493
        %v3510 = vfloor.f32 %v3494
        %v3511 = vfloor.f32 %v3495
        %v3512 = vfloor.f32 %v3496
        %v3513 = vsub.f32 %v3473, %v3497
        %v3514 = vsub.f32 %v3474, %v3498
        %v3515 = vsub.f32 %v3475, %v3499
        %v3516 = vsub.f32 %v3476, %v3500
        %v3517 = vsub.f32 %v3477, %v3501
        %v3518 = vsub.f32 %v3478, %v3502
        %v3519 = vsub.f32 %v3479, %v3503
        %v3520 = vsub.f32 %v3480, %v3504
        %v3521 = vsub.f32 %v3489, %v3505
        %v3522 = vsub.f32 %v3490, %v3506
        %v3523 = vsub.f32 %v3491, %v3507
        %v3524 = vsub.f32 %v3492, %v3508
        %v3525 = vsub.f32 %v3493, %v3509
        %v3526 = vsub.f32 %v3494, %v3510
        %v3527 = vsub.f32 %v3495, %v3511
        %v3528 = vsub.f32 %v3496, %v3512
        %v3529 = vsub.f32 1.0, %v3513
        %v3530 = vsub.f32 1.0, %v3514
        %v3531 = vsub.f32 1.0, %v3515
        %v3532 = vsub.f32 1.0, %v3516
        %v3533 = vsub.f32 1.0, %v3517
        %v3534 = vsub.f32 1.0, %v3518
        %v3535 = vsub.f32 1.0, %v3519
        %v3536 = vsub.f32 1.0, %v3520
        %v3537 = vsub.f32 1.0, %v3521
        %v3538 = vsub.f32 1.0, %v3522
        %v3539 = vsub.f32 1.0, %v3523
        %v3540 = vsub.f32 1.0, %v3524
        %v3541 = vsub.f32 1.0, %v3525
        %v3542 = vsub.f32 1.0, %v3526
        %v3543 = vsub.f32 1.0, %v3527
        %v3544 = vsub.f32 1.0, %v3528
        %3553 = vrot.lane.b32.xlu0 %v3537, 127
        %v3554 = vpop.permute.xlu0 %3553
        %3555 = vrot.lane.b32.xlu0 %v3538, 127
        %v3556 = vpop.permute.xlu0 %3555
        %3557 = vrot.lane.b32.xlu0 %v3539, 127
        %v3558 = vpop.permute.xlu0 %3557
        %3559 = vrot.lane.b32.xlu0 %v3540, 127
        %v3560 = vpop.permute.xlu0 %3559
        %3561 = vrot.lane.b32.xlu0 %v3541, 127
        %v3562 = vpop.permute.xlu0 %3561
        %3563 = vrot.lane.b32.xlu0 %v3542, 127
        %v3564 = vpop.permute.xlu0 %3563
        %3565 = vrot.lane.b32.xlu0 %v3543, 127
        %v3566 = vpop.permute.xlu0 %3565
        %3567 = vrot.lane.b32.xlu0 %v3544, 127
        %v3568 = vpop.permute.xlu0 %3567
        %v3577 = vmul.f32 %v3529, %v3554
        %v3578 = vmul.f32 %v3530, %v3556
        %v3579 = vmul.f32 %v3531, %v3558
        %v3580 = vmul.f32 %v3532, %v3560
        %v3581 = vmul.f32 %v3533, %v3562
        %v3582 = vmul.f32 %v3534, %v3564
        %v3583 = vmul.f32 %v3535, %v3566
        %v3584 = vmul.f32 %v3536, %v3568
        %v3585 = vmul.f32 %v3513, %v3554
        %v3586 = vmul.f32 %v3514, %v3556
        %v3587 = vmul.f32 %v3515, %v3558
        %v3588 = vmul.f32 %v3516, %v3560
        %v3589 = vmul.f32 %v3517, %v3562
        %v3590 = vmul.f32 %v3518, %v3564
        %v3591 = vmul.f32 %v3519, %v3566
        %v3592 = vmul.f32 %v3520, %v3568
        %3601 = vrot.lane.b32.xlu0 %v3521, 127
        %v3602 = vpop.permute.xlu0 %3601
        %3603 = vrot.lane.b32.xlu0 %v3522, 127
        %v3604 = vpop.permute.xlu0 %3603
        %3605 = vrot.lane.b32.xlu0 %v3523, 127
        %v3606 = vpop.permute.xlu0 %3605
        %3607 = vrot.lane.b32.xlu0 %v3524, 127
        %v3608 = vpop.permute.xlu0 %3607
        %3609 = vrot.lane.b32.xlu0 %v3525, 127
        %v3610 = vpop.permute.xlu0 %3609
        %3611 = vrot.lane.b32.xlu0 %v3526, 127
        %v3612 = vpop.permute.xlu0 %3611
        %3613 = vrot.lane.b32.xlu0 %v3527, 127
        %v3614 = vpop.permute.xlu0 %3613
        %3615 = vrot.lane.b32.xlu0 %v3528, 127
        %v3616 = vpop.permute.xlu0 %3615
        %v3625 = vmul.f32 %v3529, %v3602
        %v3626 = vmul.f32 %v3530, %v3604
        %v3627 = vmul.f32 %v3531, %v3606
        %v3628 = vmul.f32 %v3532, %v3608
        %v3629 = vmul.f32 %v3533, %v3610
        %v3630 = vmul.f32 %v3534, %v3612
        %v3631 = vmul.f32 %v3535, %v3614
        %v3632 = vmul.f32 %v3536, %v3616
        %v3633 = vmul.f32 %v3513, %v3602
        %v3634 = vmul.f32 %v3514, %v3604
        %v3635 = vmul.f32 %v3515, %v3606
        %v3636 = vmul.f32 %v3516, %v3608
        %v3637 = vmul.f32 %v3517, %v3610
        %v3638 = vmul.f32 %v3518, %v3612
        %v3639 = vmul.f32 %v3519, %v3614
        %v3640 = vmul.f32 %v3520, %v3616
        %v3641 = vadd.f32 %v3497, 0.0
        %v3642 = vadd.f32 %v3498, 0.0
        %v3643 = vadd.f32 %v3499, 0.0
        %v3644 = vadd.f32 %v3500, 0.0
        %v3645 = vadd.f32 %v3501, 0.0
        %v3646 = vadd.f32 %v3502, 0.0
        %v3647 = vadd.f32 %v3503, 0.0
        %v3648 = vadd.f32 %v3504, 0.0
        %v3649 = vadd.f32 %v3505, 0.0
        %v3650 = vadd.f32 %v3506, 0.0
        %v3651 = vadd.f32 %v3507, 0.0
        %v3652 = vadd.f32 %v3508, 0.0
        %v3653 = vadd.f32 %v3509, 0.0
        %v3654 = vadd.f32 %v3510, 0.0
        %v3655 = vadd.f32 %v3511, 0.0
        %v3656 = vadd.f32 %v3512, 0.0
        %vm3657 = vcmp.ge.f32.partialorder %v3641, 0.0
        %vm3658 = vcmp.ge.f32.partialorder %v3642, 0.0
        %vm3659 = vcmp.ge.f32.partialorder %v3643, 0.0
        %vm3660 = vcmp.ge.f32.partialorder %v3644, 0.0
        %vm3661 = vcmp.ge.f32.partialorder %v3645, 0.0
        %vm3662 = vcmp.ge.f32.partialorder %v3646, 0.0
        %vm3663 = vcmp.ge.f32.partialorder %v3647, 0.0
        %vm3664 = vcmp.ge.f32.partialorder %v3648, 0.0
        %vm3665 = vcmp.le.f32.partialorder %v3641, 3.0
        %vm3666 = vcmp.le.f32.partialorder %v3642, 3.0
        %vm3667 = vcmp.le.f32.partialorder %v3643, 3.0
        %vm3668 = vcmp.le.f32.partialorder %v3644, 3.0
        %vm3669 = vcmp.le.f32.partialorder %v3645, 3.0
        %vm3670 = vcmp.le.f32.partialorder %v3646, 3.0
        %vm3671 = vcmp.le.f32.partialorder %v3647, 3.0
        %vm3672 = vcmp.le.f32.partialorder %v3648, 3.0
        %vm3673 = vmand %vm3657, %vm3665
        %vm3674 = vmand %vm3658, %vm3666
        %vm3675 = vmand %vm3659, %vm3667
        %vm3676 = vmand %vm3660, %vm3668
        %vm3677 = vmand %vm3661, %vm3669
        %vm3678 = vmand %vm3662, %vm3670
        %vm3679 = vmand %vm3663, %vm3671
        %vm3680 = vmand %vm3664, %vm3672
        %vm3681 = vcmp.ge.f32.partialorder %v3649, 0.0
        %vm3682 = vcmp.ge.f32.partialorder %v3650, 0.0
        %vm3683 = vcmp.ge.f32.partialorder %v3651, 0.0
        %vm3684 = vcmp.ge.f32.partialorder %v3652, 0.0
        %vm3685 = vcmp.ge.f32.partialorder %v3653, 0.0
        %vm3686 = vcmp.ge.f32.partialorder %v3654, 0.0
        %vm3687 = vcmp.ge.f32.partialorder %v3655, 0.0
        %vm3688 = vcmp.ge.f32.partialorder %v3656, 0.0
        %v3689 = vsel %vm3681, 1, 0
        %v3690 = vsel %vm3682, 1, 0
        %v3691 = vsel %vm3683, 1, 0
        %v3692 = vsel %vm3684, 1, 0
        %v3693 = vsel %vm3685, 1, 0
        %v3694 = vsel %vm3686, 1, 0
        %v3695 = vsel %vm3687, 1, 0
        %v3696 = vsel %vm3688, 1, 0
        %3697 = vrot.lane.b32.xlu0 %v3689, 127
        %v3698 = vpop.permute.xlu0 %3697
        %3699 = vrot.lane.b32.xlu0 %v3690, 127
        %v3700 = vpop.permute.xlu0 %3699
        %3701 = vrot.lane.b32.xlu0 %v3691, 127
        %v3702 = vpop.permute.xlu0 %3701
        %3703 = vrot.lane.b32.xlu0 %v3692, 127
        %v3704 = vpop.permute.xlu0 %3703
        %3705 = vrot.lane.b32.xlu0 %v3693, 127
        %v3706 = vpop.permute.xlu0 %3705
        %3707 = vrot.lane.b32.xlu0 %v3694, 127
        %v3708 = vpop.permute.xlu0 %3707
        %3709 = vrot.lane.b32.xlu0 %v3695, 127
        %v3710 = vpop.permute.xlu0 %3709
        %3711 = vrot.lane.b32.xlu0 %v3696, 127
        %v3712 = vpop.permute.xlu0 %3711
        %vm3713 = vcmp.ne.s32.totalorder %v3698, 0
        %vm3714 = vcmp.ne.s32.totalorder %v3700, 0
        %vm3715 = vcmp.ne.s32.totalorder %v3702, 0
        %vm3716 = vcmp.ne.s32.totalorder %v3704, 0
        %vm3717 = vcmp.ne.s32.totalorder %v3706, 0
        %vm3718 = vcmp.ne.s32.totalorder %v3708, 0
        %vm3719 = vcmp.ne.s32.totalorder %v3710, 0
        %vm3720 = vcmp.ne.s32.totalorder %v3712, 0
        %vm3721 = vmand %vm3673, %vm3713
        %vm3722 = vmand %vm3674, %vm3714
        %vm3723 = vmand %vm3675, %vm3715
        %vm3724 = vmand %vm3676, %vm3716
        %vm3725 = vmand %vm3677, %vm3717
        %vm3726 = vmand %vm3678, %vm3718
        %vm3727 = vmand %vm3679, %vm3719
        %vm3728 = vmand %vm3680, %vm3720
        %vm3729 = vcmp.le.f32.partialorder %v3649, 3.0
        %vm3730 = vcmp.le.f32.partialorder %v3650, 3.0
        %vm3731 = vcmp.le.f32.partialorder %v3651, 3.0
        %vm3732 = vcmp.le.f32.partialorder %v3652, 3.0
        %vm3733 = vcmp.le.f32.partialorder %v3653, 3.0
        %vm3734 = vcmp.le.f32.partialorder %v3654, 3.0
        %vm3735 = vcmp.le.f32.partialorder %v3655, 3.0
        %vm3736 = vcmp.le.f32.partialorder %v3656, 3.0
        %v3737 = vsel %vm3729, 1, 0
        %v3738 = vsel %vm3730, 1, 0
        %v3739 = vsel %vm3731, 1, 0
        %v3740 = vsel %vm3732, 1, 0
        %v3741 = vsel %vm3733, 1, 0
        %v3742 = vsel %vm3734, 1, 0
        %v3743 = vsel %vm3735, 1, 0
        %v3744 = vsel %vm3736, 1, 0
        %3745 = vrot.lane.b32.xlu0 %v3737, 127
        %v3746 = vpop.permute.xlu0 %3745
        %3747 = vrot.lane.b32.xlu0 %v3738, 127
        %v3748 = vpop.permute.xlu0 %3747
        %3749 = vrot.lane.b32.xlu0 %v3739, 127
        %v3750 = vpop.permute.xlu0 %3749
        %3751 = vrot.lane.b32.xlu0 %v3740, 127
        %v3752 = vpop.permute.xlu0 %3751
        %3753 = vrot.lane.b32.xlu0 %v3741, 127
        %v3754 = vpop.permute.xlu0 %3753
        %3755 = vrot.lane.b32.xlu0 %v3742, 127
        %v3756 = vpop.permute.xlu0 %3755
        %3757 = vrot.lane.b32.xlu0 %v3743, 127
        %v3758 = vpop.permute.xlu0 %3757
        %3759 = vrot.lane.b32.xlu0 %v3744, 127
        %v3760 = vpop.permute.xlu0 %3759
        %vm3761 = vcmp.ne.s32.totalorder %v3746, 0
        %vm3762 = vcmp.ne.s32.totalorder %v3748, 0
        %vm3763 = vcmp.ne.s32.totalorder %v3750, 0
        %vm3764 = vcmp.ne.s32.totalorder %v3752, 0
        %vm3765 = vcmp.ne.s32.totalorder %v3754, 0
        %vm3766 = vcmp.ne.s32.totalorder %v3756, 0
        %vm3767 = vcmp.ne.s32.totalorder %v3758, 0
        %vm3768 = vcmp.ne.s32.totalorder %v3760, 0
        %vm3769 = vmand %vm3721, %vm3761
        %vm3770 = vmand %vm3722, %vm3762
        %vm3771 = vmand %vm3723, %vm3763
        %vm3772 = vmand %vm3724, %vm3764
        %vm3773 = vmand %vm3725, %vm3765
        %vm3774 = vmand %vm3726, %vm3766
        %vm3775 = vmand %vm3727, %vm3767
        %vm3776 = vmand %vm3728, %vm3768
        %v3777 = vsel %vm3769, 1, 0
        %v3778 = vsel %vm3770, 1, 0
        %v3779 = vsel %vm3771, 1, 0
        %v3780 = vsel %vm3772, 1, 0
        %v3781 = vsel %vm3773, 1, 0
        %v3782 = vsel %vm3774, 1, 0
        %v3783 = vsel %vm3775, 1, 0
        %v3784 = vsel %vm3776, 1, 0
        %v3785 = vcvt.s32.f32 %v3777
        %v3786 = vcvt.s32.f32 %v3778
        %v3787 = vcvt.s32.f32 %v3779
        %v3788 = vcvt.s32.f32 %v3780
        %v3789 = vcvt.s32.f32 %v3781
        %v3790 = vcvt.s32.f32 %v3782
        %v3791 = vcvt.s32.f32 %v3783
        %v3792 = vcvt.s32.f32 %v3784
        %v3793 = vmax.f32 %v3641, 0.0
        %v3794 = vmax.f32 %v3642, 0.0
        %v3795 = vmax.f32 %v3643, 0.0
        %v3796 = vmax.f32 %v3644, 0.0
        %v3797 = vmax.f32 %v3645, 0.0
        %v3798 = vmax.f32 %v3646, 0.0
        %v3799 = vmax.f32 %v3647, 0.0
        %v3800 = vmax.f32 %v3648, 0.0
        %v3801 = vmin.f32 %v3793, 3.0
        %v3802 = vmin.f32 %v3794, 3.0
        %v3803 = vmin.f32 %v3795, 3.0
        %v3804 = vmin.f32 %v3796, 3.0
        %v3805 = vmin.f32 %v3797, 3.0
        %v3806 = vmin.f32 %v3798, 3.0
        %v3807 = vmin.f32 %v3799, 3.0
        %v3808 = vmin.f32 %v3800, 3.0
        %v3809 = vmax.f32 %v3649, 0.0
        %v3810 = vmax.f32 %v3650, 0.0
        %v3811 = vmax.f32 %v3651, 0.0
        %v3812 = vmax.f32 %v3652, 0.0
        %v3813 = vmax.f32 %v3653, 0.0
        %v3814 = vmax.f32 %v3654, 0.0
        %v3815 = vmax.f32 %v3655, 0.0
        %v3816 = vmax.f32 %v3656, 0.0
        %v3817 = vmin.f32 %v3809, 3.0
        %v3818 = vmin.f32 %v3810, 3.0
        %v3819 = vmin.f32 %v3811, 3.0
        %v3820 = vmin.f32 %v3812, 3.0
        %v3821 = vmin.f32 %v3813, 3.0
        %v3822 = vmin.f32 %v3814, 3.0
        %v3823 = vmin.f32 %v3815, 3.0
        %v3824 = vmin.f32 %v3816, 3.0
        %v3825 = vmul.f32 %v3817, 4.0
        %v3826 = vmul.f32 %v3818, 4.0
        %v3827 = vmul.f32 %v3819, 4.0
        %v3828 = vmul.f32 %v3820, 4.0
        %v3829 = vmul.f32 %v3821, 4.0
        %v3830 = vmul.f32 %v3822, 4.0
        %v3831 = vmul.f32 %v3823, 4.0
        %v3832 = vmul.f32 %v3824, 4.0
        %3841 = vrot.lane.b32.xlu0 %v3801, 1
        %v3842 = vpop.permute.xlu0 %3841
        %3843 = vrot.lane.b32.xlu0 %v3802, 1
        %v3844 = vpop.permute.xlu0 %3843
        %3845 = vrot.lane.b32.xlu0 %v3803, 1
        %v3846 = vpop.permute.xlu0 %3845
        %3847 = vrot.lane.b32.xlu0 %v3804, 1
        %v3848 = vpop.permute.xlu0 %3847
        %3849 = vrot.lane.b32.xlu0 %v3805, 1
        %v3850 = vpop.permute.xlu0 %3849
        %3851 = vrot.lane.b32.xlu0 %v3806, 1
        %v3852 = vpop.permute.xlu0 %3851
        %3853 = vrot.lane.b32.xlu0 %v3807, 1
        %v3854 = vpop.permute.xlu0 %3853
        %3855 = vrot.lane.b32.xlu0 %v3808, 1
        %v3856 = vpop.permute.xlu0 %3855
        %v3865 = vadd.f32 %v3825, %v3842
        %v3866 = vadd.f32 %v3826, %v3844
        %v3867 = vadd.f32 %v3827, %v3846
        %v3868 = vadd.f32 %v3828, %v3848
        %v3869 = vadd.f32 %v3829, %v3850
        %v3870 = vadd.f32 %v3830, %v3852
        %v3871 = vadd.f32 %v3831, %v3854
        %v3872 = vadd.f32 %v3832, %v3856
        %3874 = vset.pattern.permute.xlu0 3
        %3875 = vperm.xlu0 %3874, %v3865
        %v3876 = vpop.permute.xlu0 %3875
        %3879 = vset.pattern.permute.xlu0 3
        %3880 = vperm.xlu0 %3879, %v3866
        %v3881 = vpop.permute.xlu0 %3880
        %3884 = vset.pattern.permute.xlu0 3
        %3885 = vperm.xlu0 %3884, %v3867
        %v3886 = vpop.permute.xlu0 %3885
        %3889 = vset.pattern.permute.xlu0 3
        %3890 = vperm.xlu0 %3889, %v3868
        %v3891 = vpop.permute.xlu0 %3890
        %3894 = vset.pattern.permute.xlu0 3
        %3895 = vperm.xlu0 %3894, %v3869
        %v3896 = vpop.permute.xlu0 %3895
        %3899 = vset.pattern.permute.xlu0 3
        %3900 = vperm.xlu0 %3899, %v3870
        %v3901 = vpop.permute.xlu0 %3900
        %3904 = vset.pattern.permute.xlu0 3
        %3905 = vperm.xlu0 %3904, %v3871
        %v3906 = vpop.permute.xlu0 %3905
        %3909 = vset.pattern.permute.xlu0 3
        %3910 = vperm.xlu0 %3909, %v3872
        %v3911 = vpop.permute.xlu0 %3910
        %vm3913 = vcmp.eq.f32.partialorder %v2136, %v3876
        %vm3914 = vcmp.eq.f32.partialorder %v2136, %v3881
        %vm3915 = vcmp.eq.f32.partialorder %v2136, %v3886
        %vm3916 = vcmp.eq.f32.partialorder %v2136, %v3891
        %vm3917 = vcmp.eq.f32.partialorder %v2136, %v3896
        %vm3918 = vcmp.eq.f32.partialorder %v2136, %v3901
        %vm3919 = vcmp.eq.f32.partialorder %v2136, %v3906
        %vm3920 = vcmp.eq.f32.partialorder %v2136, %v3911
        %v3921 = vsel %vm3913, 1, 0
        %v3922 = vsel %vm3914, 1, 0
        %v3923 = vsel %vm3915, 1, 0
        %v3924 = vsel %vm3916, 1, 0
        %v3925 = vsel %vm3917, 1, 0
        %v3926 = vsel %vm3918, 1, 0
        %v3927 = vsel %vm3919, 1, 0
        %v3928 = vsel %vm3920, 1, 0
        %v3929 = vcvt.s32.f32 %v3921
        %v3930 = vcvt.s32.f32 %v3922
        %v3931 = vcvt.s32.f32 %v3923
        %v3932 = vcvt.s32.f32 %v3924
        %v3933 = vcvt.s32.f32 %v3925
        %v3934 = vcvt.s32.f32 %v3926
        %v3935 = vcvt.s32.f32 %v3927
        %v3936 = vcvt.s32.f32 %v3928
        %v3937 = vmul.f32 %v3577, %v3785
        %v3938 = vmul.f32 %v3578, %v3786
        %v3939 = vmul.f32 %v3579, %v3787
        %v3940 = vmul.f32 %v3580, %v3788
        %v3941 = vmul.f32 %v3581, %v3789
        %v3942 = vmul.f32 %v3582, %v3790
        %v3943 = vmul.f32 %v3583, %v3791
        %v3944 = vmul.f32 %v3584, %v3792
        %3946 = vset.pattern.permute.xlu0 2
        %3947 = vperm.xlu0 %3946, %v3937
        %v3948 = vpop.permute.xlu0 %3947
        %3951 = vset.pattern.permute.xlu0 2
        %3952 = vperm.xlu0 %3951, %v3938
        %v3953 = vpop.permute.xlu0 %3952
        %3956 = vset.pattern.permute.xlu0 2
        %3957 = vperm.xlu0 %3956, %v3939
        %v3958 = vpop.permute.xlu0 %3957
        %3961 = vset.pattern.permute.xlu0 2
        %3962 = vperm.xlu0 %3961, %v3940
        %v3963 = vpop.permute.xlu0 %3962
        %3966 = vset.pattern.permute.xlu0 2
        %3967 = vperm.xlu0 %3966, %v3941
        %v3968 = vpop.permute.xlu0 %3967
        %3971 = vset.pattern.permute.xlu0 2
        %3972 = vperm.xlu0 %3971, %v3942
        %v3973 = vpop.permute.xlu0 %3972
        %3976 = vset.pattern.permute.xlu0 2
        %3977 = vperm.xlu0 %3976, %v3943
        %v3978 = vpop.permute.xlu0 %3977
        %3981 = vset.pattern.permute.xlu0 2
        %3982 = vperm.xlu0 %3981, %v3944
        %v3983 = vpop.permute.xlu0 %3982
        %v3985 = vmul.f32 %v3929, %v3948
        %v3986 = vmul.f32 %v3930, %v3953
        %v3987 = vmul.f32 %v3931, %v3958
        %v3988 = vmul.f32 %v3932, %v3963
        %v3989 = vmul.f32 %v3933, %v3968
        %v3990 = vmul.f32 %v3934, %v3973
        %v3991 = vmul.f32 %v3935, %v3978
        %v3992 = vmul.f32 %v3936, %v3983
        %v3993 = vadd.f32 %v3985, 0.0
        %v3994 = vadd.f32 %v3986, 0.0
        %v3995 = vadd.f32 %v3987, 0.0
        %v3996 = vadd.f32 %v3988, 0.0
        %v3997 = vadd.f32 %v3989, 0.0
        %v3998 = vadd.f32 %v3990, 0.0
        %v3999 = vadd.f32 %v3991, 0.0
        %v4000 = vadd.f32 %v3992, 0.0
        %v4001 = vadd.f32 %v3497, 1.0
        %v4002 = vadd.f32 %v3498, 1.0
        %v4003 = vadd.f32 %v3499, 1.0
        %v4004 = vadd.f32 %v3500, 1.0
        %v4005 = vadd.f32 %v3501, 1.0
        %v4006 = vadd.f32 %v3502, 1.0
        %v4007 = vadd.f32 %v3503, 1.0
        %v4008 = vadd.f32 %v3504, 1.0
        %vm4009 = vcmp.ge.f32.partialorder %v4001, 0.0
        %vm4010 = vcmp.ge.f32.partialorder %v4002, 0.0
        %vm4011 = vcmp.ge.f32.partialorder %v4003, 0.0
        %vm4012 = vcmp.ge.f32.partialorder %v4004, 0.0
        %vm4013 = vcmp.ge.f32.partialorder %v4005, 0.0
        %vm4014 = vcmp.ge.f32.partialorder %v4006, 0.0
        %vm4015 = vcmp.ge.f32.partialorder %v4007, 0.0
        %vm4016 = vcmp.ge.f32.partialorder %v4008, 0.0
        %vm4017 = vcmp.le.f32.partialorder %v4001, 3.0
        %vm4018 = vcmp.le.f32.partialorder %v4002, 3.0
        %vm4019 = vcmp.le.f32.partialorder %v4003, 3.0
        %vm4020 = vcmp.le.f32.partialorder %v4004, 3.0
        %vm4021 = vcmp.le.f32.partialorder %v4005, 3.0
        %vm4022 = vcmp.le.f32.partialorder %v4006, 3.0
        %vm4023 = vcmp.le.f32.partialorder %v4007, 3.0
        %vm4024 = vcmp.le.f32.partialorder %v4008, 3.0
        %vm4025 = vmand %vm4009, %vm4017
        %vm4026 = vmand %vm4010, %vm4018
        %vm4027 = vmand %vm4011, %vm4019
        %vm4028 = vmand %vm4012, %vm4020
        %vm4029 = vmand %vm4013, %vm4021
        %vm4030 = vmand %vm4014, %vm4022
        %vm4031 = vmand %vm4015, %vm4023
        %vm4032 = vmand %vm4016, %vm4024
        %vm4033 = vmand %vm4025, %vm3713
        %vm4034 = vmand %vm4026, %vm3714
        %vm4035 = vmand %vm4027, %vm3715
        %vm4036 = vmand %vm4028, %vm3716
        %vm4037 = vmand %vm4029, %vm3717
        %vm4038 = vmand %vm4030, %vm3718
        %vm4039 = vmand %vm4031, %vm3719
        %vm4040 = vmand %vm4032, %vm3720
        %vm4041 = vmand %vm4033, %vm3761
        %vm4042 = vmand %vm4034, %vm3762
        %vm4043 = vmand %vm4035, %vm3763
        %vm4044 = vmand %vm4036, %vm3764
        %vm4045 = vmand %vm4037, %vm3765
        %vm4046 = vmand %vm4038, %vm3766
        %vm4047 = vmand %vm4039, %vm3767
        %vm4048 = vmand %vm4040, %vm3768
        %v4049 = vsel %vm4041, 1, 0
        %v4050 = vsel %vm4042, 1, 0
        %v4051 = vsel %vm4043, 1, 0
        %v4052 = vsel %vm4044, 1, 0
        %v4053 = vsel %vm4045, 1, 0
        %v4054 = vsel %vm4046, 1, 0
        %v4055 = vsel %vm4047, 1, 0
        %v4056 = vsel %vm4048, 1, 0
        %v4057 = vcvt.s32.f32 %v4049
        %v4058 = vcvt.s32.f32 %v4050
        %v4059 = vcvt.s32.f32 %v4051
        %v4060 = vcvt.s32.f32 %v4052
        %v4061 = vcvt.s32.f32 %v4053
        %v4062 = vcvt.s32.f32 %v4054
        %v4063 = vcvt.s32.f32 %v4055
        %v4064 = vcvt.s32.f32 %v4056
        %v4065 = vmax.f32 %v4001, 0.0
        %v4066 = vmax.f32 %v4002, 0.0
        %v4067 = vmax.f32 %v4003, 0.0
        %v4068 = vmax.f32 %v4004, 0.0
        %v4069 = vmax.f32 %v4005, 0.0
        %v4070 = vmax.f32 %v4006, 0.0
        %v4071 = vmax.f32 %v4007, 0.0
        %v4072 = vmax.f32 %v4008, 0.0
        %v4073 = vmin.f32 %v4065, 3.0
        %v4074 = vmin.f32 %v4066, 3.0
        %v4075 = vmin.f32 %v4067, 3.0
        %v4076 = vmin.f32 %v4068, 3.0
        %v4077 = vmin.f32 %v4069, 3.0
        %v4078 = vmin.f32 %v4070, 3.0
        %v4079 = vmin.f32 %v4071, 3.0
        %v4080 = vmin.f32 %v4072, 3.0
        %4089 = vrot.lane.b32.xlu0 %v4073, 1
        %v4090 = vpop.permute.xlu0 %4089
        %4091 = vrot.lane.b32.xlu0 %v4074, 1
        %v4092 = vpop.permute.xlu0 %4091
        %4093 = vrot.lane.b32.xlu0 %v4075, 1
        %v4094 = vpop.permute.xlu0 %4093
        %4095 = vrot.lane.b32.xlu0 %v4076, 1
        %v4096 = vpop.permute.xlu0 %4095
        %4097 = vrot.lane.b32.xlu0 %v4077, 1
        %v4098 = vpop.permute.xlu0 %4097
        %4099 = vrot.lane.b32.xlu0 %v4078, 1
        %v4100 = vpop.permute.xlu0 %4099
        %4101 = vrot.lane.b32.xlu0 %v4079, 1
        %v4102 = vpop.permute.xlu0 %4101
        %4103 = vrot.lane.b32.xlu0 %v4080, 1
        %v4104 = vpop.permute.xlu0 %4103
        %v4113 = vadd.f32 %v3825, %v4090
        %v4114 = vadd.f32 %v3826, %v4092
        %v4115 = vadd.f32 %v3827, %v4094
        %v4116 = vadd.f32 %v3828, %v4096
        %v4117 = vadd.f32 %v3829, %v4098
        %v4118 = vadd.f32 %v3830, %v4100
        %v4119 = vadd.f32 %v3831, %v4102
        %v4120 = vadd.f32 %v3832, %v4104
        %4122 = vset.pattern.permute.xlu0 3
        %4123 = vperm.xlu0 %4122, %v4113
        %v4124 = vpop.permute.xlu0 %4123
        %4127 = vset.pattern.permute.xlu0 3
        %4128 = vperm.xlu0 %4127, %v4114
        %v4129 = vpop.permute.xlu0 %4128
        %4132 = vset.pattern.permute.xlu0 3
        %4133 = vperm.xlu0 %4132, %v4115
        %v4134 = vpop.permute.xlu0 %4133
        %4137 = vset.pattern.permute.xlu0 3
        %4138 = vperm.xlu0 %4137, %v4116
        %v4139 = vpop.permute.xlu0 %4138
        %4142 = vset.pattern.permute.xlu0 3
        %4143 = vperm.xlu0 %4142, %v4117
        %v4144 = vpop.permute.xlu0 %4143
        %4147 = vset.pattern.permute.xlu0 3
        %4148 = vperm.xlu0 %4147, %v4118
        %v4149 = vpop.permute.xlu0 %4148
        %4152 = vset.pattern.permute.xlu0 3
        %4153 = vperm.xlu0 %4152, %v4119
        %v4154 = vpop.permute.xlu0 %4153
        %4157 = vset.pattern.permute.xlu0 3
        %4158 = vperm.xlu0 %4157, %v4120
        %v4159 = vpop.permute.xlu0 %4158
        %vm4161 = vcmp.eq.f32.partialorder %v2136, %v4124
        %vm4162 = vcmp.eq.f32.partialorder %v2136, %v4129
        %vm4163 = vcmp.eq.f32.partialorder %v2136, %v4134
        %vm4164 = vcmp.eq.f32.partialorder %v2136, %v4139
        %vm4165 = vcmp.eq.f32.partialorder %v2136, %v4144
        %vm4166 = vcmp.eq.f32.partialorder %v2136, %v4149
        %vm4167 = vcmp.eq.f32.partialorder %v2136, %v4154
        %vm4168 = vcmp.eq.f32.partialorder %v2136, %v4159
        %v4169 = vsel %vm4161, 1, 0
        %v4170 = vsel %vm4162, 1, 0
        %v4171 = vsel %vm4163, 1, 0
        %v4172 = vsel %vm4164, 1, 0
        %v4173 = vsel %vm4165, 1, 0
        %v4174 = vsel %vm4166, 1, 0
        %v4175 = vsel %vm4167, 1, 0
        %v4176 = vsel %vm4168, 1, 0
        %v4177 = vcvt.s32.f32 %v4169
        %v4178 = vcvt.s32.f32 %v4170
        %v4179 = vcvt.s32.f32 %v4171
        %v4180 = vcvt.s32.f32 %v4172
        %v4181 = vcvt.s32.f32 %v4173
        %v4182 = vcvt.s32.f32 %v4174
        %v4183 = vcvt.s32.f32 %v4175
        %v4184 = vcvt.s32.f32 %v4176
        %v4185 = vmul.f32 %v3585, %v4057
        %v4186 = vmul.f32 %v3586, %v4058
        %v4187 = vmul.f32 %v3587, %v4059
        %v4188 = vmul.f32 %v3588, %v4060
        %v4189 = vmul.f32 %v3589, %v4061
        %v4190 = vmul.f32 %v3590, %v4062
        %v4191 = vmul.f32 %v3591, %v4063
        %v4192 = vmul.f32 %v3592, %v4064
        %4194 = vset.pattern.permute.xlu0 2
        %4195 = vperm.xlu0 %4194, %v4185
        %v4196 = vpop.permute.xlu0 %4195
        %4199 = vset.pattern.permute.xlu0 2
        %4200 = vperm.xlu0 %4199, %v4186
        %v4201 = vpop.permute.xlu0 %4200
        %4204 = vset.pattern.permute.xlu0 2
        %4205 = vperm.xlu0 %4204, %v4187
        %v4206 = vpop.permute.xlu0 %4205
        %4209 = vset.pattern.permute.xlu0 2
        %4210 = vperm.xlu0 %4209, %v4188
        %v4211 = vpop.permute.xlu0 %4210
        %4214 = vset.pattern.permute.xlu0 2
        %4215 = vperm.xlu0 %4214, %v4189
        %v4216 = vpop.permute.xlu0 %4215
        %4219 = vset.pattern.permute.xlu0 2
        %4220 = vperm.xlu0 %4219, %v4190
        %v4221 = vpop.permute.xlu0 %4220
        %4224 = vset.pattern.permute.xlu0 2
        %4225 = vperm.xlu0 %4224, %v4191
        %v4226 = vpop.permute.xlu0 %4225
        %4229 = vset.pattern.permute.xlu0 2
        %4230 = vperm.xlu0 %4229, %v4192
        %v4231 = vpop.permute.xlu0 %4230
        %v4233 = vmul.f32 %v4177, %v4196
        %v4234 = vmul.f32 %v4178, %v4201
        %v4235 = vmul.f32 %v4179, %v4206
        %v4236 = vmul.f32 %v4180, %v4211
        %v4237 = vmul.f32 %v4181, %v4216
        %v4238 = vmul.f32 %v4182, %v4221
        %v4239 = vmul.f32 %v4183, %v4226
        %v4240 = vmul.f32 %v4184, %v4231
        %v4241 = vadd.f32 %v3993, %v4233
        %v4242 = vadd.f32 %v3994, %v4234
        %v4243 = vadd.f32 %v3995, %v4235
        %v4244 = vadd.f32 %v3996, %v4236
        %v4245 = vadd.f32 %v3997, %v4237
        %v4246 = vadd.f32 %v3998, %v4238
        %v4247 = vadd.f32 %v3999, %v4239
        %v4248 = vadd.f32 %v4000, %v4240
        %v4249 = vadd.f32 %v3505, 1.0
        %v4250 = vadd.f32 %v3506, 1.0
        %v4251 = vadd.f32 %v3507, 1.0
        %v4252 = vadd.f32 %v3508, 1.0
        %v4253 = vadd.f32 %v3509, 1.0
        %v4254 = vadd.f32 %v3510, 1.0
        %v4255 = vadd.f32 %v3511, 1.0
        %v4256 = vadd.f32 %v3512, 1.0
        %vm4257 = vcmp.ge.f32.partialorder %v4249, 0.0
        %vm4258 = vcmp.ge.f32.partialorder %v4250, 0.0
        %vm4259 = vcmp.ge.f32.partialorder %v4251, 0.0
        %vm4260 = vcmp.ge.f32.partialorder %v4252, 0.0
        %vm4261 = vcmp.ge.f32.partialorder %v4253, 0.0
        %vm4262 = vcmp.ge.f32.partialorder %v4254, 0.0
        %vm4263 = vcmp.ge.f32.partialorder %v4255, 0.0
        %vm4264 = vcmp.ge.f32.partialorder %v4256, 0.0
        %v4265 = vsel %vm4257, 1, 0
        %v4266 = vsel %vm4258, 1, 0
        %v4267 = vsel %vm4259, 1, 0
        %v4268 = vsel %vm4260, 1, 0
        %v4269 = vsel %vm4261, 1, 0
        %v4270 = vsel %vm4262, 1, 0
        %v4271 = vsel %vm4263, 1, 0
        %v4272 = vsel %vm4264, 1, 0
        %4273 = vrot.lane.b32.xlu0 %v4265, 127
        %v4274 = vpop.permute.xlu0 %4273
        %4275 = vrot.lane.b32.xlu0 %v4266, 127
        %v4276 = vpop.permute.xlu0 %4275
        %4277 = vrot.lane.b32.xlu0 %v4267, 127
        %v4278 = vpop.permute.xlu0 %4277
        %4279 = vrot.lane.b32.xlu0 %v4268, 127
        %v4280 = vpop.permute.xlu0 %4279
        %4281 = vrot.lane.b32.xlu0 %v4269, 127
        %v4282 = vpop.permute.xlu0 %4281
        %4283 = vrot.lane.b32.xlu0 %v4270, 127
        %v4284 = vpop.permute.xlu0 %4283
        %4285 = vrot.lane.b32.xlu0 %v4271, 127
        %v4286 = vpop.permute.xlu0 %4285
        %4287 = vrot.lane.b32.xlu0 %v4272, 127
        %v4288 = vpop.permute.xlu0 %4287
        %vm4289 = vcmp.ne.s32.totalorder %v4274, 0
        %vm4290 = vcmp.ne.s32.totalorder %v4276, 0
        %vm4291 = vcmp.ne.s32.totalorder %v4278, 0
        %vm4292 = vcmp.ne.s32.totalorder %v4280, 0
        %vm4293 = vcmp.ne.s32.totalorder %v4282, 0
        %vm4294 = vcmp.ne.s32.totalorder %v4284, 0
        %vm4295 = vcmp.ne.s32.totalorder %v4286, 0
        %vm4296 = vcmp.ne.s32.totalorder %v4288, 0
        %vm4297 = vmand %vm3673, %vm4289
        %vm4298 = vmand %vm3674, %vm4290
        %vm4299 = vmand %vm3675, %vm4291
        %vm4300 = vmand %vm3676, %vm4292
        %vm4301 = vmand %vm3677, %vm4293
        %vm4302 = vmand %vm3678, %vm4294
        %vm4303 = vmand %vm3679, %vm4295
        %vm4304 = vmand %vm3680, %vm4296
        %vm4305 = vcmp.le.f32.partialorder %v4249, 3.0
        %vm4306 = vcmp.le.f32.partialorder %v4250, 3.0
        %vm4307 = vcmp.le.f32.partialorder %v4251, 3.0
        %vm4308 = vcmp.le.f32.partialorder %v4252, 3.0
        %vm4309 = vcmp.le.f32.partialorder %v4253, 3.0
        %vm4310 = vcmp.le.f32.partialorder %v4254, 3.0
        %vm4311 = vcmp.le.f32.partialorder %v4255, 3.0
        %vm4312 = vcmp.le.f32.partialorder %v4256, 3.0
        %v4313 = vsel %vm4305, 1, 0
        %v4314 = vsel %vm4306, 1, 0
        %v4315 = vsel %vm4307, 1, 0
        %v4316 = vsel %vm4308, 1, 0
        %v4317 = vsel %vm4309, 1, 0
        %v4318 = vsel %vm4310, 1, 0
        %v4319 = vsel %vm4311, 1, 0
        %v4320 = vsel %vm4312, 1, 0
        %4321 = vrot.lane.b32.xlu0 %v4313, 127
        %v4322 = vpop.permute.xlu0 %4321
        %4323 = vrot.lane.b32.xlu0 %v4314, 127
        %v4324 = vpop.permute.xlu0 %4323
        %4325 = vrot.lane.b32.xlu0 %v4315, 127
        %v4326 = vpop.permute.xlu0 %4325
        %4327 = vrot.lane.b32.xlu0 %v4316, 127
        %v4328 = vpop.permute.xlu0 %4327
        %4329 = vrot.lane.b32.xlu0 %v4317, 127
        %v4330 = vpop.permute.xlu0 %4329
        %4331 = vrot.lane.b32.xlu0 %v4318, 127
        %v4332 = vpop.permute.xlu0 %4331
        %4333 = vrot.lane.b32.xlu0 %v4319, 127
        %v4334 = vpop.permute.xlu0 %4333
        %4335 = vrot.lane.b32.xlu0 %v4320, 127
        %v4336 = vpop.permute.xlu0 %4335
        %vm4337 = vcmp.ne.s32.totalorder %v4322, 0
        %vm4338 = vcmp.ne.s32.totalorder %v4324, 0
        %vm4339 = vcmp.ne.s32.totalorder %v4326, 0
        %vm4340 = vcmp.ne.s32.totalorder %v4328, 0
        %vm4341 = vcmp.ne.s32.totalorder %v4330, 0
        %vm4342 = vcmp.ne.s32.totalorder %v4332, 0
        %vm4343 = vcmp.ne.s32.totalorder %v4334, 0
        %vm4344 = vcmp.ne.s32.totalorder %v4336, 0
        %vm4345 = vmand %vm4297, %vm4337
        %vm4346 = vmand %vm4298, %vm4338
        %vm4347 = vmand %vm4299, %vm4339
        %vm4348 = vmand %vm4300, %vm4340
        %vm4349 = vmand %vm4301, %vm4341
        %vm4350 = vmand %vm4302, %vm4342
        %vm4351 = vmand %vm4303, %vm4343
        %vm4352 = vmand %vm4304, %vm4344
        %v4353 = vsel %vm4345, 1, 0
        %v4354 = vsel %vm4346, 1, 0
        %v4355 = vsel %vm4347, 1, 0
        %v4356 = vsel %vm4348, 1, 0
        %v4357 = vsel %vm4349, 1, 0
        %v4358 = vsel %vm4350, 1, 0
        %v4359 = vsel %vm4351, 1, 0
        %v4360 = vsel %vm4352, 1, 0
        %v4361 = vcvt.s32.f32 %v4353
        %v4362 = vcvt.s32.f32 %v4354
        %v4363 = vcvt.s32.f32 %v4355
        %v4364 = vcvt.s32.f32 %v4356
        %v4365 = vcvt.s32.f32 %v4357
        %v4366 = vcvt.s32.f32 %v4358
        %v4367 = vcvt.s32.f32 %v4359
        %v4368 = vcvt.s32.f32 %v4360
        %v4369 = vmax.f32 %v4249, 0.0
        %v4370 = vmax.f32 %v4250, 0.0
        %v4371 = vmax.f32 %v4251, 0.0
        %v4372 = vmax.f32 %v4252, 0.0
        %v4373 = vmax.f32 %v4253, 0.0
        %v4374 = vmax.f32 %v4254, 0.0
        %v4375 = vmax.f32 %v4255, 0.0
        %v4376 = vmax.f32 %v4256, 0.0
        %v4377 = vmin.f32 %v4369, 3.0
        %v4378 = vmin.f32 %v4370, 3.0
        %v4379 = vmin.f32 %v4371, 3.0
        %v4380 = vmin.f32 %v4372, 3.0
        %v4381 = vmin.f32 %v4373, 3.0
        %v4382 = vmin.f32 %v4374, 3.0
        %v4383 = vmin.f32 %v4375, 3.0
        %v4384 = vmin.f32 %v4376, 3.0
        %v4385 = vmul.f32 %v4377, 4.0
        %v4386 = vmul.f32 %v4378, 4.0
        %v4387 = vmul.f32 %v4379, 4.0
        %v4388 = vmul.f32 %v4380, 4.0
        %v4389 = vmul.f32 %v4381, 4.0
        %v4390 = vmul.f32 %v4382, 4.0
        %v4391 = vmul.f32 %v4383, 4.0
        %v4392 = vmul.f32 %v4384, 4.0
        %v4393 = vadd.f32 %v4385, %v3842
        %v4394 = vadd.f32 %v4386, %v3844
        %v4395 = vadd.f32 %v4387, %v3846
        %v4396 = vadd.f32 %v4388, %v3848
        %v4397 = vadd.f32 %v4389, %v3850
        %v4398 = vadd.f32 %v4390, %v3852
        %v4399 = vadd.f32 %v4391, %v3854
        %v4400 = vadd.f32 %v4392, %v3856
        %4402 = vset.pattern.permute.xlu0 3
        %4403 = vperm.xlu0 %4402, %v4393
        %v4404 = vpop.permute.xlu0 %4403
        %4407 = vset.pattern.permute.xlu0 3
        %4408 = vperm.xlu0 %4407, %v4394
        %v4409 = vpop.permute.xlu0 %4408
        %4412 = vset.pattern.permute.xlu0 3
        %4413 = vperm.xlu0 %4412, %v4395
        %v4414 = vpop.permute.xlu0 %4413
        %4417 = vset.pattern.permute.xlu0 3
        %4418 = vperm.xlu0 %4417, %v4396
        %v4419 = vpop.permute.xlu0 %4418
        %4422 = vset.pattern.permute.xlu0 3
        %4423 = vperm.xlu0 %4422, %v4397
        %v4424 = vpop.permute.xlu0 %4423
        %4427 = vset.pattern.permute.xlu0 3
        %4428 = vperm.xlu0 %4427, %v4398
        %v4429 = vpop.permute.xlu0 %4428
        %4432 = vset.pattern.permute.xlu0 3
        %4433 = vperm.xlu0 %4432, %v4399
        %v4434 = vpop.permute.xlu0 %4433
        %4437 = vset.pattern.permute.xlu0 3
        %4438 = vperm.xlu0 %4437, %v4400
        %v4439 = vpop.permute.xlu0 %4438
        %vm4441 = vcmp.eq.f32.partialorder %v2136, %v4404
        %vm4442 = vcmp.eq.f32.partialorder %v2136, %v4409
        %vm4443 = vcmp.eq.f32.partialorder %v2136, %v4414
        %vm4444 = vcmp.eq.f32.partialorder %v2136, %v4419
        %vm4445 = vcmp.eq.f32.partialorder %v2136, %v4424
        %vm4446 = vcmp.eq.f32.partialorder %v2136, %v4429
        %vm4447 = vcmp.eq.f32.partialorder %v2136, %v4434
        %vm4448 = vcmp.eq.f32.partialorder %v2136, %v4439
        %v4449 = vsel %vm4441, 1, 0
        %v4450 = vsel %vm4442, 1, 0
        %v4451 = vsel %vm4443, 1, 0
        %v4452 = vsel %vm4444, 1, 0
        %v4453 = vsel %vm4445, 1, 0
        %v4454 = vsel %vm4446, 1, 0
        %v4455 = vsel %vm4447, 1, 0
        %v4456 = vsel %vm4448, 1, 0
        %v4457 = vcvt.s32.f32 %v4449
        %v4458 = vcvt.s32.f32 %v4450
        %v4459 = vcvt.s32.f32 %v4451
        %v4460 = vcvt.s32.f32 %v4452
        %v4461 = vcvt.s32.f32 %v4453
        %v4462 = vcvt.s32.f32 %v4454
        %v4463 = vcvt.s32.f32 %v4455
        %v4464 = vcvt.s32.f32 %v4456
        %v4465 = vmul.f32 %v3625, %v4361
        %v4466 = vmul.f32 %v3626, %v4362
        %v4467 = vmul.f32 %v3627, %v4363
        %v4468 = vmul.f32 %v3628, %v4364
        %v4469 = vmul.f32 %v3629, %v4365
        %v4470 = vmul.f32 %v3630, %v4366
        %v4471 = vmul.f32 %v3631, %v4367
        %v4472 = vmul.f32 %v3632, %v4368
        %4474 = vset.pattern.permute.xlu0 2
        %4475 = vperm.xlu0 %4474, %v4465
        %v4476 = vpop.permute.xlu0 %4475
        %4479 = vset.pattern.permute.xlu0 2
        %4480 = vperm.xlu0 %4479, %v4466
        %v4481 = vpop.permute.xlu0 %4480
        %4484 = vset.pattern.permute.xlu0 2
        %4485 = vperm.xlu0 %4484, %v4467
        %v4486 = vpop.permute.xlu0 %4485
        %4489 = vset.pattern.permute.xlu0 2
        %4490 = vperm.xlu0 %4489, %v4468
        %v4491 = vpop.permute.xlu0 %4490
        %4494 = vset.pattern.permute.xlu0 2
        %4495 = vperm.xlu0 %4494, %v4469
        %v4496 = vpop.permute.xlu0 %4495
        %4499 = vset.pattern.permute.xlu0 2
        %4500 = vperm.xlu0 %4499, %v4470
        %v4501 = vpop.permute.xlu0 %4500
        %4504 = vset.pattern.permute.xlu0 2
        %4505 = vperm.xlu0 %4504, %v4471
        %v4506 = vpop.permute.xlu0 %4505
        %4509 = vset.pattern.permute.xlu0 2
        %4510 = vperm.xlu0 %4509, %v4472
        %v4511 = vpop.permute.xlu0 %4510
        %v4513 = vmul.f32 %v4457, %v4476
        %v4514 = vmul.f32 %v4458, %v4481
        %v4515 = vmul.f32 %v4459, %v4486
        %v4516 = vmul.f32 %v4460, %v4491
        %v4517 = vmul.f32 %v4461, %v4496
        %v4518 = vmul.f32 %v4462, %v4501
        %v4519 = vmul.f32 %v4463, %v4506
        %v4520 = vmul.f32 %v4464, %v4511
        %v4521 = vadd.f32 %v4241, %v4513
        %v4522 = vadd.f32 %v4242, %v4514
        %v4523 = vadd.f32 %v4243, %v4515
        %v4524 = vadd.f32 %v4244, %v4516
        %v4525 = vadd.f32 %v4245, %v4517
        %v4526 = vadd.f32 %v4246, %v4518
        %v4527 = vadd.f32 %v4247, %v4519
        %v4528 = vadd.f32 %v4248, %v4520
        %vm4529 = vmand %vm4025, %vm4289
        %vm4530 = vmand %vm4026, %vm4290
        %vm4531 = vmand %vm4027, %vm4291
        %vm4532 = vmand %vm4028, %vm4292
        %vm4533 = vmand %vm4029, %vm4293
        %vm4534 = vmand %vm4030, %vm4294
        %vm4535 = vmand %vm4031, %vm4295
        %vm4536 = vmand %vm4032, %vm4296
        %vm4537 = vmand %vm4529, %vm4337
        %vm4538 = vmand %vm4530, %vm4338
        %vm4539 = vmand %vm4531, %vm4339
        %vm4540 = vmand %vm4532, %vm4340
        %vm4541 = vmand %vm4533, %vm4341
        %vm4542 = vmand %vm4534, %vm4342
        %vm4543 = vmand %vm4535, %vm4343
        %vm4544 = vmand %vm4536, %vm4344
        %v4545 = vsel %vm4537, 1, 0
        %v4546 = vsel %vm4538, 1, 0
        %v4547 = vsel %vm4539, 1, 0
        %v4548 = vsel %vm4540, 1, 0
        %v4549 = vsel %vm4541, 1, 0
        %v4550 = vsel %vm4542, 1, 0
        %v4551 = vsel %vm4543, 1, 0
        %v4552 = vsel %vm4544, 1, 0
        %v4553 = vcvt.s32.f32 %v4545
        %v4554 = vcvt.s32.f32 %v4546
        %v4555 = vcvt.s32.f32 %v4547
        %v4556 = vcvt.s32.f32 %v4548
        %v4557 = vcvt.s32.f32 %v4549
        %v4558 = vcvt.s32.f32 %v4550
        %v4559 = vcvt.s32.f32 %v4551
        %v4560 = vcvt.s32.f32 %v4552
        %v4561 = vadd.f32 %v4385, %v4090
        %v4562 = vadd.f32 %v4386, %v4092
        %v4563 = vadd.f32 %v4387, %v4094
        %v4564 = vadd.f32 %v4388, %v4096
        %v4565 = vadd.f32 %v4389, %v4098
        %v4566 = vadd.f32 %v4390, %v4100
        %v4567 = vadd.f32 %v4391, %v4102
        %v4568 = vadd.f32 %v4392, %v4104
        %4570 = vset.pattern.permute.xlu0 3
        %4571 = vperm.xlu0 %4570, %v4561
        %v4572 = vpop.permute.xlu0 %4571
        %4575 = vset.pattern.permute.xlu0 3
        %4576 = vperm.xlu0 %4575, %v4562
        %v4577 = vpop.permute.xlu0 %4576
        %4580 = vset.pattern.permute.xlu0 3
        %4581 = vperm.xlu0 %4580, %v4563
        %v4582 = vpop.permute.xlu0 %4581
        %4585 = vset.pattern.permute.xlu0 3
        %4586 = vperm.xlu0 %4585, %v4564
        %v4587 = vpop.permute.xlu0 %4586
        %4590 = vset.pattern.permute.xlu0 3
        %4591 = vperm.xlu0 %4590, %v4565
        %v4592 = vpop.permute.xlu0 %4591
        %4595 = vset.pattern.permute.xlu0 3
        %4596 = vperm.xlu0 %4595, %v4566
        %v4597 = vpop.permute.xlu0 %4596
        %4600 = vset.pattern.permute.xlu0 3
        %4601 = vperm.xlu0 %4600, %v4567
        %v4602 = vpop.permute.xlu0 %4601
        %4605 = vset.pattern.permute.xlu0 3
        %4606 = vperm.xlu0 %4605, %v4568
        %v4607 = vpop.permute.xlu0 %4606
        %vm4609 = vcmp.eq.f32.partialorder %v2136, %v4572
        %vm4610 = vcmp.eq.f32.partialorder %v2136, %v4577
        %vm4611 = vcmp.eq.f32.partialorder %v2136, %v4582
        %vm4612 = vcmp.eq.f32.partialorder %v2136, %v4587
        %vm4613 = vcmp.eq.f32.partialorder %v2136, %v4592
        %vm4614 = vcmp.eq.f32.partialorder %v2136, %v4597
        %vm4615 = vcmp.eq.f32.partialorder %v2136, %v4602
        %vm4616 = vcmp.eq.f32.partialorder %v2136, %v4607
        %v4617 = vsel %vm4609, 1, 0
        %v4618 = vsel %vm4610, 1, 0
        %v4619 = vsel %vm4611, 1, 0
        %v4620 = vsel %vm4612, 1, 0
        %v4621 = vsel %vm4613, 1, 0
        %v4622 = vsel %vm4614, 1, 0
        %v4623 = vsel %vm4615, 1, 0
        %v4624 = vsel %vm4616, 1, 0
        %v4625 = vcvt.s32.f32 %v4617
        %v4626 = vcvt.s32.f32 %v4618
        %v4627 = vcvt.s32.f32 %v4619
        %v4628 = vcvt.s32.f32 %v4620
        %v4629 = vcvt.s32.f32 %v4621
        %v4630 = vcvt.s32.f32 %v4622
        %v4631 = vcvt.s32.f32 %v4623
        %v4632 = vcvt.s32.f32 %v4624
        %v4633 = vmul.f32 %v3633, %v4553
        %v4634 = vmul.f32 %v3634, %v4554
        %v4635 = vmul.f32 %v3635, %v4555
        %v4636 = vmul.f32 %v3636, %v4556
        %v4637 = vmul.f32 %v3637, %v4557
        %v4638 = vmul.f32 %v3638, %v4558
        %v4639 = vmul.f32 %v3639, %v4559
        %v4640 = vmul.f32 %v3640, %v4560
        %4642 = vset.pattern.permute.xlu0 2
        %4643 = vperm.xlu0 %4642, %v4633
        %v4644 = vpop.permute.xlu0 %4643
        %4647 = vset.pattern.permute.xlu0 2
        %4648 = vperm.xlu0 %4647, %v4634
        %v4649 = vpop.permute.xlu0 %4648
        %4652 = vset.pattern.permute.xlu0 2
        %4653 = vperm.xlu0 %4652, %v4635
        %v4654 = vpop.permute.xlu0 %4653
        %4657 = vset.pattern.permute.xlu0 2
        %4658 = vperm.xlu0 %4657, %v4636
        %v4659 = vpop.permute.xlu0 %4658
        %4662 = vset.pattern.permute.xlu0 2
        %4663 = vperm.xlu0 %4662, %v4637
        %v4664 = vpop.permute.xlu0 %4663
        %4667 = vset.pattern.permute.xlu0 2
        %4668 = vperm.xlu0 %4667, %v4638
        %v4669 = vpop.permute.xlu0 %4668
        %4672 = vset.pattern.permute.xlu0 2
        %4673 = vperm.xlu0 %4672, %v4639
        %v4674 = vpop.permute.xlu0 %4673
        %4677 = vset.pattern.permute.xlu0 2
        %4678 = vperm.xlu0 %4677, %v4640
        %v4679 = vpop.permute.xlu0 %4678
        %v4681 = vmul.f32 %v4625, %v4644
        %v4682 = vmul.f32 %v4626, %v4649
        %v4683 = vmul.f32 %v4627, %v4654
        %v4684 = vmul.f32 %v4628, %v4659
        %v4685 = vmul.f32 %v4629, %v4664
        %v4686 = vmul.f32 %v4630, %v4669
        %v4687 = vmul.f32 %v4631, %v4674
        %v4688 = vmul.f32 %v4632, %v4679
        %v4689 = vadd.f32 %v4521, %v4681
        %v4690 = vadd.f32 %v4522, %v4682
        %v4691 = vadd.f32 %v4523, %v4683
        %v4692 = vadd.f32 %v4524, %v4684
        %v4693 = vadd.f32 %v4525, %v4685
        %v4694 = vadd.f32 %v4526, %v4686
        %v4695 = vadd.f32 %v4527, %v4687
        %v4696 = vadd.f32 %v4528, %v4688
        %v4697 = vmul.f32 %v4689, %v3411
        %v4698 = vmul.f32 %v4690, %v3414
        %v4699 = vmul.f32 %v4691, %v3417
        %v4700 = vmul.f32 %v4692, %v3420
        %v4701 = vmul.f32 %v4693, %v3423
        %v4702 = vmul.f32 %v4694, %v3426
        %v4703 = vmul.f32 %v4695, %v3429
        %v4704 = vmul.f32 %v4696, %v3432
        %v4706 = vsel %vm1728, %v4697, 0
        %v4709 = vsel %vm1728, %v4698, 0
        %v4712 = vsel %vm1728, %v4699, 0
        %v4715 = vsel %vm1728, %v4700, 0
        %v4718 = vsel %vm1728, %v4701, 0
        %v4721 = vsel %vm1728, %v4702, 0
        %v4724 = vsel %vm1728, %v4703, 0
        %v4727 = vsel %vm1728, %v4704, 0
        %4729 = vmatpush.msra.mxu0 0.0
        %4730 = vmatpush.msra.mxu0 0.0
        %4731 = vmatpush.msra.mxu0 0.0
        %4732 = vmatpush.msra.mxu0 0.0
        %4733 = vmatpush.msra.mxu0 0.0
        %4734 = vmatpush.msra.mxu0 0.0
        %4735 = vmatpush.msra.mxu0 0.0
        %4736 = vmatpush.msra.mxu0 0.0
        %4737 = vmatpush.msra.mxu0 0.0
        %4738 = vmatpush.msra.mxu0 0.0
        %4739 = vmatpush.msra.mxu0 0.0
        %4740 = vmatpush.msra.mxu0 0.0
        %4741 = vmatpush.msra.mxu0 0.0
        %4742 = vmatpush.msra.mxu0 0.0
        %4743 = vmatpush.msra.mxu0 %v1684
        %4744 = vmatpush.msra.mxu0 %v1683
        %4745 = vmatmul.f32.gmra.mxu0 %v4706
        %v4746 = vpop.f32.mrf.mxu0
        %v4747 = vadd.f32 0.0, %v4746
        %4748 = vmatmul.f32.gmra.mxu0 %v4709
        %v4749 = vpop.f32.mrf.mxu0
        %v4750 = vadd.f32 0.0, %v4749
        %4751 = vmatmul.f32.gmra.mxu0 %v4712
        %v4752 = vpop.f32.mrf.mxu0
        %v4753 = vadd.f32 0.0, %v4752
        %4754 = vmatmul.f32.gmra.mxu0 %v4715
        %v4755 = vpop.f32.mrf.mxu0
        %v4756 = vadd.f32 0.0, %v4755
        %4757 = vmatmul.f32.gmra.mxu0 %v4718
        %v4758 = vpop.f32.mrf.mxu0
        %v4759 = vadd.f32 0.0, %v4758
        %4760 = vmatmul.f32.gmra.mxu0 %v4721
        %v4761 = vpop.f32.mrf.mxu0
        %v4762 = vadd.f32 0.0, %v4761
        %4763 = vmatmul.f32.gmra.mxu0 %v4724
        %v4764 = vpop.f32.mrf.mxu0
        %v4765 = vadd.f32 0.0, %v4764
        %4766 = vmatmul.f32.gmra.mxu0 %v4727
        %v4767 = vpop.f32.mrf.mxu0
        %v4768 = vadd.f32 0.0, %v4767
        %4769 = vdwg.mxu0
        %vm4770 = vcmask 523264
        %v4772 = vsel %vm4770, %v3305, 0
        %v4775 = vsel %vm4770, %v3306, 0
        %v4778 = vsel %vm4770, %v3307, 0
        %v4781 = vsel %vm4770, %v3308, 0
        %v4784 = vsel %vm4770, %v3309, 0
        %v4787 = vsel %vm4770, %v3310, 0
        %v4790 = vsel %vm4770, %v3311, 0
        %v4793 = vsel %vm4770, %v3312, 0
        %4795 = vmatpush.msra.mxu0 0.0
        %4796 = vmatpush.msra.mxu0 0.0
        %4797 = vmatpush.msra.mxu0 0.0
        %4798 = vmatpush.msra.mxu0 0.0
        %4799 = vmatpush.msra.mxu0 0.0
        %4800 = vmatpush.msra.mxu0 0.0
        %4801 = vmatpush.msra.mxu0 0.0
        %4802 = vmatpush.msra.mxu0 0.0
        %4803 = vmatpush.msra.mxu0 %v1682
        %4804 = vmatpush.msra.mxu0 %v1681
        %4805 = vmatpush.msra.mxu0 %v1680
        %4806 = vmatpush.msra.mxu0 %v1679
        %4807 = vmatpush.msra.mxu0 %v1678
        %4808 = vmatpush.msra.mxu0 %v1677
        %4809 = vmatpush.msra.mxu0 %v1676
        %4810 = vmatpush.msra.mxu0 %v1675
        %4811 = vmatmul.f32.gmra.mxu0 %v4772
        %v4812 = vpop.f32.mrf.mxu0
        %v4813 = vadd.f32 %v4747, %v4812
        %4814 = vmatmul.f32.gmra.mxu0 %v4775
        %v4815 = vpop.f32.mrf.mxu0
        %v4816 = vadd.f32 %v4750, %v4815
        %4817 = vmatmul.f32.gmra.mxu0 %v4778
        %v4818 = vpop.f32.mrf.mxu0
        %v4819 = vadd.f32 %v4753, %v4818
        %4820 = vmatmul.f32.gmra.mxu0 %v4781
        %v4821 = vpop.f32.mrf.mxu0
        %v4822 = vadd.f32 %v4756, %v4821
        %4823 = vmatmul.f32.gmra.mxu0 %v4784
        %v4824 = vpop.f32.mrf.mxu0
        %v4825 = vadd.f32 %v4759, %v4824
        %4826 = vmatmul.f32.gmra.mxu0 %v4787
        %v4827 = vpop.f32.mrf.mxu0
        %v4828 = vadd.f32 %v4762, %v4827
        %4829 = vmatmul.f32.gmra.mxu0 %v4790
        %v4830 = vpop.f32.mrf.mxu0
        %v4831 = vadd.f32 %v4765, %v4830
        %4832 = vmatmul.f32.gmra.mxu0 %v4793
        %v4833 = vpop.f32.mrf.mxu0
        %v4834 = vadd.f32 %v4768, %v4833
        %4835 = vdwg.mxu0
        %v4836 = vld [vmem:[%s65] sm:$0xff]
        %v4837 = vld [vmem:[%s65 + $0x8] sm:$0xff]
        %v4838 = vld [vmem:[%s65 + $0x10] sm:$0xff]
        %v4839 = vld [vmem:[%s65 + $0x18] sm:$0xff]
        %v4840 = vld [vmem:[%s65 + $0x20] sm:$0xff]
        %v4841 = vld [vmem:[%s65 + $0x28] sm:$0xff]
        %v4842 = vld [vmem:[%s65 + $0x30] sm:$0xff]
        %v4843 = vld [vmem:[%s65 + $0x38] sm:$0xff]
        %v4844 = vmul.f32 %v4813, %v4836
        %v4845 = vmul.f32 %v4816, %v4837
        %v4846 = vmul.f32 %v4819, %v4838
        %v4847 = vmul.f32 %v4822, %v4839
        %v4848 = vmul.f32 %v4825, %v4840
        %v4849 = vmul.f32 %v4828, %v4841
        %v4850 = vmul.f32 %v4831, %v4842
        %v4851 = vmul.f32 %v4834, %v4843
        %v4852 = vld [vmem:[%s63] sm:$0xff]
        %v4854 = vsel %vm4770, %v4852, 0
        %4856 = vmatpush.msra.mxu0 0.0
        %4857 = vmatpush.msra.mxu0 0.0
        %4858 = vmatpush.msra.mxu0 0.0
        %4859 = vmatpush.msra.mxu0 0.0
        %4860 = vmatpush.msra.mxu0 0.0
        %4861 = vmatpush.msra.mxu0 0.0
        %4862 = vmatpush.msra.mxu0 0.0
        %4863 = vmatpush.msra.mxu0 0.0
        %4864 = vmatpush.msra.mxu0 %v4851
        %4865 = vmatpush.msra.mxu0 %v4850
        %4866 = vmatpush.msra.mxu0 %v4849
        %4867 = vmatpush.msra.mxu0 %v4848
        %4868 = vmatpush.msra.mxu0 %v4847
        %4869 = vmatpush.msra.mxu0 %v4846
        %4870 = vmatpush.msra.mxu0 %v4845
        %4871 = vmatpush.msra.mxu0 %v4844
        %4872 = vmatmul.f32.gmra.mxu0 %v4854
        %v4873 = vpop.f32.mrf.mxu0
        %v4874 = vadd.f32 0.0, %v4873
        %4875 = vdwg.mxu0
        %v4876 = vld [vmem:[%s35] sm:$0xff]
        %v4877 = vld [vmem:[%s35 + $0x8] sm:$0xff]
        %v4878 = vld [vmem:[%s35 + $0x10] sm:$0xff]
        %v4879 = vld [vmem:[%s35 + $0x18] sm:$0xff]
        %v4880 = vld [vmem:[%s37] sm:$0x1]
        %v4882 = vperm.slane %v4880, 0
        %v4885 = vsel %vm1263, %v4874, 0
        %4887 = vmatpush.msra.mxu0 0.0
        %4888 = vmatpush.msra.mxu0 0.0
        %4889 = vmatpush.msra.mxu0 0.0
        %4890 = vmatpush.msra.mxu0 0.0
        %4891 = vmatpush.msra.mxu0 0.0
        %4892 = vmatpush.msra.mxu0 0.0
        %4893 = vmatpush.msra.mxu0 0.0
        %4894 = vmatpush.msra.mxu0 0.0
        %4895 = vmatpush.msra.mxu0 0.0
        %4896 = vmatpush.msra.mxu0 0.0
        %4897 = vmatpush.msra.mxu0 0.0
        %4898 = vmatpush.msra.mxu0 0.0
        %4899 = vmatpush.msra.mxu0 %v4879
        %4900 = vmatpush.msra.mxu0 %v4878
        %4901 = vmatpush.msra.mxu0 %v4877
        %4902 = vmatpush.msra.mxu0 %v4876
        %4903 = vmatmul.f32.gmra.mxu0 %v4885
        %v4904 = vpop.f32.mrf.mxu0
        %v4905 = vadd.f32 %v4882, %v4904
        %4906 = vdwg.mxu0
        %v4907 = vadd.f32 %v1518, %v4905
        %v4908 = vsel %vm1263, %v4907, 0.0
        %4909 = vadd.xlane.f32.xlu0 %v4908
        %v4910 = vpop.xlane.xlu0 %4909
        %v4911 = vmul.f32 %v4910, %v1489
        %v4912 = vsub.f32 %v4907, %v4911
        %v4913 = vmul.f32 %v4912, %v4912
        %v4914 = vsel %vm1263, %v4913, 0.0
        %4915 = vadd.xlane.f32.xlu0 %v4914
        %v4916 = vpop.xlane.xlu0 %4915
        %v4917 = vmul.f32 %v4916, %v1489
        %v4918 = vadd.f32 %v4917, 1e-05
        %v4919 = vrsqrt.pop %v4918
        %v4920 = vmul.f32 %v4919, %v4918
        %v4921 = vmul.f32 %v4920, %v4919
        %v4922 = vmul.f32 0.5, %v4921
        %v4923 = vsub.f32 1.5, %v4922
        %v4924 = vmul.f32 %v4919, %v4923
        %vm4925 = vweird.f32 %v4918
        %vm4926 = vweird.f32 %v4919
        %vm4927 = vmor %vm4925, %vm4926
        %v4928 = vsel %vm4927, %v4919, %v4924
        %v4929 = vmul.f32 %v4912, %v4928
        %v4930 = vld [vmem:[%s39] sm:$0x1]
        %v4932 = vperm.slane %v4930, 0
        %v4934 = vmul.f32 %v4929, %v4932
        %v4935 = vld [vmem:[%s41] sm:$0x1]
        %v4937 = vperm.slane %v4935, 0
        %v4939 = vadd.f32 %v4934, %v4937
        %v4940 = vld [vmem:[%s43] sm:$0xff]
        %v4941 = vld [vmem:[%s43 + $0x8] sm:$0xff]
        %v4942 = vld [vmem:[%s43 + $0x10] sm:$0xff]
        %v4943 = vld [vmem:[%s43 + $0x18] sm:$0xff]
        %v4944 = vld [vmem:[%s45] sm:$0x1]
        %v4946 = vperm.slane %v4944, 0
        %v4949 = vsel %vm1263, %v4939, 0
        %4951 = vmatpush.msra.mxu0 0.0
        %4952 = vmatpush.msra.mxu0 0.0
        %4953 = vmatpush.msra.mxu0 0.0
        %4954 = vmatpush.msra.mxu0 0.0
        %4955 = vmatpush.msra.mxu0 0.0
        %4956 = vmatpush.msra.mxu0 0.0
        %4957 = vmatpush.msra.mxu0 0.0
        %4958 = vmatpush.msra.mxu0 0.0
        %4959 = vmatpush.msra.mxu0 0.0
        %4960 = vmatpush.msra.mxu0 0.0
        %4961 = vmatpush.msra.mxu0 0.0
        %4962 = vmatpush.msra.mxu0 0.0
        %4963 = vmatpush.msra.mxu0 %v4943
        %4964 = vmatpush.msra.mxu0 %v4942
        %4965 = vmatpush.msra.mxu0 %v4941
        %4966 = vmatpush.msra.mxu0 %v4940
        %4967 = vmatmul.f32.gmra.mxu0 %v4949
        %v4968 = vpop.f32.mrf.mxu0
        %v4969 = vadd.f32 %v4946, %v4968
        %4970 = vdwg.mxu0
        %v4971 = vmax.f32 %v4969, 0.0
        %v4972 = vld [vmem:[%s47] sm:$0xff]
        %v4973 = vld [vmem:[%s47 + $0x8] sm:$0xff]
        %v4974 = vld [vmem:[%s47 + $0x10] sm:$0xff]
        %v4975 = vld [vmem:[%s47 + $0x18] sm:$0xff]
        %v4976 = vld [vmem:[%s47 + $0x20] sm:$0xff]
        %v4977 = vld [vmem:[%s47 + $0x28] sm:$0xff]
        %v4978 = vld [vmem:[%s47 + $0x30] sm:$0xff]
        %v4979 = vld [vmem:[%s47 + $0x38] sm:$0xff]
        %v4980 = vld [vmem:[%s49] sm:$0x1]
        %v4982 = vperm.slane %v4980, 0
        %v4985 = vsel %vm4770, %v4971, 0
        %4987 = vmatpush.msra.mxu0 0.0
        %4988 = vmatpush.msra.mxu0 0.0
        %4989 = vmatpush.msra.mxu0 0.0
        %4990 = vmatpush.msra.mxu0 0.0
        %4991 = vmatpush.msra.mxu0 0.0
        %4992 = vmatpush.msra.mxu0 0.0
        %4993 = vmatpush.msra.mxu0 0.0
        %4994 = vmatpush.msra.mxu0 0.0
        %4995 = vmatpush.msra.mxu0 %v4979
        %4996 = vmatpush.msra.mxu0 %v4978
        %4997 = vmatpush.msra.mxu0 %v4977
        %4998 = vmatpush.msra.mxu0 %v4976
        %4999 = vmatpush.msra.mxu0 %v4975
        %5000 = vmatpush.msra.mxu0 %v4974
        %5001 = vmatpush.msra.mxu0 %v4973
        %5002 = vmatpush.msra.mxu0 %v4972
        %5003 = vmatmul.f32.gmra.mxu0 %v4985
        %v5004 = vpop.f32.mrf.mxu0
        %v5005 = vadd.f32 %v4982, %v5004
        %5006 = vdwg.mxu0
        %v5007 = vadd.f32 %v4939, %v5005
        %v5008 = vsel %vm1263, %v5007, 0.0
        %5009 = vadd.xlane.f32.xlu0 %v5008
        %v5010 = vpop.xlane.xlu0 %5009
        %v5011 = vmul.f32 %v5010, %v1489
        %v5012 = vsub.f32 %v5007, %v5011
        %v5013 = vmul.f32 %v5012, %v5012
        %v5014 = vsel %vm1263, %v5013, 0.0
        %5015 = vadd.xlane.f32.xlu0 %v5014
        %v5016 = vpop.xlane.xlu0 %5015
        %v5017 = vmul.f32 %v5016, %v1489
        %v5018 = vadd.f32 %v5017, 1e-05
        %v5019 = vrsqrt.pop %v5018
        %v5020 = vmul.f32 %v5019, %v5018
        %v5021 = vmul.f32 %v5020, %v5019
        %v5022 = vmul.f32 0.5, %v5021
        %v5023 = vsub.f32 1.5, %v5022
        %v5024 = vmul.f32 %v5019, %v5023
        %vm5025 = vweird.f32 %v5018
        %vm5026 = vweird.f32 %v5019
        %vm5027 = vmor %vm5025, %vm5026
        %v5028 = vsel %vm5027, %v5019, %v5024
        %v5029 = vmul.f32 %v5012, %v5028
        %v5030 = vld [vmem:[%s51] sm:$0x1]
        %v5032 = vperm.slane %v5030, 0
        %v5034 = vmul.f32 %v5029, %v5032
        %v5035 = vld [vmem:[%s53] sm:$0x1]
        %v5037 = vperm.slane %v5035, 0
        %v5039 = vadd.f32 %v5034, %v5037
        %5040 = vst.msk [vmem:[%s1229] sm:$0xff] %vm1263, %v5039
        %s5041 = sand.u32 %s945, 1
        %s5042 = scalar_lea.sflag [#allocation3], %s5041
        %s5043 = sand.u32 %s945, 1
        %s5044 = smul.addr %s5043, 8
        %s5045 = scalar_lea.vmem [#allocation2], %s5044
        // Predicated region
        $region177: #{tpu_custom_call.1} parent=175 // pred_check
          %p5046 = pneg %p955
        $region178: #{tpu_custom_call.1} parent=175 // pred_check_branch
          %5048 = sbr.rel (%p5046) target = $region180
        $region179: #{tpu_custom_call.1} parent=175 // pred_region
          %5050 = vsyncadd %s5042, 0
          %s5051 = smul.addr %s93, 8
          %s5052 = scalar_lea.hbm %s79, %s5051
          %s5054 = sshll.u32 %s5045, 4
          %s5055 = int_to_ptr.vmem [resolvable:$true] %s5054
          %s5056 = sshll.u32 %s5052, 4
          %s5057 = int_to_ptr.hbm [resolvable:$true] %s5056
          %5059 = dma.vmem_to_hbm [thread:$0]  %s5055, 128, %s5057, %s5042
        $region180: #{tpu_custom_call.1} parent=175 // pred_fallthru
          _
      $region176: #{tpu_custom_call.1} parent=5 // pred_fallthru
        _
      %p5060 = scmp.le.s32.totalorder 2, %s88
      // Predicated region
      $region181: #{tpu_custom_call.1} parent=5 // pred_check
        %p5061 = pneg %p5060
      $region182: #{tpu_custom_call.1} parent=5 // pred_check_branch
        %5063 = sbr.rel (%p5061) target = $region184
      $region183: #{tpu_custom_call.1} parent=5 // pred_region
        %s5064 = ssub.s32 %s88, 2
        // Predicated region
        $region185: #{tpu_custom_call.1} parent=183 // pred_check
          %p5065 = pneg %p961
        $region186: #{tpu_custom_call.1} parent=183 // pred_check_branch
          %5067 = sbr.rel (%p5065) target = $region188
        $region187: #{tpu_custom_call.1} parent=183 // pred_region
          %s5068 = sand.u32 %s946, 1
          %s5069 = scalar_lea.sflag [#allocation3], %s5068
          %s5070 = sand.u32 %s946, 1
          %s5071 = smul.addr %s5070, 8
          %s5072 = scalar_lea.vmem [#allocation2], %s5071
          %5074 = dma.done %s5069, 128
        $region188: #{tpu_custom_call.1} parent=183 // pred_fallthru
          _
      $region184: #{tpu_custom_call.1} parent=5 // pred_fallthru
        _
    $region6: #{tpu_custom_call.1} parent=1 // loop_footer
      %s92 = sadd.s32 1, %s88
    $region7: #{tpu_custom_call.1} parent=1 // loop_footer_branch
      %87 = sbr.rel target = $region3
    $region8: #{tpu_custom_call.1} parent=1 // loop_exit
      _
    %5075 = vsyncpa [#allocation3], 1
    %s5076 = scalar_lea.sflag [#allocation3], 1
    %5077 = vsyncpa %s5076, 1

</llo_original>
